<compile_context>
chip_gen: v7x
topology: tpu7x:2x2x1
jax: 0.10.0
libtpu: 0.0.40
codegen_flags: <defaults>
</compile_context>

<pallas_src>
import functools

import jax
import jax.numpy as jnp
from jax import lax
from jax.experimental import pallas as pl
from jax.experimental.pallas import tpu as pltpu


def _bottleneck_ssa_kernel(x_ref, masks_ref, sel_ref, w1_ref, w2_ref,
                           wa123_ref, wa4_ref, bnin_ref, bnout_ref,
                           o_ref, *, H, W, Cin, Cout):
    """One grid step == one batch element.  Activation slabs are (C, H*W)."""
    HW = H * W
    C2 = Cout // 2

    xin = x_ref[...]                                   # (Cin, HW) raw input
    masks = masks_ref[...]                             # (9, HW) 0/1 tap masks

    def conv3x3(slab, w_ref):
        """3x3 conv, stride 1, zero pad 1.  w_ref: (9, out_ch, in_ch),
        k = (dy+1)*3 + (dx+1) matching PyTorch OIHW order.  Boundary masks are
        precomputed in the wrapper (hoisted out of the tap loop)."""
        acc = None
        k = 0
        for dy in (-1, 0, 1):
            for dx in (-1, 0, 1):
                if dy == 0 and dx == 0:
                    tap = slab                          # center tap: no roll/mask
                else:
                    s = dy * W + dx
                    tap = masks[k:k + 1, :] * pltpu.roll(slab, shift=(-s) % HW,
                                                         axis=1)
                term = jnp.dot(w_ref[k], tap, preferred_element_type=jnp.float32)
                acc = term if acc is None else acc + term
                k += 1
        return acc

    # --- residual trunk: BN1 -> conv3x3 -> BN2 -> PReLU -> conv3x3 -> BN3 ---
    h0 = bnin_ref[0] * xin + bnin_ref[1]                # BN1        (Cin, HW)
    h1 = conv3x3(h0, w1_ref)                            # conv 3x3   (Cout,HW)
    h1 = bnout_ref[0] * h1 + bnout_ref[1]               # BN2
    h1 = jnp.where(h1 >= 0, h1, bnout_ref[2] * h1)      # PReLU (per-channel)
    h2 = conv3x3(h1, w2_ref)                            # conv 3x3 (stride 1)
    h2 = bnout_ref[3] * h2 + bnout_ref[4]               # BN3        (Cout,HW)

    # --- TinySelfSpatialAttentionModule on h2 --------------------------------
    # fused conv_1/conv_3/conv_2 projection: rows [c1; c3; c2]
    proj = jnp.dot(wa123_ref[...], h2, preferred_element_type=jnp.float32)
    c13 = proj[:2 * C2, :]                              # (2*C2, HW) c1 & c3
    c2v = proj[2 * C2:, :]                              # (C2,   HW) queries

    # 2x2 (max + avg) pool, stride 2, values land on the (even h, even w) lanes
    t01 = pltpu.roll(c13, shift=HW - 1, axis=1)         # (h,   w+1)
    t10 = pltpu.roll(c13, shift=HW - W, axis=1)         # (h+1, w  )
    t11 = pltpu.roll(c13, shift=HW - W - 1, axis=1)     # (h+1, w+1)
    pooled_s = (jnp.maximum(jnp.maximum(c13, t01), jnp.maximum(t10, t11))
                + (c13 + t01 + t10 + t11) * 0.25)       # (2*C2, HW)

    # compact the pooled values to HW/4 columns with a constant 0/1 selection
    # matmul (garbage lanes hit zero rows of sel, so they vanish exactly)
    pooled_c = jnp.dot(pooled_s, sel_ref[...],
                       preferred_element_type=jnp.float32)   # (2*C2, HW/4)
    p1c = pooled_c[:C2, :]                              # keys   (C2, HW/4)
    p3c = pooled_c[C2:, :]                              # values (C2, HW/4)

    # logits in the transposed domain: (HW/4 keys on sublanes, HW queries on
    # lanes) — fully lane-dense, no large transposes anywhere downstream.
    mt = lax.dot_general(p1c, c2v, (((0,), (0,)), ((), ())),
                         preferred_element_type=jnp.float32)  # (HW/4, HW) f32
    m = jnp.max(mt, axis=0, keepdims=True)              # (1, HW)  f32
    e = jnp.exp(mt - m)                                 # f32 exp (EUP)
    attn_t = e * pl.reciprocal(jnp.sum(e, axis=0, keepdims=True), approx=True)

    # value aggregation in bf16 (f32 accumulate); weights are in [0,1] so this
    # is numerically safe while halving the streamed attention bytes.
    half = jnp.dot(p3c.astype(jnp.bfloat16), attn_t.astype(jnp.bfloat16),
                   preferred_element_type=jnp.float32)        # (C2, HW)

    # conv_4 (1x1, C2 -> Cout); gamma already folded into the weight
    refined = jnp.dot(wa4_ref[...], half, preferred_element_type=jnp.float32)

    # attention residual (+h2) and identity shortcut (+x, dim_match=True)
    o_ref[...] = refined + h2 + xin


def bottleneck_ir_ssa_tiny(x, w_conv1, w_conv2, bn1, bn2, prelu_a, bn3,
                           wa1, wa2, wa3, wa4, gamma, *, stride=1,
                           dim_match=True, eps=1e-5):
    """Forward pass of BottleNeck_IR_SSA_Tiny (inference-mode BatchNorm).

    bn1/bn2/bn3 are (weight, bias, running_mean, running_var) tuples.
    """
    assert stride == 1 and dim_match, "fused kernel supports stride=1, dim_match=True"
    B, Cin, H, W = x.shape
    Cout = w_conv1.shape[0]
    C2 = Cout // 2
    HW = H * W
    assert Cin == Cout and H % 2 == 0 and W % 2 == 0 and HW % 128 == 0

    f32 = jnp.float32

    def bn_affine(p):
        w, b, m, v = p
        s = w / jnp.sqrt(v + eps)
        return s, b - m * s

    s1, t1 = bn_affine(bn1)
    s2, t2 = bn_affine(bn2)
    s3, t3 = bn_affine(bn3)

    # PyTorch OIHW -> (9, O, I) with k = kh*3 + kw
    w1_k = jnp.transpose(w_conv1.astype(f32), (2, 3, 0, 1)).reshape(9, Cout, Cin)
    w2_k = jnp.transpose(w_conv2.astype(f32), (2, 3, 0, 1)).reshape(9, Cout, Cout)
    # fused attention projection [c1; c3; c2] and gamma-folded conv_4
    wa123 = jnp.concatenate([wa1, wa3, wa2], axis=0).astype(f32)   # (3*C2, Cout)
    wa4g = jnp.asarray(gamma, f32) * wa4.astype(f32)               # (Cout, C2)

    bnin = jnp.stack([s1, t1]).astype(f32).reshape(2, Cin, 1)
    bnout = jnp.stack([s2, t2, prelu_a, s3, t3]).astype(f32).reshape(5, Cout, 1)

    # 3x3-conv boundary masks, one per tap, computed once (hoisted from kernel)
    hh = jnp.arange(H)[:, None]
    ww = jnp.arange(W)[None, :]
    mask_list = []
    for dy in (-1, 0, 1):
        for dx in (-1, 0, 1):
            valid = ((hh + dy >= 0) & (hh + dy < H) &
                     (ww + dx >= 0) & (ww + dx < W))
            mask_list.append(valid.reshape(-1))
    masks = jnp.stack(mask_list).astype(f32)                       # (9, HW)

    # 0/1 selection matrix picking the (even h, even w) lane of each 2x2 block,
    # i.e. pooled column jc = (h//2)*(W//2) + (w//2).
    j = jnp.arange(HW)
    hj, wj = j // W, j % W
    tgt = (hj // 2) * (W // 2) + (wj // 2)
    keep = ((hj % 2) == 0) & ((wj % 2) == 0)
    sel = (keep[:, None] &
           (tgt[:, None] == jnp.arange(HW // 4)[None, :])).astype(f32)  # (HW, HW/4)

    x_flat = x.astype(f32).reshape(B, Cin, HW)

    kernel = functools.partial(_bottleneck_ssa_kernel, H=H, W=W,
                               Cin=Cin, Cout=Cout)

    out_flat = pl.pallas_call(
        kernel,
        out_shape=jax.ShapeDtypeStruct((B, Cout, HW), f32),
        grid=(B,),
        in_specs=[
            pl.BlockSpec((None, Cin, HW), lambda b: (b, 0, 0)),     # x
            pl.BlockSpec((9, HW), lambda b: (0, 0)),                # tap masks
            pl.BlockSpec((HW, HW // 4), lambda b: (0, 0)),          # pool select
            pl.BlockSpec((9, Cout, Cin), lambda b: (0, 0, 0)),      # conv1 taps
            pl.BlockSpec((9, Cout, Cout), lambda b: (0, 0, 0)),     # conv2 taps
            pl.BlockSpec((3 * C2, Cout), lambda b: (0, 0)),         # wa1;wa3;wa2
            pl.BlockSpec((Cout, C2), lambda b: (0, 0)),             # gamma*wa4
            pl.BlockSpec((2, Cin, 1), lambda b: (0, 0, 0)),         # BN1 affine
            pl.BlockSpec((5, Cout, 1), lambda b: (0, 0, 0)),        # BN2/PReLU/BN3
        ],
        out_specs=pl.BlockSpec((None, Cout, HW), lambda b: (b, 0, 0)),
        compiler_params=pltpu.CompilerParams(
            dimension_semantics=("parallel",),
            vmem_limit_bytes=32 * 1024 * 1024),
    )(x_flat, masks, sel, w1_k, w2_k, wa123, wa4g, bnin, bnout)

    return out_flat.reshape(B, Cout, H, W)


def _reference_forward(x, w_conv1, w_conv2, bn1, bn2, prelu_a, bn3,
                       wa1, wa2, wa3, wa4, gamma, *, stride=1,
                       dim_match=True, eps=1e-5):
    """Pure-JAX reference mirroring the PyTorch forward (eval-mode BN)."""
    hi = lax.Precision.HIGHEST

    def bn(t, p):
        w, b, m, v = p
        inv = (w / jnp.sqrt(v + eps))[None, :, None, None]
        return (t - m[None, :, None, None]) * inv + b[None, :, None, None]

    def conv3x3(t, w, s):
        return lax.conv_general_dilated(
            t, w, window_strides=(s, s), padding=((1, 1), (1, 1)),
            dimension_numbers=("NCHW", "OIHW", "NCHW"), precision=hi)

    h = bn(x, bn1)
    h = conv3x3(h, w_conv1, 1)
    h = bn(h, bn2)
    h = jnp.where(h >= 0, h, prelu_a[None, :, None, None] * h)
    h = conv3x3(h, w_conv2, stride)
    h = bn(h, bn3)

    # TinySelfSpatialAttentionModule
    B, C, Hc, Wc = h.shape
    C2 = C // 2
    c1 = jnp.einsum("oc,bchw->bohw", wa1, h, precision=hi)
    c2 = jnp.einsum("oc,bchw->bohw", wa2, h, precision=hi)
    c3 = jnp.einsum("oc,bchw->bohw", wa3, h, precision=hi)

    def pool(t):
        b_, ck, h_, w_ = t.shape
        tb = t.reshape(b_, ck, h_ // 2, 2, w_ // 2, 2)
        return tb.max(axis=(3, 5)) + tb.mean(axis=(3, 5))

    p1 = pool(c1).reshape(B, C2, -1)
    p3 = pool(c3).reshape(B, C2, -1)
    c2f = c2.reshape(B, C2, -1)
    mat = jnp.einsum("bci,bcj->bij", c2f, p1, precision=hi)
    attn = jax.nn.softmax(mat, axis=-1)
    half = jnp.einsum("bcj,bij->bci", p3, attn, precision=hi)
    refined = jnp.einsum("oc,bci->boi", wa4, half, precision=hi)
    res = gamma * refined.reshape(B, C, Hc, Wc) + h

    shortcut = x  # dim_match=True, stride=1
    return shortcut + res


if __name__ == "__main__":
    B, Cin, Cout, H, W = 2, 4, 4, 16, 16
    C2 = Cout // 2

    key = jax.random.PRNGKey(0)
    ks = jax.random.split(key, 12)

    x = jax.random.normal(ks[0], (B, Cin, H, W), dtype=jnp.float32)

    # res_layer conv weights (Conv2d, bias=False, OIHW)
    w_conv1 = jax.random.normal(ks[1], (Cout, Cin, 3, 3), jnp.float32) * 0.2
    w_conv2 = jax.random.normal(ks[2], (Cout, Cout, 3, 3), jnp.float32) * 0.2
    # attention 1x1 conv weights (out, in)
    wa1 = jax.random.normal(ks[3], (C2, Cout), jnp.float32) * 0.5
    wa2 = jax.random.normal(ks[4], (C2, Cout), jnp.float32) * 0.5
    wa3 = jax.random.normal(ks[5], (C2, Cout), jnp.float32) * 0.5
    wa4 = jax.random.normal(ks[6], (Cout, C2), jnp.float32) * 0.5

    def bn_params(k, c):
        k1, k2, k3, k4 = jax.random.split(k, 4)
        return (1.0 + 0.2 * jax.random.normal(k1, (c,), jnp.float32),   # weight
                0.1 * jax.random.normal(k2, (c,), jnp.float32),         # bias
                0.1 * jax.random.normal(k3, (c,), jnp.float32),         # mean
                0.5 + jax.random.uniform(k4, (c,), jnp.float32))        # var

    bn1 = bn_params(ks[7], Cin)
    bn2 = bn_params(ks[8], Cout)
    bn3 = bn_params(ks[9], Cout)
    prelu_a = 0.25 + 0.1 * jax.random.uniform(ks[10], (Cout,), jnp.float32)
    # nn.Parameter(torch.zeros(1)) in __init__; use a nonzero gamma so the
    # attention branch is actually exercised in this synthetic test.
    gamma = jnp.float32(0.5)

    out = bottleneck_ir_ssa_tiny(x, w_conv1, w_conv2, bn1, bn2, prelu_a, bn3,
                                 wa1, wa2, wa3, wa4, gamma,
                                 stride=1, dim_match=True)
    out = jax.block_until_ready(out)

    ref = _reference_forward(x, w_conv1, w_conv2, bn1, bn2, prelu_a, bn3,
                             wa1, wa2, wa3, wa4, gamma,
                             stride=1, dim_match=True)
    assert out.shape == (B, Cout, H, W)
    # Tolerance covers the intentional bf16 value-aggregation matmul and the
    # approx EUP reciprocal in the softmax (observed error is a few 1e-3).
    assert jnp.allclose(out, ref, atol=2e-2, rtol=2e-2), (
        float(jnp.max(jnp.abs(out - ref))))

    print("KERNEL_OK")
</pallas_src>

<mosaic_0001>
module attributes {stable_mosaic.version = 11 : i64} {
  func.func @_bottleneck_ssa_kernel(%arg0: i32, %arg1: memref<1x4x256xf32, #tpu.memory_space<vmem>>, %arg2: memref<9x256xf32, #tpu.memory_space<vmem>>, %arg3: memref<256x64xf32, #tpu.memory_space<vmem>>, %arg4: memref<9x4x4xf32, #tpu.memory_space<vmem>>, %arg5: memref<9x4x4xf32, #tpu.memory_space<vmem>>, %arg6: memref<6x4xf32, #tpu.memory_space<vmem>>, %arg7: memref<4x2xf32, #tpu.memory_space<vmem>>, %arg8: memref<2x4x1xf32, #tpu.memory_space<vmem>>, %arg9: memref<5x4x1xf32, #tpu.memory_space<vmem>>, %arg10: memref<1x4x256xf32, #tpu.memory_space<vmem>>) attributes {dimension_semantics = [#tpu.dimension_semantics<parallel>], iteration_bounds = array<i64: 2>, scalar_prefetch = 0 : i64, scratch_operands = 0 : i64, tpu.core_type = #tpu.core_type<tc>, window_params = [{transform_indices = @transform_0, window_bounds = array<i64: 1, 4, 256>}, {pipeline_mode = #tpu.pipeline_mode<synchronous>, transform_indices = @transform_1, window_bounds = array<i64: 9, 256>}, {pipeline_mode = #tpu.pipeline_mode<synchronous>, transform_indices = @transform_2, window_bounds = array<i64: 256, 64>}, {pipeline_mode = #tpu.pipeline_mode<synchronous>, transform_indices = @transform_3, window_bounds = array<i64: 9, 4, 4>}, {pipeline_mode = #tpu.pipeline_mode<synchronous>, transform_indices = @transform_4, window_bounds = array<i64: 9, 4, 4>}, {pipeline_mode = #tpu.pipeline_mode<synchronous>, transform_indices = @transform_5, window_bounds = array<i64: 6, 4>}, {pipeline_mode = #tpu.pipeline_mode<synchronous>, transform_indices = @transform_6, window_bounds = array<i64: 4, 2>}, {pipeline_mode = #tpu.pipeline_mode<synchronous>, transform_indices = @transform_7, window_bounds = array<i64: 2, 4, 1>}, {pipeline_mode = #tpu.pipeline_mode<synchronous>, transform_indices = @transform_8, window_bounds = array<i64: 5, 4, 1>}, {transform_indices = @transform_9, window_bounds = array<i64: 1, 4, 256>}]} {
    %c0 = arith.constant 0 : index
    %c0_0 = arith.constant 0 : index
    %c0_1 = arith.constant 0 : index
    %0 = vector.load %arg1[%c0, %c0_0, %c0_1] : memref<1x4x256xf32, #tpu.memory_space<vmem>>, vector<1x4x256xf32>
    %1 = vector.shape_cast %0 : vector<1x4x256xf32> to vector<4x256xf32>
    %c0_2 = arith.constant 0 : index
    %c0_3 = arith.constant 0 : index
    %2 = vector.load %arg2[%c0_2, %c0_3] : memref<9x256xf32, #tpu.memory_space<vmem>>, vector<9x256xf32>
    %c0_4 = arith.constant 0 : index
    %c0_5 = arith.constant 0 : index
    %c0_6 = arith.constant 0 : index
    %3 = vector.load %arg8[%c0_4, %c0_5, %c0_6] : memref<2x4x1xf32, #tpu.memory_space<vmem>>, vector<1x4x1xf32>
    %4 = vector.shape_cast %3 : vector<1x4x1xf32> to vector<4x1xf32>
    %5 = vector.broadcast %4 : vector<4x1xf32> to vector<4x256xf32>
    %6 = arith.mulf %5, %1 : vector<4x256xf32>
    %c1 = arith.constant 1 : index
    %c0_7 = arith.constant 0 : index
    %c0_8 = arith.constant 0 : index
    %7 = vector.load %arg8[%c1, %c0_7, %c0_8] : memref<2x4x1xf32, #tpu.memory_space<vmem>>, vector<1x4x1xf32>
    %8 = vector.shape_cast %7 : vector<1x4x1xf32> to vector<4x1xf32>
    %9 = vector.broadcast %8 : vector<4x1xf32> to vector<4x256xf32>
    %10 = arith.addf %6, %9 : vector<4x256xf32>
    %11 = vector.extract_strided_slice %2 {offsets = [0, 0], sizes = [1, 256], strides = [1, 1]} : vector<9x256xf32> to vector<1x256xf32>
    %c17_i32 = arith.constant 17 : i32
    %12 = tpu.dynamic_rotate %10 by %c17_i32 dim 1 : vector<4x256xf32>, i32 -> vector<4x256xf32>
    %13 = vector.broadcast %11 : vector<1x256xf32> to vector<4x256xf32>
    %14 = arith.mulf %13, %12 : vector<4x256xf32>
    %c0_9 = arith.constant 0 : index
    %c0_10 = arith.constant 0 : index
    %c0_11 = arith.constant 0 : index
    %15 = vector.load %arg4[%c0_9, %c0_10, %c0_11] : memref<9x4x4xf32, #tpu.memory_space<vmem>>, vector<1x4x4xf32>
    %16 = vector.shape_cast %15 : vector<1x4x4xf32> to vector<4x4xf32>
    %cst = arith.constant dense<0.000000e+00> : vector<4x256xf32>
    %17 = tpu.matmul %16, %14, %cst {dimension_numbers = #tpu.dot_dimension_numbers<[1], [0], [0], [1], [0, 0, 1, 1], [], []>} : vector<4x4xf32>, vector<4x256xf32>, vector<4x256xf32> -> vector<4x256xf32>
    %18 = vector.extract_strided_slice %2 {offsets = [1, 0], sizes = [1, 256], strides = [1, 1]} : vector<9x256xf32> to vector<1x256xf32>
    %c16_i32 = arith.constant 16 : i32
    %19 = tpu.dynamic_rotate %10 by %c16_i32 dim 1 : vector<4x256xf32>, i32 -> vector<4x256xf32>
    %20 = vector.broadcast %18 : vector<1x256xf32> to vector<4x256xf32>
    %21 = arith.mulf %20, %19 : vector<4x256xf32>
    %c1_12 = arith.constant 1 : index
    %c0_13 = arith.constant 0 : index
    %c0_14 = arith.constant 0 : index
    %22 = vector.load %arg4[%c1_12, %c0_13, %c0_14] : memref<9x4x4xf32, #tpu.memory_space<vmem>>, vector<1x4x4xf32>
    %23 = vector.shape_cast %22 : vector<1x4x4xf32> to vector<4x4xf32>
    %cst_15 = arith.constant dense<0.000000e+00> : vector<4x256xf32>
    %24 = tpu.matmul %23, %21, %cst_15 {dimension_numbers = #tpu.dot_dimension_numbers<[1], [0], [0], [1], [0, 0, 1, 1], [], []>} : vector<4x4xf32>, vector<4x256xf32>, vector<4x256xf32> -> vector<4x256xf32>
    %25 = arith.addf %17, %24 : vector<4x256xf32>
    %26 = vector.extract_strided_slice %2 {offsets = [2, 0], sizes = [1, 256], strides = [1, 1]} : vector<9x256xf32> to vector<1x256xf32>
    %c15_i32 = arith.constant 15 : i32
    %27 = tpu.dynamic_rotate %10 by %c15_i32 dim 1 : vector<4x256xf32>, i32 -> vector<4x256xf32>
    %28 = vector.broadcast %26 : vector<1x256xf32> to vector<4x256xf32>
    %29 = arith.mulf %28, %27 : vector<4x256xf32>
    %c2 = arith.constant 2 : index
    %c0_16 = arith.constant 0 : index
    %c0_17 = arith.constant 0 : index
    %30 = vector.load %arg4[%c2, %c0_16, %c0_17] : memref<9x4x4xf32, #tpu.memory_space<vmem>>, vector<1x4x4xf32>
    %31 = vector.shape_cast %30 : vector<1x4x4xf32> to vector<4x4xf32>
    %cst_18 = arith.constant dense<0.000000e+00> : vector<4x256xf32>
    %32 = tpu.matmul %31, %29, %cst_18 {dimension_numbers = #tpu.dot_dimension_numbers<[1], [0], [0], [1], [0, 0, 1, 1], [], []>} : vector<4x4xf32>, vector<4x256xf32>, vector<4x256xf32> -> vector<4x256xf32>
    %33 = arith.addf %25, %32 : vector<4x256xf32>
    %34 = vector.extract_strided_slice %2 {offsets = [3, 0], sizes = [1, 256], strides = [1, 1]} : vector<9x256xf32> to vector<1x256xf32>
    %c1_i32 = arith.constant 1 : i32
    %35 = tpu.dynamic_rotate %10 by %c1_i32 dim 1 : vector<4x256xf32>, i32 -> vector<4x256xf32>
    %36 = vector.broadcast %34 : vector<1x256xf32> to vector<4x256xf32>
    %37 = arith.mulf %36, %35 : vector<4x256xf32>
    %c3 = arith.constant 3 : index
    %c0_19 = arith.constant 0 : index
    %c0_20 = arith.constant 0 : index
    %38 = vector.load %arg4[%c3, %c0_19, %c0_20] : memref<9x4x4xf32, #tpu.memory_space<vmem>>, vector<1x4x4xf32>
    %39 = vector.shape_cast %38 : vector<1x4x4xf32> to vector<4x4xf32>
    %cst_21 = arith.constant dense<0.000000e+00> : vector<4x256xf32>
    %40 = tpu.matmul %39, %37, %cst_21 {dimension_numbers = #tpu.dot_dimension_numbers<[1], [0], [0], [1], [0, 0, 1, 1], [], []>} : vector<4x4xf32>, vector<4x256xf32>, vector<4x256xf32> -> vector<4x256xf32>
    %41 = arith.addf %33, %40 : vector<4x256xf32>
    %c4 = arith.constant 4 : index
    %c0_22 = arith.constant 0 : index
    %c0_23 = arith.constant 0 : index
    %42 = vector.load %arg4[%c4, %c0_22, %c0_23] : memref<9x4x4xf32, #tpu.memory_space<vmem>>, vector<1x4x4xf32>
    %43 = vector.shape_cast %42 : vector<1x4x4xf32> to vector<4x4xf32>
    %cst_24 = arith.constant dense<0.000000e+00> : vector<4x256xf32>
    %44 = tpu.matmul %43, %10, %cst_24 {dimension_numbers = #tpu.dot_dimension_numbers<[1], [0], [0], [1], [0, 0, 1, 1], [], []>} : vector<4x4xf32>, vector<4x256xf32>, vector<4x256xf32> -> vector<4x256xf32>
    %45 = arith.addf %41, %44 : vector<4x256xf32>
    %46 = vector.extract_strided_slice %2 {offsets = [5, 0], sizes = [1, 256], strides = [1, 1]} : vector<9x256xf32> to vector<1x256xf32>
    %c255_i32 = arith.constant 255 : i32
    %47 = tpu.dynamic_rotate %10 by %c255_i32 dim 1 : vector<4x256xf32>, i32 -> vector<4x256xf32>
    %48 = vector.broadcast %46 : vector<1x256xf32> to vector<4x256xf32>
    %49 = arith.mulf %48, %47 : vector<4x256xf32>
    %c5 = arith.constant 5 : index
    %c0_25 = arith.constant 0 : index
    %c0_26 = arith.constant 0 : index
    %50 = vector.load %arg4[%c5, %c0_25, %c0_26] : memref<9x4x4xf32, #tpu.memory_space<vmem>>, vector<1x4x4xf32>
    %51 = vector.shape_cast %50 : vector<1x4x4xf32> to vector<4x4xf32>
    %cst_27 = arith.constant dense<0.000000e+00> : vector<4x256xf32>
    %52 = tpu.matmul %51, %49, %cst_27 {dimension_numbers = #tpu.dot_dimension_numbers<[1], [0], [0], [1], [0, 0, 1, 1], [], []>} : vector<4x4xf32>, vector<4x256xf32>, vector<4x256xf32> -> vector<4x256xf32>
    %53 = arith.addf %45, %52 : vector<4x256xf32>
    %54 = vector.extract_strided_slice %2 {offsets = [6, 0], sizes = [1, 256], strides = [1, 1]} : vector<9x256xf32> to vector<1x256xf32>
    %c241_i32 = arith.constant 241 : i32
    %55 = tpu.dynamic_rotate %10 by %c241_i32 dim 1 : vector<4x256xf32>, i32 -> vector<4x256xf32>
    %56 = vector.broadcast %54 : vector<1x256xf32> to vector<4x256xf32>
    %57 = arith.mulf %56, %55 : vector<4x256xf32>
    %c6 = arith.constant 6 : index
    %c0_28 = arith.constant 0 : index
    %c0_29 = arith.constant 0 : index
    %58 = vector.load %arg4[%c6, %c0_28, %c0_29] : memref<9x4x4xf32, #tpu.memory_space<vmem>>, vector<1x4x4xf32>
    %59 = vector.shape_cast %58 : vector<1x4x4xf32> to vector<4x4xf32>
    %cst_30 = arith.constant dense<0.000000e+00> : vector<4x256xf32>
    %60 = tpu.matmul %59, %57, %cst_30 {dimension_numbers = #tpu.dot_dimension_numbers<[1], [0], [0], [1], [0, 0, 1, 1], [], []>} : vector<4x4xf32>, vector<4x256xf32>, vector<4x256xf32> -> vector<4x256xf32>
    %61 = arith.addf %53, %60 : vector<4x256xf32>
    %62 = vector.extract_strided_slice %2 {offsets = [7, 0], sizes = [1, 256], strides = [1, 1]} : vector<9x256xf32> to vector<1x256xf32>
    %c240_i32 = arith.constant 240 : i32
    %63 = tpu.dynamic_rotate %10 by %c240_i32 dim 1 : vector<4x256xf32>, i32 -> vector<4x256xf32>
    %64 = vector.broadcast %62 : vector<1x256xf32> to vector<4x256xf32>
    %65 = arith.mulf %64, %63 : vector<4x256xf32>
    %c7 = arith.constant 7 : index
    %c0_31 = arith.constant 0 : index
    %c0_32 = arith.constant 0 : index
    %66 = vector.load %arg4[%c7, %c0_31, %c0_32] : memref<9x4x4xf32, #tpu.memory_space<vmem>>, vector<1x4x4xf32>
    %67 = vector.shape_cast %66 : vector<1x4x4xf32> to vector<4x4xf32>
    %cst_33 = arith.constant dense<0.000000e+00> : vector<4x256xf32>
    %68 = tpu.matmul %67, %65, %cst_33 {dimension_numbers = #tpu.dot_dimension_numbers<[1], [0], [0], [1], [0, 0, 1, 1], [], []>} : vector<4x4xf32>, vector<4x256xf32>, vector<4x256xf32> -> vector<4x256xf32>
    %69 = arith.addf %61, %68 : vector<4x256xf32>
    %70 = vector.extract_strided_slice %2 {offsets = [8, 0], sizes = [1, 256], strides = [1, 1]} : vector<9x256xf32> to vector<1x256xf32>
    %c239_i32 = arith.constant 239 : i32
    %71 = tpu.dynamic_rotate %10 by %c239_i32 dim 1 : vector<4x256xf32>, i32 -> vector<4x256xf32>
    %72 = vector.broadcast %70 : vector<1x256xf32> to vector<4x256xf32>
    %73 = arith.mulf %72, %71 : vector<4x256xf32>
    %c8 = arith.constant 8 : index
    %c0_34 = arith.constant 0 : index
    %c0_35 = arith.constant 0 : index
    %74 = vector.load %arg4[%c8, %c0_34, %c0_35] : memref<9x4x4xf32, #tpu.memory_space<vmem>>, vector<1x4x4xf32>
    %75 = vector.shape_cast %74 : vector<1x4x4xf32> to vector<4x4xf32>
    %cst_36 = arith.constant dense<0.000000e+00> : vector<4x256xf32>
    %76 = tpu.matmul %75, %73, %cst_36 {dimension_numbers = #tpu.dot_dimension_numbers<[1], [0], [0], [1], [0, 0, 1, 1], [], []>} : vector<4x4xf32>, vector<4x256xf32>, vector<4x256xf32> -> vector<4x256xf32>
    %77 = arith.addf %69, %76 : vector<4x256xf32>
    %c0_37 = arith.constant 0 : index
    %c0_38 = arith.constant 0 : index
    %c0_39 = arith.constant 0 : index
    %78 = vector.load %arg9[%c0_37, %c0_38, %c0_39] : memref<5x4x1xf32, #tpu.memory_space<vmem>>, vector<1x4x1xf32>
    %79 = vector.shape_cast %78 : vector<1x4x1xf32> to vector<4x1xf32>
    %80 = vector.broadcast %79 : vector<4x1xf32> to vector<4x256xf32>
    %81 = arith.mulf %80, %77 : vector<4x256xf32>
    %c1_40 = arith.constant 1 : index
    %c0_41 = arith.constant 0 : index
    %c0_42 = arith.constant 0 : index
    %82 = vector.load %arg9[%c1_40, %c0_41, %c0_42] : memref<5x4x1xf32, #tpu.memory_space<vmem>>, vector<1x4x1xf32>
    %83 = vector.shape_cast %82 : vector<1x4x1xf32> to vector<4x1xf32>
    %84 = vector.broadcast %83 : vector<4x1xf32> to vector<4x256xf32>
    %85 = arith.addf %81, %84 : vector<4x256xf32>
    %cst_43 = arith.constant 0.000000e+00 : f32
    %86 = vector.broadcast %cst_43 : f32 to vector<4x256xf32>
    %87 = arith.cmpf oge, %85, %86 : vector<4x256xf32>
    %c2_44 = arith.constant 2 : index
    %c0_45 = arith.constant 0 : index
    %c0_46 = arith.constant 0 : index
    %88 = vector.load %arg9[%c2_44, %c0_45, %c0_46] : memref<5x4x1xf32, #tpu.memory_space<vmem>>, vector<1x4x1xf32>
    %89 = vector.shape_cast %88 : vector<1x4x1xf32> to vector<4x1xf32>
    %90 = vector.broadcast %89 : vector<4x1xf32> to vector<4x256xf32>
    %91 = arith.mulf %90, %85 : vector<4x256xf32>
    %92 = arith.select %87, %85, %91 : vector<4x256xi1>, vector<4x256xf32>
    %93 = vector.extract_strided_slice %2 {offsets = [0, 0], sizes = [1, 256], strides = [1, 1]} : vector<9x256xf32> to vector<1x256xf32>
    %c17_i32_47 = arith.constant 17 : i32
    %94 = tpu.dynamic_rotate %92 by %c17_i32_47 dim 1 : vector<4x256xf32>, i32 -> vector<4x256xf32>
    %95 = vector.broadcast %93 : vector<1x256xf32> to vector<4x256xf32>
    %96 = arith.mulf %95, %94 : vector<4x256xf32>
    %c0_48 = arith.constant 0 : index
    %c0_49 = arith.constant 0 : index
    %c0_50 = arith.constant 0 : index
    %97 = vector.load %arg5[%c0_48, %c0_49, %c0_50] : memref<9x4x4xf32, #tpu.memory_space<vmem>>, vector<1x4x4xf32>
    %98 = vector.shape_cast %97 : vector<1x4x4xf32> to vector<4x4xf32>
    %cst_51 = arith.constant dense<0.000000e+00> : vector<4x256xf32>
    %99 = tpu.matmul %98, %96, %cst_51 {dimension_numbers = #tpu.dot_dimension_numbers<[1], [0], [0], [1], [0, 0, 1, 1], [], []>} : vector<4x4xf32>, vector<4x256xf32>, vector<4x256xf32> -> vector<4x256xf32>
    %100 = vector.extract_strided_slice %2 {offsets = [1, 0], sizes = [1, 256], strides = [1, 1]} : vector<9x256xf32> to vector<1x256xf32>
    %c16_i32_52 = arith.constant 16 : i32
    %101 = tpu.dynamic_rotate %92 by %c16_i32_52 dim 1 : vector<4x256xf32>, i32 -> vector<4x256xf32>
    %102 = vector.broadcast %100 : vector<1x256xf32> to vector<4x256xf32>
    %103 = arith.mulf %102, %101 : vector<4x256xf32>
    %c1_53 = arith.constant 1 : index
    %c0_54 = arith.constant 0 : index
    %c0_55 = arith.constant 0 : index
    %104 = vector.load %arg5[%c1_53, %c0_54, %c0_55] : memref<9x4x4xf32, #tpu.memory_space<vmem>>, vector<1x4x4xf32>
    %105 = vector.shape_cast %104 : vector<1x4x4xf32> to vector<4x4xf32>
    %cst_56 = arith.constant dense<0.000000e+00> : vector<4x256xf32>
    %106 = tpu.matmul %105, %103, %cst_56 {dimension_numbers = #tpu.dot_dimension_numbers<[1], [0], [0], [1], [0, 0, 1, 1], [], []>} : vector<4x4xf32>, vector<4x256xf32>, vector<4x256xf32> -> vector<4x256xf32>
    %107 = arith.addf %99, %106 : vector<4x256xf32>
    %108 = vector.extract_strided_slice %2 {offsets = [2, 0], sizes = [1, 256], strides = [1, 1]} : vector<9x256xf32> to vector<1x256xf32>
    %c15_i32_57 = arith.constant 15 : i32
    %109 = tpu.dynamic_rotate %92 by %c15_i32_57 dim 1 : vector<4x256xf32>, i32 -> vector<4x256xf32>
    %110 = vector.broadcast %108 : vector<1x256xf32> to vector<4x256xf32>
    %111 = arith.mulf %110, %109 : vector<4x256xf32>
    %c2_58 = arith.constant 2 : index
    %c0_59 = arith.constant 0 : index
    %c0_60 = arith.constant 0 : index
    %112 = vector.load %arg5[%c2_58, %c0_59, %c0_60] : memref<9x4x4xf32, #tpu.memory_space<vmem>>, vector<1x4x4xf32>
    %113 = vector.shape_cast %112 : vector<1x4x4xf32> to vector<4x4xf32>
    %cst_61 = arith.constant dense<0.000000e+00> : vector<4x256xf32>
    %114 = tpu.matmul %113, %111, %cst_61 {dimension_numbers = #tpu.dot_dimension_numbers<[1], [0], [0], [1], [0, 0, 1, 1], [], []>} : vector<4x4xf32>, vector<4x256xf32>, vector<4x256xf32> -> vector<4x256xf32>
    %115 = arith.addf %107, %114 : vector<4x256xf32>
    %116 = vector.extract_strided_slice %2 {offsets = [3, 0], sizes = [1, 256], strides = [1, 1]} : vector<9x256xf32> to vector<1x256xf32>
    %c1_i32_62 = arith.constant 1 : i32
    %117 = tpu.dynamic_rotate %92 by %c1_i32_62 dim 1 : vector<4x256xf32>, i32 -> vector<4x256xf32>
    %118 = vector.broadcast %116 : vector<1x256xf32> to vector<4x256xf32>
    %119 = arith.mulf %118, %117 : vector<4x256xf32>
    %c3_63 = arith.constant 3 : index
    %c0_64 = arith.constant 0 : index
    %c0_65 = arith.constant 0 : index
    %120 = vector.load %arg5[%c3_63, %c0_64, %c0_65] : memref<9x4x4xf32, #tpu.memory_space<vmem>>, vector<1x4x4xf32>
    %121 = vector.shape_cast %120 : vector<1x4x4xf32> to vector<4x4xf32>
    %cst_66 = arith.constant dense<0.000000e+00> : vector<4x256xf32>
    %122 = tpu.matmul %121, %119, %cst_66 {dimension_numbers = #tpu.dot_dimension_numbers<[1], [0], [0], [1], [0, 0, 1, 1], [], []>} : vector<4x4xf32>, vector<4x256xf32>, vector<4x256xf32> -> vector<4x256xf32>
    %123 = arith.addf %115, %122 : vector<4x256xf32>
    %c4_67 = arith.constant 4 : index
    %c0_68 = arith.constant 0 : index
    %c0_69 = arith.constant 0 : index
    %124 = vector.load %arg5[%c4_67, %c0_68, %c0_69] : memref<9x4x4xf32, #tpu.memory_space<vmem>>, vector<1x4x4xf32>
    %125 = vector.shape_cast %124 : vector<1x4x4xf32> to vector<4x4xf32>
    %cst_70 = arith.constant dense<0.000000e+00> : vector<4x256xf32>
    %126 = tpu.matmul %125, %92, %cst_70 {dimension_numbers = #tpu.dot_dimension_numbers<[1], [0], [0], [1], [0, 0, 1, 1], [], []>} : vector<4x4xf32>, vector<4x256xf32>, vector<4x256xf32> -> vector<4x256xf32>
    %127 = arith.addf %123, %126 : vector<4x256xf32>
    %128 = vector.extract_strided_slice %2 {offsets = [5, 0], sizes = [1, 256], strides = [1, 1]} : vector<9x256xf32> to vector<1x256xf32>
    %c255_i32_71 = arith.constant 255 : i32
    %129 = tpu.dynamic_rotate %92 by %c255_i32_71 dim 1 : vector<4x256xf32>, i32 -> vector<4x256xf32>
    %130 = vector.broadcast %128 : vector<1x256xf32> to vector<4x256xf32>
    %131 = arith.mulf %130, %129 : vector<4x256xf32>
    %c5_72 = arith.constant 5 : index
    %c0_73 = arith.constant 0 : index
    %c0_74 = arith.constant 0 : index
    %132 = vector.load %arg5[%c5_72, %c0_73, %c0_74] : memref<9x4x4xf32, #tpu.memory_space<vmem>>, vector<1x4x4xf32>
    %133 = vector.shape_cast %132 : vector<1x4x4xf32> to vector<4x4xf32>
    %cst_75 = arith.constant dense<0.000000e+00> : vector<4x256xf32>
    %134 = tpu.matmul %133, %131, %cst_75 {dimension_numbers = #tpu.dot_dimension_numbers<[1], [0], [0], [1], [0, 0, 1, 1], [], []>} : vector<4x4xf32>, vector<4x256xf32>, vector<4x256xf32> -> vector<4x256xf32>
    %135 = arith.addf %127, %134 : vector<4x256xf32>
    %136 = vector.extract_strided_slice %2 {offsets = [6, 0], sizes = [1, 256], strides = [1, 1]} : vector<9x256xf32> to vector<1x256xf32>
    %c241_i32_76 = arith.constant 241 : i32
    %137 = tpu.dynamic_rotate %92 by %c241_i32_76 dim 1 : vector<4x256xf32>, i32 -> vector<4x256xf32>
    %138 = vector.broadcast %136 : vector<1x256xf32> to vector<4x256xf32>
    %139 = arith.mulf %138, %137 : vector<4x256xf32>
    %c6_77 = arith.constant 6 : index
    %c0_78 = arith.constant 0 : index
    %c0_79 = arith.constant 0 : index
    %140 = vector.load %arg5[%c6_77, %c0_78, %c0_79] : memref<9x4x4xf32, #tpu.memory_space<vmem>>, vector<1x4x4xf32>
    %141 = vector.shape_cast %140 : vector<1x4x4xf32> to vector<4x4xf32>
    %cst_80 = arith.constant dense<0.000000e+00> : vector<4x256xf32>
    %142 = tpu.matmul %141, %139, %cst_80 {dimension_numbers = #tpu.dot_dimension_numbers<[1], [0], [0], [1], [0, 0, 1, 1], [], []>} : vector<4x4xf32>, vector<4x256xf32>, vector<4x256xf32> -> vector<4x256xf32>
    %143 = arith.addf %135, %142 : vector<4x256xf32>
    %144 = vector.extract_strided_slice %2 {offsets = [7, 0], sizes = [1, 256], strides = [1, 1]} : vector<9x256xf32> to vector<1x256xf32>
    %c240_i32_81 = arith.constant 240 : i32
    %145 = tpu.dynamic_rotate %92 by %c240_i32_81 dim 1 : vector<4x256xf32>, i32 -> vector<4x256xf32>
    %146 = vector.broadcast %144 : vector<1x256xf32> to vector<4x256xf32>
    %147 = arith.mulf %146, %145 : vector<4x256xf32>
    %c7_82 = arith.constant 7 : index
    %c0_83 = arith.constant 0 : index
    %c0_84 = arith.constant 0 : index
    %148 = vector.load %arg5[%c7_82, %c0_83, %c0_84] : memref<9x4x4xf32, #tpu.memory_space<vmem>>, vector<1x4x4xf32>
    %149 = vector.shape_cast %148 : vector<1x4x4xf32> to vector<4x4xf32>
    %cst_85 = arith.constant dense<0.000000e+00> : vector<4x256xf32>
    %150 = tpu.matmul %149, %147, %cst_85 {dimension_numbers = #tpu.dot_dimension_numbers<[1], [0], [0], [1], [0, 0, 1, 1], [], []>} : vector<4x4xf32>, vector<4x256xf32>, vector<4x256xf32> -> vector<4x256xf32>
    %151 = arith.addf %143, %150 : vector<4x256xf32>
    %152 = vector.extract_strided_slice %2 {offsets = [8, 0], sizes = [1, 256], strides = [1, 1]} : vector<9x256xf32> to vector<1x256xf32>
    %c239_i32_86 = arith.constant 239 : i32
    %153 = tpu.dynamic_rotate %92 by %c239_i32_86 dim 1 : vector<4x256xf32>, i32 -> vector<4x256xf32>
    %154 = vector.broadcast %152 : vector<1x256xf32> to vector<4x256xf32>
    %155 = arith.mulf %154, %153 : vector<4x256xf32>
    %c8_87 = arith.constant 8 : index
    %c0_88 = arith.constant 0 : index
    %c0_89 = arith.constant 0 : index
    %156 = vector.load %arg5[%c8_87, %c0_88, %c0_89] : memref<9x4x4xf32, #tpu.memory_space<vmem>>, vector<1x4x4xf32>
    %157 = vector.shape_cast %156 : vector<1x4x4xf32> to vector<4x4xf32>
    %cst_90 = arith.constant dense<0.000000e+00> : vector<4x256xf32>
    %158 = tpu.matmul %157, %155, %cst_90 {dimension_numbers = #tpu.dot_dimension_numbers<[1], [0], [0], [1], [0, 0, 1, 1], [], []>} : vector<4x4xf32>, vector<4x256xf32>, vector<4x256xf32> -> vector<4x256xf32>
    %159 = arith.addf %151, %158 : vector<4x256xf32>
    %c3_91 = arith.constant 3 : index
    %c0_92 = arith.constant 0 : index
    %c0_93 = arith.constant 0 : index
    %160 = vector.load %arg9[%c3_91, %c0_92, %c0_93] : memref<5x4x1xf32, #tpu.memory_space<vmem>>, vector<1x4x1xf32>
    %161 = vector.shape_cast %160 : vector<1x4x1xf32> to vector<4x1xf32>
    %162 = vector.broadcast %161 : vector<4x1xf32> to vector<4x256xf32>
    %163 = arith.mulf %162, %159 : vector<4x256xf32>
    %c4_94 = arith.constant 4 : index
    %c0_95 = arith.constant 0 : index
    %c0_96 = arith.constant 0 : index
    %164 = vector.load %arg9[%c4_94, %c0_95, %c0_96] : memref<5x4x1xf32, #tpu.memory_space<vmem>>, vector<1x4x1xf32>
    %165 = vector.shape_cast %164 : vector<1x4x1xf32> to vector<4x1xf32>
    %166 = vector.broadcast %165 : vector<4x1xf32> to vector<4x256xf32>
    %167 = arith.addf %163, %166 : vector<4x256xf32>
    %c0_97 = arith.constant 0 : index
    %c0_98 = arith.constant 0 : index
    %168 = vector.load %arg6[%c0_97, %c0_98] : memref<6x4xf32, #tpu.memory_space<vmem>>, vector<6x4xf32>
    %cst_99 = arith.constant dense<0.000000e+00> : vector<6x256xf32>
    %169 = tpu.matmul %168, %167, %cst_99 {dimension_numbers = #tpu.dot_dimension_numbers<[1], [0], [0], [1], [0, 0, 1, 1], [], []>} : vector<6x4xf32>, vector<4x256xf32>, vector<6x256xf32> -> vector<6x256xf32>
    %170 = vector.extract_strided_slice %169 {offsets = [0, 0], sizes = [4, 256], strides = [1, 1]} : vector<6x256xf32> to vector<4x256xf32>
    %171 = vector.extract_strided_slice %169 {offsets = [4, 0], sizes = [2, 256], strides = [1, 1]} : vector<6x256xf32> to vector<2x256xf32>
    %c255_i32_100 = arith.constant 255 : i32
    %172 = tpu.dynamic_rotate %170 by %c255_i32_100 dim 1 : vector<4x256xf32>, i32 -> vector<4x256xf32>
    %c240_i32_101 = arith.constant 240 : i32
    %173 = tpu.dynamic_rotate %170 by %c240_i32_101 dim 1 : vector<4x256xf32>, i32 -> vector<4x256xf32>
    %c239_i32_102 = arith.constant 239 : i32
    %174 = tpu.dynamic_rotate %170 by %c239_i32_102 dim 1 : vector<4x256xf32>, i32 -> vector<4x256xf32>
    %175 = arith.maximumf %170, %172 : vector<4x256xf32>
    %176 = arith.maximumf %173, %174 : vector<4x256xf32>
    %177 = arith.maximumf %175, %176 : vector<4x256xf32>
    %178 = arith.addf %170, %172 : vector<4x256xf32>
    %179 = arith.addf %178, %173 : vector<4x256xf32>
    %180 = arith.addf %179, %174 : vector<4x256xf32>
    %cst_103 = arith.constant 2.500000e-01 : f32
    %181 = vector.broadcast %cst_103 : f32 to vector<4x256xf32>
    %182 = arith.mulf %180, %181 : vector<4x256xf32>
    %183 = arith.addf %177, %182 : vector<4x256xf32>
    %c0_104 = arith.constant 0 : index
    %c0_105 = arith.constant 0 : index
    %184 = vector.load %arg3[%c0_104, %c0_105] : memref<256x64xf32, #tpu.memory_space<vmem>>, vector<256x64xf32>
    %cst_106 = arith.constant dense<0.000000e+00> : vector<4x64xf32>
    %185 = tpu.matmul %183, %184, %cst_106 {dimension_numbers = #tpu.dot_dimension_numbers<[1], [0], [0], [1], [0, 0, 1, 1], [], []>} : vector<4x256xf32>, vector<256x64xf32>, vector<4x64xf32> -> vector<4x64xf32>
    %186 = vector.extract_strided_slice %185 {offsets = [0, 0], sizes = [2, 64], strides = [1, 1]} : vector<4x64xf32> to vector<2x64xf32>
    %187 = vector.extract_strided_slice %185 {offsets = [2, 0], sizes = [2, 64], strides = [1, 1]} : vector<4x64xf32> to vector<2x64xf32>
    %cst_107 = arith.constant dense<0.000000e+00> : vector<64x256xf32>
    %188 = tpu.matmul %186, %171, %cst_107 {dimension_numbers = #tpu.dot_dimension_numbers<[0], [0], [1], [1], [0, 1, 1, 1], [], []>} : vector<2x64xf32>, vector<2x256xf32>, vector<64x256xf32> -> vector<64x256xf32>
    %cst_108 = arith.constant dense<0xFF800000> : vector<256xf32>
    %189 = vector.multi_reduction <maximumf>, %188, %cst_108 [0] : vector<64x256xf32> to vector<256xf32>
    %190 = vector.shape_cast %189 : vector<256xf32> to vector<1x256xf32>
    %191 = vector.broadcast %190 : vector<1x256xf32> to vector<64x256xf32>
    %192 = arith.subf %188, %191 : vector<64x256xf32>
    %193 = math.exp %192 : vector<64x256xf32>
    %cst_109 = arith.constant dense<0.000000e+00> : vector<256xf32>
    %194 = vector.multi_reduction <add>, %193, %cst_109 [0] : vector<64x256xf32> to vector<256xf32>
    %195 = vector.shape_cast %194 : vector<256xf32> to vector<1x256xf32>
    %196 = tpu.reciprocal %195 {approx = true} : vector<1x256xf32> -> vector<1x256xf32>
    %197 = vector.broadcast %196 : vector<1x256xf32> to vector<64x256xf32>
    %198 = arith.mulf %193, %197 : vector<64x256xf32>
    %199 = arith.truncf %187 : vector<2x64xf32> to vector<2x64xbf16>
    %200 = arith.truncf %198 : vector<64x256xf32> to vector<64x256xbf16>
    %cst_110 = arith.constant dense<0.000000e+00> : vector<2x256xf32>
    %201 = tpu.matmul %199, %200, %cst_110 {dimension_numbers = #tpu.dot_dimension_numbers<[1], [0], [0], [1], [0, 0, 1, 1], [], []>} : vector<2x64xbf16>, vector<64x256xbf16>, vector<2x256xf32> -> vector<2x256xf32>
    %c0_111 = arith.constant 0 : index
    %c0_112 = arith.constant 0 : index
    %202 = vector.load %arg7[%c0_111, %c0_112] : memref<4x2xf32, #tpu.memory_space<vmem>>, vector<4x2xf32>
    %cst_113 = arith.constant dense<0.000000e+00> : vector<4x256xf32>
    %203 = tpu.matmul %202, %201, %cst_113 {dimension_numbers = #tpu.dot_dimension_numbers<[1], [0], [0], [1], [0, 0, 1, 1], [], []>} : vector<4x2xf32>, vector<2x256xf32>, vector<4x256xf32> -> vector<4x256xf32>
    %204 = arith.addf %203, %167 : vector<4x256xf32>
    %205 = arith.addf %204, %1 : vector<4x256xf32>
    %c0_114 = arith.constant 0 : index
    %c0_115 = arith.constant 0 : index
    %c0_116 = arith.constant 0 : index
    %206 = vector.load %arg10[%c0_114, %c0_115, %c0_116] : memref<1x4x256xf32, #tpu.memory_space<vmem>>, vector<1x4x256xf32>
    %207 = vector.shape_cast %206 : vector<1x4x256xf32> to vector<4x256xf32>
    %208 = vector.shape_cast %205 : vector<4x256xf32> to vector<1x4x256xf32>
    tpu.vector_store %arg10[%c0_114, %c0_115, %c0_116], %208 {strides = array<i32>} : memref<1x4x256xf32, #tpu.memory_space<vmem>>, vector<1x4x256xf32>,
    return
  }
  func.func @transform_0(%arg0: i32) -> (i32, i32, i32) {
    %c0_i32 = arith.constant 0 : i32
    %c0_i32_0 = arith.constant 0 : i32
    %c0_i32_1 = arith.constant 0 : i32
    return %arg0, %c0_i32, %c0_i32_0 : i32, i32, i32
  }
  func.func @transform_1(%arg0: i32) -> (i32, i32) {
    %c0_i32 = arith.constant 0 : i32
    %c0_i32_0 = arith.constant 0 : i32
    %c0_i32_1 = arith.constant 0 : i32
    return %c0_i32, %c0_i32_0 : i32, i32
  }
  func.func @transform_2(%arg0: i32) -> (i32, i32) {
    %c0_i32 = arith.constant 0 : i32
    %c0_i32_0 = arith.constant 0 : i32
    %c0_i32_1 = arith.constant 0 : i32
    return %c0_i32, %c0_i32_0 : i32, i32
  }
  func.func @transform_3(%arg0: i32) -> (i32, i32, i32) {
    %c0_i32 = arith.constant 0 : i32
    %c0_i32_0 = arith.constant 0 : i32
    %c0_i32_1 = arith.constant 0 : i32
    %c0_i32_2 = arith.constant 0 : i32
    return %c0_i32, %c0_i32_0, %c0_i32_1 : i32, i32, i32
  }
  func.func @transform_4(%arg0: i32) -> (i32, i32, i32) {
    %c0_i32 = arith.constant 0 : i32
    %c0_i32_0 = arith.constant 0 : i32
    %c0_i32_1 = arith.constant 0 : i32
    %c0_i32_2 = arith.constant 0 : i32
    return %c0_i32, %c0_i32_0, %c0_i32_1 : i32, i32, i32
  }
  func.func @transform_5(%arg0: i32) -> (i32, i32) {
    %c0_i32 = arith.constant 0 : i32
    %c0_i32_0 = arith.constant 0 : i32
    %c0_i32_1 = arith.constant 0 : i32
    return %c0_i32, %c0_i32_0 : i32, i32
  }
  func.func @transform_6(%arg0: i32) -> (i32, i32) {
    %c0_i32 = arith.constant 0 : i32
    %c0_i32_0 = arith.constant 0 : i32
    %c0_i32_1 = arith.constant 0 : i32
    return %c0_i32, %c0_i32_0 : i32, i32
  }
  func.func @transform_7(%arg0: i32) -> (i32, i32, i32) {
    %c0_i32 = arith.constant 0 : i32
    %c0_i32_0 = arith.constant 0 : i32
    %c0_i32_1 = arith.constant 0 : i32
    %c0_i32_2 = arith.constant 0 : i32
    return %c0_i32, %c0_i32_0, %c0_i32_1 : i32, i32, i32
  }
  func.func @transform_8(%arg0: i32) -> (i32, i32, i32) {
    %c0_i32 = arith.constant 0 : i32
    %c0_i32_0 = arith.constant 0 : i32
    %c0_i32_1 = arith.constant 0 : i32
    %c0_i32_2 = arith.constant 0 : i32
    return %c0_i32, %c0_i32_0, %c0_i32_1 : i32, i32, i32
  }
  func.func @transform_9(%arg0: i32) -> (i32, i32, i32) {
    %c0_i32 = arith.constant 0 : i32
    %c0_i32_0 = arith.constant 0 : i32
    %c0_i32_1 = arith.constant 0 : i32
    return %arg0, %c0_i32, %c0_i32_0 : i32, i32, i32
  }
}

</mosaic_0001>

<llo_original>
// kernel: tpu_custom_call.1
$region0: #{tpu_custom_call.1}
  #allocation0 [shape = 'u32[]', space=smem, size = 0x4, offset = 0x4, fixed_abs, tag = 'smem constant byte address 0x4 - core index']
  #allocation1 [shape = 'u32[144,128]{1,0:T(1,128)}', space=vmem, size = 0x12000, scoped, tag = 'internal scratch']
  %s0 = inlined_call_operand.vmem [shape: f32[2,4,256], index: 0, kind: input, shape index: {}]
  %s1 = inlined_call_operand.vmem [shape: f32[9,256], index: 1, kind: input, shape index: {}]
  %s2 = inlined_call_operand.vmem [shape: f32[256,64], index: 2, kind: input, shape index: {}]
  %s3 = inlined_call_operand.vmem [shape: f32[9,4,4], index: 3, kind: input, shape index: {}]
  %s4 = inlined_call_operand.vmem [shape: f32[9,4,4], index: 4, kind: input, shape index: {}]
  %s5 = inlined_call_operand.vmem [shape: f32[6,4], index: 5, kind: input, shape index: {}]
  %s6 = inlined_call_operand.vmem [shape: f32[4,2], index: 6, kind: input, shape index: {}]
  %s7 = inlined_call_operand.vmem [shape: f32[2,4,1], index: 7, kind: input, shape index: {}]
  %s8 = inlined_call_operand.vmem [shape: f32[5,4,1], index: 8, kind: input, shape index: {}]
  %s9 = inlined_call_operand.hbm [shape: f32[2,4,256], index: 9, kind: output, shape index: {}]
  %s10 = sld [smem:[#allocation0]]
  $region69: #{tpu_custom_call.1} parent=0
    _
  %s12 = ssub.s32 1, %s10
  %s13 = scalar_select 0, %s12, %s10
  $region1: #{tpu_custom_call.1} parent=0
    #allocation2 [shape = 'u8[8192]{0}', space=vmem, size = 0x2000, scoped, tag = 'output window, operand 0']
    #allocation3 [shape = 's32[2]{0}', space=sflag, size = 0x8, scoped, tag = 'scoped memory for tpu_custom_call.1']
    %14 = vsyncpa [#allocation3], 0
    %s15 = scalar_lea.sflag [#allocation3], 1
    %16 = vsyncpa %s15, 0
    loop: start=0, step=1, limit=4
    $region2: #{tpu_custom_call.1} parent=1 // loop_pre_header
      _
    $region3: #{tpu_custom_call.1} parent=1 // loop_header
      %s18 = sphi 0, %s22
      %p19 = scmp.ge.s32.totalorder %s18, 4
      %s28 = sphi 0, %s30
      %s31 = sphi 0, %s28
      %s32 = sphi 0, %s31
      %s48 = sphi 0, %s32
      %s52 = sphi 0, %s52
      %s54 = sphi 0, %s52
      %s55 = sphi 0, %s54
      %s69 = sphi 0, %s55
      %s73 = sphi 0, %s73
      %s75 = sphi 0, %s73
      %s76 = sphi 0, %s75
      %s90 = sphi 0, %s76
      %s94 = sphi 0, %s94
      %s96 = sphi 0, %s94
      %s97 = sphi 0, %s96
      %s111 = sphi 0, %s97
      %s115 = sphi 0, %s115
      %s117 = sphi 0, %s115
      %s118 = sphi 0, %s117
      %s132 = sphi 0, %s118
      %s136 = sphi 0, %s136
      %s138 = sphi 0, %s136
      %s139 = sphi 0, %s138
      %s153 = sphi 0, %s139
      %s157 = sphi 0, %s157
      %s159 = sphi 0, %s157
      %s160 = sphi 0, %s159
      %s174 = sphi 0, %s160
      %s178 = sphi 0, %s178
      %s180 = sphi 0, %s178
      %s181 = sphi 0, %s180
      %s195 = sphi 0, %s181
      %s199 = sphi 0, %s199
      %s201 = sphi 0, %s199
      %s202 = sphi 0, %s201
      %s216 = sphi 0, %s202
      %s222 = sphi 0, %s224
      %s225 = sphi 0, %s222
      %s226 = sphi 0, %s225
      %s242 = sphi 0, %s226
    $region4: #{tpu_custom_call.1} parent=1 // loop_header_branch
      %21 = sbr.rel (%p19) target = $region8
    $region5: #{tpu_custom_call.1} parent=1 // loop_body
      %s23 = ssub.s32 %s18, 1
      %s24 = ssub.s32 %s18, 2
      %s25 = sadd.s32 %s18, 1
      %s26 = ssub.s32 %s18, %s25
      %p27 = scmp.eq.s32.totalorder %s26, 0
      %s29 = sadd.s32 %s28, 1
      %s30 = scalar_select %p27, %s28, %s29
      %p33 = pneg %p27
      %p34 = scmp.eq.s32.totalorder %s18, 1
      %p35 = por %p33, %p34
      %p36 = scmp.ne.s32.totalorder %s28, %s31
      %p37 = scmp.eq.s32.totalorder %s18, 0
      %p38 = por %p36, %p37
      %p39 = scmp.ne.s32.totalorder %s28, %s31
      %p40 = scmp.eq.s32.totalorder %s23, 1
      %p41 = por %p39, %p40
      %p42 = scmp.ne.s32.totalorder %s31, %s32
      %p43 = scmp.eq.s32.totalorder %s23, 0
      %p44 = por %p42, %p43
      %p45 = scmp.ne.s32.totalorder %s31, %s32
      %p46 = scmp.eq.s32.totalorder %s24, 1
      %p47 = por %p45, %p46
      %p49 = scmp.ne.s32.totalorder %s32, %s48
      %p50 = scmp.eq.s32.totalorder %s24, 0
      %p51 = por %p49, %p50
      %s53 = sadd.s32 %s52, 1
      %p56 = scmp.eq.s32.totalorder %s18, 1
      %p57 = scmp.ne.s32.totalorder %s52, %s54
      %p58 = scmp.eq.s32.totalorder %s18, 0
      %p59 = por %p57, %p58
      %p60 = scmp.ne.s32.totalorder %s52, %s54
      %p61 = scmp.eq.s32.totalorder %s23, 1
      %p62 = por %p60, %p61
      %p63 = scmp.ne.s32.totalorder %s54, %s55
      %p64 = scmp.eq.s32.totalorder %s23, 0
      %p65 = por %p63, %p64
      %p66 = scmp.ne.s32.totalorder %s54, %s55
      %p67 = scmp.eq.s32.totalorder %s24, 1
      %p68 = por %p66, %p67
      %p70 = scmp.ne.s32.totalorder %s55, %s69
      %p71 = scmp.eq.s32.totalorder %s24, 0
      %p72 = por %p70, %p71
      %s74 = sadd.s32 %s73, 1
      %p77 = scmp.eq.s32.totalorder %s18, 1
      %p78 = scmp.ne.s32.totalorder %s73, %s75
      %p79 = scmp.eq.s32.totalorder %s18, 0
      %p80 = por %p78, %p79
      %p81 = scmp.ne.s32.totalorder %s73, %s75
      %p82 = scmp.eq.s32.totalorder %s23, 1
      %p83 = por %p81, %p82
      %p84 = scmp.ne.s32.totalorder %s75, %s76
      %p85 = scmp.eq.s32.totalorder %s23, 0
      %p86 = por %p84, %p85
      %p87 = scmp.ne.s32.totalorder %s75, %s76
      %p88 = scmp.eq.s32.totalorder %s24, 1
      %p89 = por %p87, %p88
      %p91 = scmp.ne.s32.totalorder %s76, %s90
      %p92 = scmp.eq.s32.totalorder %s24, 0
      %p93 = por %p91, %p92
      %s95 = sadd.s32 %s94, 1
      %p98 = scmp.eq.s32.totalorder %s18, 1
      %p99 = scmp.ne.s32.totalorder %s94, %s96
      %p100 = scmp.eq.s32.totalorder %s18, 0
      %p101 = por %p99, %p100
      %p102 = scmp.ne.s32.totalorder %s94, %s96
      %p103 = scmp.eq.s32.totalorder %s23, 1
      %p104 = por %p102, %p103
      %p105 = scmp.ne.s32.totalorder %s96, %s97
      %p106 = scmp.eq.s32.totalorder %s23, 0
      %p107 = por %p105, %p106
      %p108 = scmp.ne.s32.totalorder %s96, %s97
      %p109 = scmp.eq.s32.totalorder %s24, 1
      %p110 = por %p108, %p109
      %p112 = scmp.ne.s32.totalorder %s97, %s111
      %p113 = scmp.eq.s32.totalorder %s24, 0
      %p114 = por %p112, %p113
      %s116 = sadd.s32 %s115, 1
      %p119 = scmp.eq.s32.totalorder %s18, 1
      %p120 = scmp.ne.s32.totalorder %s115, %s117
      %p121 = scmp.eq.s32.totalorder %s18, 0
      %p122 = por %p120, %p121
      %p123 = scmp.ne.s32.totalorder %s115, %s117
      %p124 = scmp.eq.s32.totalorder %s23, 1
      %p125 = por %p123, %p124
      %p126 = scmp.ne.s32.totalorder %s117, %s118
      %p127 = scmp.eq.s32.totalorder %s23, 0
      %p128 = por %p126, %p127
      %p129 = scmp.ne.s32.totalorder %s117, %s118
      %p130 = scmp.eq.s32.totalorder %s24, 1
      %p131 = por %p129, %p130
      %p133 = scmp.ne.s32.totalorder %s118, %s132
      %p134 = scmp.eq.s32.totalorder %s24, 0
      %p135 = por %p133, %p134
      %s137 = sadd.s32 %s136, 1
      %p140 = scmp.eq.s32.totalorder %s18, 1
      %p141 = scmp.ne.s32.totalorder %s136, %s138
      %p142 = scmp.eq.s32.totalorder %s18, 0
      %p143 = por %p141, %p142
      %p144 = scmp.ne.s32.totalorder %s136, %s138
      %p145 = scmp.eq.s32.totalorder %s23, 1
      %p146 = por %p144, %p145
      %p147 = scmp.ne.s32.totalorder %s138, %s139
      %p148 = scmp.eq.s32.totalorder %s23, 0
      %p149 = por %p147, %p148
      %p150 = scmp.ne.s32.totalorder %s138, %s139
      %p151 = scmp.eq.s32.totalorder %s24, 1
      %p152 = por %p150, %p151
      %p154 = scmp.ne.s32.totalorder %s139, %s153
      %p155 = scmp.eq.s32.totalorder %s24, 0
      %p156 = por %p154, %p155
      %s158 = sadd.s32 %s157, 1
      %p161 = scmp.eq.s32.totalorder %s18, 1
      %p162 = scmp.ne.s32.totalorder %s157, %s159
      %p163 = scmp.eq.s32.totalorder %s18, 0
      %p164 = por %p162, %p163
      %p165 = scmp.ne.s32.totalorder %s157, %s159
      %p166 = scmp.eq.s32.totalorder %s23, 1
      %p167 = por %p165, %p166
      %p168 = scmp.ne.s32.totalorder %s159, %s160
      %p169 = scmp.eq.s32.totalorder %s23, 0
      %p170 = por %p168, %p169
      %p171 = scmp.ne.s32.totalorder %s159, %s160
      %p172 = scmp.eq.s32.totalorder %s24, 1
      %p173 = por %p171, %p172
      %p175 = scmp.ne.s32.totalorder %s160, %s174
      %p176 = scmp.eq.s32.totalorder %s24, 0
      %p177 = por %p175, %p176
      %s179 = sadd.s32 %s178, 1
      %p182 = scmp.eq.s32.totalorder %s18, 1
      %p183 = scmp.ne.s32.totalorder %s178, %s180
      %p184 = scmp.eq.s32.totalorder %s18, 0
      %p185 = por %p183, %p184
      %p186 = scmp.ne.s32.totalorder %s178, %s180
      %p187 = scmp.eq.s32.totalorder %s23, 1
      %p188 = por %p186, %p187
      %p189 = scmp.ne.s32.totalorder %s180, %s181
      %p190 = scmp.eq.s32.totalorder %s23, 0
      %p191 = por %p189, %p190
      %p192 = scmp.ne.s32.totalorder %s180, %s181
      %p193 = scmp.eq.s32.totalorder %s24, 1
      %p194 = por %p192, %p193
      %p196 = scmp.ne.s32.totalorder %s181, %s195
      %p197 = scmp.eq.s32.totalorder %s24, 0
      %p198 = por %p196, %p197
      %s200 = sadd.s32 %s199, 1
      %p203 = scmp.eq.s32.totalorder %s18, 1
      %p204 = scmp.ne.s32.totalorder %s199, %s201
      %p205 = scmp.eq.s32.totalorder %s18, 0
      %p206 = por %p204, %p205
      %p207 = scmp.ne.s32.totalorder %s199, %s201
      %p208 = scmp.eq.s32.totalorder %s23, 1
      %p209 = por %p207, %p208
      %p210 = scmp.ne.s32.totalorder %s201, %s202
      %p211 = scmp.eq.s32.totalorder %s23, 0
      %p212 = por %p210, %p211
      %p213 = scmp.ne.s32.totalorder %s201, %s202
      %p214 = scmp.eq.s32.totalorder %s24, 1
      %p215 = por %p213, %p214
      %p217 = scmp.ne.s32.totalorder %s202, %s216
      %p218 = scmp.eq.s32.totalorder %s24, 0
      %p219 = por %p217, %p218
      %s220 = ssub.s32 %s18, %s25
      %p221 = scmp.eq.s32.totalorder %s220, 0
      %s223 = sadd.s32 %s222, 1
      %s224 = scalar_select %p221, %s222, %s223
      %p227 = pneg %p221
      %p228 = scmp.eq.s32.totalorder %s18, 1
      %p229 = por %p227, %p228
      %p230 = scmp.ne.s32.totalorder %s222, %s225
      %p231 = scmp.eq.s32.totalorder %s18, 0
      %p232 = por %p230, %p231
      %p233 = scmp.ne.s32.totalorder %s222, %s225
      %p234 = scmp.eq.s32.totalorder %s23, 1
      %p235 = por %p233, %p234
      %p236 = scmp.ne.s32.totalorder %s225, %s226
      %p237 = scmp.eq.s32.totalorder %s23, 0
      %p238 = por %p236, %p237
      %p239 = scmp.ne.s32.totalorder %s225, %s226
      %p240 = scmp.eq.s32.totalorder %s24, 1
      %p241 = por %p239, %p240
      %p243 = scmp.ne.s32.totalorder %s226, %s242
      %p244 = scmp.eq.s32.totalorder %s24, 0
      %p245 = por %p243, %p244
      %p246 = scmp.le.s32.totalorder 1, %s18
      %p247 = scmp.lt.s32.totalorder %s18, 3
      %p248 = pnand %p246, %p247
      %p249 = pneg %p248
      // Predicated region
      $region9: #{tpu_custom_call.1} parent=5 // pred_check
        _
      $region10: #{tpu_custom_call.1} parent=5 // pred_check_branch
        %251 = sbr.rel (%p248) target = $region12
      $region11: #{tpu_custom_call.1} parent=5 // pred_region
        %s252 = ssub.s32 %s18, 1
        // Predicated region
        $region13: #{tpu_custom_call.1} parent=11 // pred_check
          %p253 = pneg %p65
        $region14: #{tpu_custom_call.1} parent=11 // pred_check_branch
          %255 = sbr.rel (%p253) target = $region16
        $region15: #{tpu_custom_call.1} parent=11 // pred_region
          _
        $region16: #{tpu_custom_call.1} parent=11 // pred_fallthru
          _
        // Predicated region
        $region17: #{tpu_custom_call.1} parent=11 // pred_check
          %p256 = pneg %p86
        $region18: #{tpu_custom_call.1} parent=11 // pred_check_branch
          %258 = sbr.rel (%p256) target = $region20
        $region19: #{tpu_custom_call.1} parent=11 // pred_region
          _
        $region20: #{tpu_custom_call.1} parent=11 // pred_fallthru
          _
        // Predicated region
        $region21: #{tpu_custom_call.1} parent=11 // pred_check
          %p259 = pneg %p107
        $region22: #{tpu_custom_call.1} parent=11 // pred_check_branch
          %261 = sbr.rel (%p259) target = $region24
        $region23: #{tpu_custom_call.1} parent=11 // pred_region
          _
        $region24: #{tpu_custom_call.1} parent=11 // pred_fallthru
          _
        // Predicated region
        $region25: #{tpu_custom_call.1} parent=11 // pred_check
          %p262 = pneg %p128
        $region26: #{tpu_custom_call.1} parent=11 // pred_check_branch
          %264 = sbr.rel (%p262) target = $region28
        $region27: #{tpu_custom_call.1} parent=11 // pred_region
          _
        $region28: #{tpu_custom_call.1} parent=11 // pred_fallthru
          _
        // Predicated region
        $region29: #{tpu_custom_call.1} parent=11 // pred_check
          %p265 = pneg %p149
        $region30: #{tpu_custom_call.1} parent=11 // pred_check_branch
          %267 = sbr.rel (%p265) target = $region32
        $region31: #{tpu_custom_call.1} parent=11 // pred_region
          _
        $region32: #{tpu_custom_call.1} parent=11 // pred_fallthru
          _
        // Predicated region
        $region33: #{tpu_custom_call.1} parent=11 // pred_check
          %p268 = pneg %p170
        $region34: #{tpu_custom_call.1} parent=11 // pred_check_branch
          %270 = sbr.rel (%p268) target = $region36
        $region35: #{tpu_custom_call.1} parent=11 // pred_region
          _
        $region36: #{tpu_custom_call.1} parent=11 // pred_fallthru
          _
        // Predicated region
        $region37: #{tpu_custom_call.1} parent=11 // pred_check
          %p271 = pneg %p191
        $region38: #{tpu_custom_call.1} parent=11 // pred_check_branch
          %273 = sbr.rel (%p271) target = $region40
        $region39: #{tpu_custom_call.1} parent=11 // pred_region
          _
        $region40: #{tpu_custom_call.1} parent=11 // pred_fallthru
          _
        // Predicated region
        $region41: #{tpu_custom_call.1} parent=11 // pred_check
          %p274 = pneg %p212
        $region42: #{tpu_custom_call.1} parent=11 // pred_check_branch
          %276 = sbr.rel (%p274) target = $region44
        $region43: #{tpu_custom_call.1} parent=11 // pred_region
          _
        $region44: #{tpu_custom_call.1} parent=11 // pred_fallthru
          _
      $region12: #{tpu_custom_call.1} parent=5 // pred_fallthru
        _
      %p277 = scmp.lt.s32.totalorder %s18, 2
      // Predicated region
      $region45: #{tpu_custom_call.1} parent=5 // pred_check
        %p278 = pneg %p277
      $region46: #{tpu_custom_call.1} parent=5 // pred_check_branch
        %280 = sbr.rel (%p278) target = $region48
      $region47: #{tpu_custom_call.1} parent=5 // pred_region
        // Predicated region
        $region49: #{tpu_custom_call.1} parent=47 // pred_check
          %p281 = pneg %p38
        $region50: #{tpu_custom_call.1} parent=47 // pred_check_branch
          %283 = sbr.rel (%p281) target = $region52
        $region51: #{tpu_custom_call.1} parent=47 // pred_region
          %p284 = scmp.lt.s32.totalorder %s18, 1
          %s285 = scalar_select %p284, %s18, 1
          %s286 = smul.addr %s285, 2
          %s287 = smul.addr %s286, 4
          %s288 = scalar_lea.vmem %s0, %s287
        $region52: #{tpu_custom_call.1} parent=47 // pred_fallthru
          _
      $region48: #{tpu_custom_call.1} parent=5 // pred_fallthru
        _
      %p289 = scmp.le.s32.totalorder 1, %s18
      %p290 = scmp.lt.s32.totalorder %s18, 3
      %p291 = pnand %p289, %p290
      %p292 = pneg %p291
      // Predicated region
      $region53: #{tpu_custom_call.1} parent=5 // pred_check
        _
      $region54: #{tpu_custom_call.1} parent=5 // pred_check_branch
        %294 = sbr.rel (%p291) target = $region56
      $region55: #{tpu_custom_call.1} parent=5 // pred_region
        %s295 = ssub.s32 %s18, 1
        %p296 = scmp.lt.s32.totalorder %s23, 1
        %s297 = scalar_select %p296, %s23, 1
        %s298 = smul.addr %s297, 2
        %s299 = smul.addr %s298, 4
        %s300 = scalar_lea.vmem %s0, %s299
        %p301 = pneg %p44
        %p302 = pneg %p41
        %p303 = pneg %p65
        %p304 = pneg %p62
        %p305 = pneg %p86
        %p306 = pneg %p83
        %p307 = pneg %p107
        %p308 = pneg %p104
        %p309 = pneg %p128
        %p310 = pneg %p125
        %p311 = pneg %p149
        %p312 = pneg %p146
        %p313 = pneg %p170
        %p314 = pneg %p167
        %p315 = pneg %p191
        %p316 = pneg %p188
        %p317 = pneg %p212
        %p318 = pneg %p209
        %p319 = pneg %p238
        %p320 = pneg %p235
        %s321 = sand.u32 %s225, 1
        %s322 = scalar_lea.sflag [#allocation3], %s321
        %s323 = sand.u32 %s225, 1
        %s324 = smul.addr %s323, 8
        %s325 = scalar_lea.vmem [#allocation2], %s324
        %p326 = scmp.lt.s32.totalorder %s23, 1
        %s327 = scalar_select %p326, %s23, 1
        %s328 = smul.addr %s327, 2
        %s329 = smul.addr %s328, 4
        %s330 = scalar_lea.vmem %s0, %s329
        %v332 = vld [vmem:[%s330] sm:$0xff]
        %v333 = vld [vmem:[%s1] sm:$0xff]
        %v334 = vld [vmem:[%s1 + $0x8] sm:$0xff]
        %v335 = vld [vmem:[%s1 + $0x10] sm:$0x1]
        %v336 = vld [vmem:[%s1 + $0x18] sm:$0x1]
        %v337 = vld [vmem:[%s7] sm:$0xf]
        %339 = vset.pattern.permute.xlu0 0
        %340 = vperm.xlu0 %339, %v337
        %v341 = vpop.permute.xlu0 %340
        %v344 = vcombine.high %v332, %v332
        %v346 = vmul.f32 %v341, %v332
        %v347 = vmul.f32 %v341, %v344
        %s348 = scalar_lea.vmem %s7, 4
        %v349 = vld [vmem:[%s348] sm:$0xf]
        %351 = vset.pattern.permute.xlu0 0
        %352 = vperm.xlu0 %351, %v349
        %v353 = vpop.permute.xlu0 %352
        %v355 = vadd.f32 %v346, %v353
        %v356 = vadd.f32 %v347, %v353
        %357 = vrot.lane.b32.xlu0 %v355, 17
        %v358 = vpop.permute.xlu0 %357
        %359 = vrot.lane.b32.xlu0 %v356, 17
        %v360 = vpop.permute.xlu0 %359
        %v361 = vlaneseq
        %v362 = vand.u32 %v361, 127
        %vm363 = vcmp.lt.s32.totalorder %v362, 17
        %v364 = vsel %vm363, %v358, %v360
        %v365 = vsel %vm363, %v360, %v358
        %v366 = vlaneseq
        %v367 = vshrl.u32 %v366, 7
        %v368 = vsub.s32 0, %v367
        %v369 = vrot.slane %v333, %v368
        %v370 = vlaneseq
        %v371 = vshrl.u32 %v370, 7
        %v372 = vsub.s32 0, %v371
        %v373 = vrot.slane %v334, %v372
        %v374 = vmul.f32 %v369, %v365
        %v375 = vmul.f32 %v373, %v364
        %v376 = vld [vmem:[%s3] sm:$0xf]
        %377 = vrot.lane.b32.xlu0 %v355, 16
        %v378 = vpop.permute.xlu0 %377
        %379 = vrot.lane.b32.xlu0 %v356, 16
        %v380 = vpop.permute.xlu0 %379
        %vm381 = vcmp.lt.s32.totalorder %v362, 16
        %v382 = vsel %vm381, %v378, %v380
        %v383 = vsel %vm381, %v380, %v378
        %v384 = vlaneseq
        %v385 = vshrl.u32 %v384, 7
        %v386 = vsub.s32 1, %v385
        %v387 = vrot.slane %v333, %v386
        %v388 = vlaneseq
        %v389 = vshrl.u32 %v388, 7
        %v390 = vsub.s32 1, %v389
        %v391 = vrot.slane %v334, %v390
        %v392 = vmul.f32 %v387, %v383
        %v393 = vmul.f32 %v391, %v382
        %s394 = scalar_lea.vmem %s3, 4
        %v395 = vld [vmem:[%s394] sm:$0xf]
        %vm396 = vcmask 31744
        %v398 = vsel %vm396, %v395, 0
        %vm400 = vcmask 1043456
        %v402 = vsel %vm400, %v392, 0
        %v405 = vsel %vm400, %v393, 0
        %407 = vmatprep.subr.mxu0 %v405
        %408 = vmatpush1.msra.mxu0 %v402
        %409 = vmatprep.subr.mxu0 0.0
        %410 = vmatpush1.msra.mxu0 0.0
        %411 = vmatprep.subr.mxu0 0.0
        %412 = vmatpush1.msra.mxu0 0.0
        %413 = vmatprep.subr.mxu0 0.0
        %414 = vmatpush1.msra.mxu0 0.0
        %415 = vmatprep.subr.mxu0 0.0
        %416 = vmatpush1.msra.mxu0 0.0
        %417 = vmatprep.subr.mxu0 0.0
        %418 = vmatpush1.msra.mxu0 0.0
        %419 = vmatprep.subr.mxu0 0.0
        %420 = vmatpush1.msra.mxu0 0.0
        %421 = vmatprep.subr.mxu0 0.0
        %422 = vmatpush1.msra.mxu0 0.0
        %423 = vmatprep.subr.mxu0 0.0
        %424 = vmatpush1.msra.mxu0 0.0
        %425 = vmatprep.subr.mxu0 0.0
        %426 = vmatpush1.msra.mxu0 0.0
        %427 = vmatprep.subr.mxu0 0.0
        %428 = vmatpush1.msra.mxu0 0.0
        %429 = vmatprep.subr.mxu0 0.0
        %430 = vmatpush1.msra.mxu0 0.0
        %431 = vmatprep.subr.mxu0 0.0
        %432 = vmatpush1.msra.mxu0 0.0
        %433 = vmatprep.subr.mxu0 0.0
        %434 = vmatpush1.msra.mxu0 0.0
        %435 = vmatprep.subr.mxu0 0.0
        %436 = vmatpush1.msra.mxu0 0.0
        %437 = vmatprep.subr.mxu0 0.0
        %438 = vmatpush1.msra.mxu0 0.0
        %439 = vmatprep.subr.mxu0 0.0
        %440 = vmatpush1.msra.mxu0 0.0
        %441 = vmatprep.subr.mxu0 0.0
        %442 = vmatpush1.msra.mxu0 0.0
        %443 = vmatprep.subr.mxu0 0.0
        %444 = vmatpush1.msra.mxu0 0.0
        %445 = vmatprep.subr.mxu0 0.0
        %446 = vmatpush1.msra.mxu0 0.0
        %447 = vmatprep.subr.mxu0 0.0
        %448 = vmatpush1.msra.mxu0 0.0
        %449 = vmatprep.subr.mxu0 0.0
        %450 = vmatpush1.msra.mxu0 0.0
        %451 = vmatprep.subr.mxu0 0.0
        %452 = vmatpush1.msra.mxu0 0.0
        %453 = vmatprep.subr.mxu0 0.0
        %454 = vmatpush1.msra.mxu0 0.0
        %455 = vmatprep.subr.mxu0 0.0
        %456 = vmatpush1.msra.mxu0 0.0
        %457 = vmatprep.subr.mxu0 0.0
        %458 = vmatpush1.msra.mxu0 0.0
        %459 = vmatprep.subr.mxu0 0.0
        %460 = vmatpush1.msra.mxu0 0.0
        %461 = vmatprep.subr.mxu0 0.0
        %462 = vmatpush1.msra.mxu0 0.0
        %463 = vmatprep.subr.mxu0 0.0
        %464 = vmatpush1.msra.mxu0 0.0
        %465 = vmatprep.subr.mxu0 0.0
        %466 = vmatpush1.msra.mxu0 0.0
        %467 = vmatprep.subr.mxu0 0.0
        %468 = vmatpush1.msra.mxu0 0.0
        %469 = vmatprep.subr.mxu0 0.0
        %470 = vmatpush1.msra.mxu0 0.0
        %471 = vmatprep.mubr.f32.mxu0 0.0
        %472 = vmatmul.mubr.f32.gmra.mrb[0].mxu0 %v398
        %v473 = vpop.f32.mrb[0].mxu0
        %v474 = vadd.f32 0.0, %v473
        %v475 = vpop.f32.mrb[0].mxu0
        %v476 = vadd.f32 0.0, %v475
        %477 = vdwg.mxu0
        %v479 = vsel %vm396, %v376, 0
        %v482 = vsel %vm400, %v374, 0
        %v485 = vsel %vm400, %v375, 0
        %487 = vmatprep.subr.mxu0 %v485
        %488 = vmatpush1.msra.mxu0 %v482
        %489 = vmatprep.subr.mxu0 0.0
        %490 = vmatpush1.msra.mxu0 0.0
        %491 = vmatprep.subr.mxu0 0.0
        %492 = vmatpush1.msra.mxu0 0.0
        %493 = vmatprep.subr.mxu0 0.0
        %494 = vmatpush1.msra.mxu0 0.0
        %495 = vmatprep.subr.mxu0 0.0
        %496 = vmatpush1.msra.mxu0 0.0
        %497 = vmatprep.subr.mxu0 0.0
        %498 = vmatpush1.msra.mxu0 0.0
        %499 = vmatprep.subr.mxu0 0.0
        %500 = vmatpush1.msra.mxu0 0.0
        %501 = vmatprep.subr.mxu0 0.0
        %502 = vmatpush1.msra.mxu0 0.0
        %503 = vmatprep.subr.mxu0 0.0
        %504 = vmatpush1.msra.mxu0 0.0
        %505 = vmatprep.subr.mxu0 0.0
        %506 = vmatpush1.msra.mxu0 0.0
        %507 = vmatprep.subr.mxu0 0.0
        %508 = vmatpush1.msra.mxu0 0.0
        %509 = vmatprep.subr.mxu0 0.0
        %510 = vmatpush1.msra.mxu0 0.0
        %511 = vmatprep.subr.mxu0 0.0
        %512 = vmatpush1.msra.mxu0 0.0
        %513 = vmatprep.subr.mxu0 0.0
        %514 = vmatpush1.msra.mxu0 0.0
        %515 = vmatprep.subr.mxu0 0.0
        %516 = vmatpush1.msra.mxu0 0.0
        %517 = vmatprep.subr.mxu0 0.0
        %518 = vmatpush1.msra.mxu0 0.0
        %519 = vmatprep.subr.mxu0 0.0
        %520 = vmatpush1.msra.mxu0 0.0
        %521 = vmatprep.subr.mxu0 0.0
        %522 = vmatpush1.msra.mxu0 0.0
        %523 = vmatprep.subr.mxu0 0.0
        %524 = vmatpush1.msra.mxu0 0.0
        %525 = vmatprep.subr.mxu0 0.0
        %526 = vmatpush1.msra.mxu0 0.0
        %527 = vmatprep.subr.mxu0 0.0
        %528 = vmatpush1.msra.mxu0 0.0
        %529 = vmatprep.subr.mxu0 0.0
        %530 = vmatpush1.msra.mxu0 0.0
        %531 = vmatprep.subr.mxu0 0.0
        %532 = vmatpush1.msra.mxu0 0.0
        %533 = vmatprep.subr.mxu0 0.0
        %534 = vmatpush1.msra.mxu0 0.0
        %535 = vmatprep.subr.mxu0 0.0
        %536 = vmatpush1.msra.mxu0 0.0
        %537 = vmatprep.subr.mxu0 0.0
        %538 = vmatpush1.msra.mxu0 0.0
        %539 = vmatprep.subr.mxu0 0.0
        %540 = vmatpush1.msra.mxu0 0.0
        %541 = vmatprep.subr.mxu0 0.0
        %542 = vmatpush1.msra.mxu0 0.0
        %543 = vmatprep.subr.mxu0 0.0
        %544 = vmatpush1.msra.mxu0 0.0
        %545 = vmatprep.subr.mxu0 0.0
        %546 = vmatpush1.msra.mxu0 0.0
        %547 = vmatprep.subr.mxu0 0.0
        %548 = vmatpush1.msra.mxu0 0.0
        %549 = vmatprep.subr.mxu0 0.0
        %550 = vmatpush1.msra.mxu0 0.0
        %551 = vmatprep.mubr.f32.mxu0 0.0
        %552 = vmatmul.mubr.f32.gmra.mrb[0].mxu0 %v479
        %v553 = vpop.f32.mrb[0].mxu0
        %v554 = vadd.f32 %v474, %v553
        %v555 = vpop.f32.mrb[0].mxu0
        %v556 = vadd.f32 %v476, %v555
        %557 = vdwg.mxu0
        %558 = vrot.lane.b32.xlu0 %v355, 15
        %v559 = vpop.permute.xlu0 %558
        %560 = vrot.lane.b32.xlu0 %v356, 15
        %v561 = vpop.permute.xlu0 %560
        %vm562 = vcmp.lt.s32.totalorder %v362, 15
        %v563 = vsel %vm562, %v559, %v561
        %v564 = vsel %vm562, %v561, %v559
        %v565 = vlaneseq
        %v566 = vshrl.u32 %v565, 7
        %v567 = vsub.s32 2, %v566
        %v568 = vrot.slane %v333, %v567
        %v569 = vlaneseq
        %v570 = vshrl.u32 %v569, 7
        %v571 = vsub.s32 2, %v570
        %v572 = vrot.slane %v334, %v571
        %v573 = vmul.f32 %v568, %v564
        %v574 = vmul.f32 %v572, %v563
        %s575 = scalar_lea.vmem %s3, 8
        %v576 = vld [vmem:[%s575] sm:$0xf]
        %v578 = vsel %vm396, %v576, 0
        %v581 = vsel %vm400, %v573, 0
        %v584 = vsel %vm400, %v574, 0
        %586 = vmatprep.subr.mxu0 %v584
        %587 = vmatpush1.msra.mxu0 %v581
        %588 = vmatprep.subr.mxu0 0.0
        %589 = vmatpush1.msra.mxu0 0.0
        %590 = vmatprep.subr.mxu0 0.0
        %591 = vmatpush1.msra.mxu0 0.0
        %592 = vmatprep.subr.mxu0 0.0
        %593 = vmatpush1.msra.mxu0 0.0
        %594 = vmatprep.subr.mxu0 0.0
        %595 = vmatpush1.msra.mxu0 0.0
        %596 = vmatprep.subr.mxu0 0.0
        %597 = vmatpush1.msra.mxu0 0.0
        %598 = vmatprep.subr.mxu0 0.0
        %599 = vmatpush1.msra.mxu0 0.0
        %600 = vmatprep.subr.mxu0 0.0
        %601 = vmatpush1.msra.mxu0 0.0
        %602 = vmatprep.subr.mxu0 0.0
        %603 = vmatpush1.msra.mxu0 0.0
        %604 = vmatprep.subr.mxu0 0.0
        %605 = vmatpush1.msra.mxu0 0.0
        %606 = vmatprep.subr.mxu0 0.0
        %607 = vmatpush1.msra.mxu0 0.0
        %608 = vmatprep.subr.mxu0 0.0
        %609 = vmatpush1.msra.mxu0 0.0
        %610 = vmatprep.subr.mxu0 0.0
        %611 = vmatpush1.msra.mxu0 0.0
        %612 = vmatprep.subr.mxu0 0.0
        %613 = vmatpush1.msra.mxu0 0.0
        %614 = vmatprep.subr.mxu0 0.0
        %615 = vmatpush1.msra.mxu0 0.0
        %616 = vmatprep.subr.mxu0 0.0
        %617 = vmatpush1.msra.mxu0 0.0
        %618 = vmatprep.subr.mxu0 0.0
        %619 = vmatpush1.msra.mxu0 0.0
        %620 = vmatprep.subr.mxu0 0.0
        %621 = vmatpush1.msra.mxu0 0.0
        %622 = vmatprep.subr.mxu0 0.0
        %623 = vmatpush1.msra.mxu0 0.0
        %624 = vmatprep.subr.mxu0 0.0
        %625 = vmatpush1.msra.mxu0 0.0
        %626 = vmatprep.subr.mxu0 0.0
        %627 = vmatpush1.msra.mxu0 0.0
        %628 = vmatprep.subr.mxu0 0.0
        %629 = vmatpush1.msra.mxu0 0.0
        %630 = vmatprep.subr.mxu0 0.0
        %631 = vmatpush1.msra.mxu0 0.0
        %632 = vmatprep.subr.mxu0 0.0
        %633 = vmatpush1.msra.mxu0 0.0
        %634 = vmatprep.subr.mxu0 0.0
        %635 = vmatpush1.msra.mxu0 0.0
        %636 = vmatprep.subr.mxu0 0.0
        %637 = vmatpush1.msra.mxu0 0.0
        %638 = vmatprep.subr.mxu0 0.0
        %639 = vmatpush1.msra.mxu0 0.0
        %640 = vmatprep.subr.mxu0 0.0
        %641 = vmatpush1.msra.mxu0 0.0
        %642 = vmatprep.subr.mxu0 0.0
        %643 = vmatpush1.msra.mxu0 0.0
        %644 = vmatprep.subr.mxu0 0.0
        %645 = vmatpush1.msra.mxu0 0.0
        %646 = vmatprep.subr.mxu0 0.0
        %647 = vmatpush1.msra.mxu0 0.0
        %648 = vmatprep.subr.mxu0 0.0
        %649 = vmatpush1.msra.mxu0 0.0
        %650 = vmatprep.mubr.f32.mxu0 0.0
        %651 = vmatmul.mubr.f32.gmra.mrb[0].mxu0 %v578
        %v652 = vpop.f32.mrb[0].mxu0
        %v653 = vadd.f32 0.0, %v652
        %v654 = vpop.f32.mrb[0].mxu0
        %v655 = vadd.f32 0.0, %v654
        %656 = vdwg.mxu0
        %v657 = vadd.f32 %v554, %v653
        %v658 = vadd.f32 %v556, %v655
        %659 = vrot.lane.b32.xlu0 %v355, 1
        %v660 = vpop.permute.xlu0 %659
        %661 = vrot.lane.b32.xlu0 %v356, 1
        %v662 = vpop.permute.xlu0 %661
        %vm663 = vcmp.lt.s32.totalorder %v362, 1
        %v664 = vsel %vm663, %v660, %v662
        %v665 = vsel %vm663, %v662, %v660
        %v666 = vlaneseq
        %v667 = vshrl.u32 %v666, 7
        %v668 = vsub.s32 3, %v667
        %v669 = vrot.slane %v333, %v668
        %v670 = vlaneseq
        %v671 = vshrl.u32 %v670, 7
        %v672 = vsub.s32 3, %v671
        %v673 = vrot.slane %v334, %v672
        %v674 = vmul.f32 %v669, %v665
        %v675 = vmul.f32 %v673, %v664
        %s676 = scalar_lea.vmem %s3, 12
        %v677 = vld [vmem:[%s676] sm:$0xf]
        %v679 = vsel %vm396, %v677, 0
        %v682 = vsel %vm400, %v674, 0
        %v685 = vsel %vm400, %v675, 0
        %687 = vmatprep.subr.mxu0 %v685
        %688 = vmatpush1.msra.mxu0 %v682
        %689 = vmatprep.subr.mxu0 0.0
        %690 = vmatpush1.msra.mxu0 0.0
        %691 = vmatprep.subr.mxu0 0.0
        %692 = vmatpush1.msra.mxu0 0.0
        %693 = vmatprep.subr.mxu0 0.0
        %694 = vmatpush1.msra.mxu0 0.0
        %695 = vmatprep.subr.mxu0 0.0
        %696 = vmatpush1.msra.mxu0 0.0
        %697 = vmatprep.subr.mxu0 0.0
        %698 = vmatpush1.msra.mxu0 0.0
        %699 = vmatprep.subr.mxu0 0.0
        %700 = vmatpush1.msra.mxu0 0.0
        %701 = vmatprep.subr.mxu0 0.0
        %702 = vmatpush1.msra.mxu0 0.0
        %703 = vmatprep.subr.mxu0 0.0
        %704 = vmatpush1.msra.mxu0 0.0
        %705 = vmatprep.subr.mxu0 0.0
        %706 = vmatpush1.msra.mxu0 0.0
        %707 = vmatprep.subr.mxu0 0.0
        %708 = vmatpush1.msra.mxu0 0.0
        %709 = vmatprep.subr.mxu0 0.0
        %710 = vmatpush1.msra.mxu0 0.0
        %711 = vmatprep.subr.mxu0 0.0
        %712 = vmatpush1.msra.mxu0 0.0
        %713 = vmatprep.subr.mxu0 0.0
        %714 = vmatpush1.msra.mxu0 0.0
        %715 = vmatprep.subr.mxu0 0.0
        %716 = vmatpush1.msra.mxu0 0.0
        %717 = vmatprep.subr.mxu0 0.0
        %718 = vmatpush1.msra.mxu0 0.0
        %719 = vmatprep.subr.mxu0 0.0
        %720 = vmatpush1.msra.mxu0 0.0
        %721 = vmatprep.subr.mxu0 0.0
        %722 = vmatpush1.msra.mxu0 0.0
        %723 = vmatprep.subr.mxu0 0.0
        %724 = vmatpush1.msra.mxu0 0.0
        %725 = vmatprep.subr.mxu0 0.0
        %726 = vmatpush1.msra.mxu0 0.0
        %727 = vmatprep.subr.mxu0 0.0
        %728 = vmatpush1.msra.mxu0 0.0
        %729 = vmatprep.subr.mxu0 0.0
        %730 = vmatpush1.msra.mxu0 0.0
        %731 = vmatprep.subr.mxu0 0.0
        %732 = vmatpush1.msra.mxu0 0.0
        %733 = vmatprep.subr.mxu0 0.0
        %734 = vmatpush1.msra.mxu0 0.0
        %735 = vmatprep.subr.mxu0 0.0
        %736 = vmatpush1.msra.mxu0 0.0
        %737 = vmatprep.subr.mxu0 0.0
        %738 = vmatpush1.msra.mxu0 0.0
        %739 = vmatprep.subr.mxu0 0.0
        %740 = vmatpush1.msra.mxu0 0.0
        %741 = vmatprep.subr.mxu0 0.0
        %742 = vmatpush1.msra.mxu0 0.0
        %743 = vmatprep.subr.mxu0 0.0
        %744 = vmatpush1.msra.mxu0 0.0
        %745 = vmatprep.subr.mxu0 0.0
        %746 = vmatpush1.msra.mxu0 0.0
        %747 = vmatprep.subr.mxu0 0.0
        %748 = vmatpush1.msra.mxu0 0.0
        %749 = vmatprep.subr.mxu0 0.0
        %750 = vmatpush1.msra.mxu0 0.0
        %751 = vmatprep.mubr.f32.mxu0 0.0
        %752 = vmatmul.mubr.f32.gmra.mrb[0].mxu0 %v679
        %v753 = vpop.f32.mrb[0].mxu0
        %v754 = vadd.f32 0.0, %v753
        %v755 = vpop.f32.mrb[0].mxu0
        %v756 = vadd.f32 0.0, %v755
        %757 = vdwg.mxu0
        %v758 = vadd.f32 %v657, %v754
        %v759 = vadd.f32 %v658, %v756
        %s760 = scalar_lea.vmem %s3, 16
        %v761 = vld [vmem:[%s760] sm:$0xf]
        %v763 = vsel %vm396, %v761, 0
        %v766 = vsel %vm400, %v355, 0
        %v769 = vsel %vm400, %v356, 0
        %771 = vmatprep.subr.mxu0 %v769
        %772 = vmatpush1.msra.mxu0 %v766
        %773 = vmatprep.subr.mxu0 0.0
        %774 = vmatpush1.msra.mxu0 0.0
        %775 = vmatprep.subr.mxu0 0.0
        %776 = vmatpush1.msra.mxu0 0.0
        %777 = vmatprep.subr.mxu0 0.0
        %778 = vmatpush1.msra.mxu0 0.0
        %779 = vmatprep.subr.mxu0 0.0
        %780 = vmatpush1.msra.mxu0 0.0
        %781 = vmatprep.subr.mxu0 0.0
        %782 = vmatpush1.msra.mxu0 0.0
        %783 = vmatprep.subr.mxu0 0.0
        %784 = vmatpush1.msra.mxu0 0.0
        %785 = vmatprep.subr.mxu0 0.0
        %786 = vmatpush1.msra.mxu0 0.0
        %787 = vmatprep.subr.mxu0 0.0
        %788 = vmatpush1.msra.mxu0 0.0
        %789 = vmatprep.subr.mxu0 0.0
        %790 = vmatpush1.msra.mxu0 0.0
        %791 = vmatprep.subr.mxu0 0.0
        %792 = vmatpush1.msra.mxu0 0.0
        %793 = vmatprep.subr.mxu0 0.0
        %794 = vmatpush1.msra.mxu0 0.0
        %795 = vmatprep.subr.mxu0 0.0
        %796 = vmatpush1.msra.mxu0 0.0
        %797 = vmatprep.subr.mxu0 0.0
        %798 = vmatpush1.msra.mxu0 0.0
        %799 = vmatprep.subr.mxu0 0.0
        %800 = vmatpush1.msra.mxu0 0.0
        %801 = vmatprep.subr.mxu0 0.0
        %802 = vmatpush1.msra.mxu0 0.0
        %803 = vmatprep.subr.mxu0 0.0
        %804 = vmatpush1.msra.mxu0 0.0
        %805 = vmatprep.subr.mxu0 0.0
        %806 = vmatpush1.msra.mxu0 0.0
        %807 = vmatprep.subr.mxu0 0.0
        %808 = vmatpush1.msra.mxu0 0.0
        %809 = vmatprep.subr.mxu0 0.0
        %810 = vmatpush1.msra.mxu0 0.0
        %811 = vmatprep.subr.mxu0 0.0
        %812 = vmatpush1.msra.mxu0 0.0
        %813 = vmatprep.subr.mxu0 0.0
        %814 = vmatpush1.msra.mxu0 0.0
        %815 = vmatprep.subr.mxu0 0.0
        %816 = vmatpush1.msra.mxu0 0.0
        %817 = vmatprep.subr.mxu0 0.0
        %818 = vmatpush1.msra.mxu0 0.0
        %819 = vmatprep.subr.mxu0 0.0
        %820 = vmatpush1.msra.mxu0 0.0
        %821 = vmatprep.subr.mxu0 0.0
        %822 = vmatpush1.msra.mxu0 0.0
        %823 = vmatprep.subr.mxu0 0.0
        %824 = vmatpush1.msra.mxu0 0.0
        %825 = vmatprep.subr.mxu0 0.0
        %826 = vmatpush1.msra.mxu0 0.0
        %827 = vmatprep.subr.mxu0 0.0
        %828 = vmatpush1.msra.mxu0 0.0
        %829 = vmatprep.subr.mxu0 0.0
        %830 = vmatpush1.msra.mxu0 0.0
        %831 = vmatprep.subr.mxu0 0.0
        %832 = vmatpush1.msra.mxu0 0.0
        %833 = vmatprep.subr.mxu0 0.0
        %834 = vmatpush1.msra.mxu0 0.0
        %835 = vmatprep.mubr.f32.mxu0 0.0
        %836 = vmatmul.mubr.f32.gmra.mrb[0].mxu0 %v763
        %v837 = vpop.f32.mrb[0].mxu0
        %v838 = vadd.f32 0.0, %v837
        %v839 = vpop.f32.mrb[0].mxu0
        %v840 = vadd.f32 0.0, %v839
        %841 = vdwg.mxu0
        %v842 = vadd.f32 %v758, %v838
        %v843 = vadd.f32 %v759, %v840
        %844 = vrot.lane.b32.xlu0 %v355, 127
        %v845 = vpop.permute.xlu0 %844
        %846 = vrot.lane.b32.xlu0 %v356, 127
        %v847 = vpop.permute.xlu0 %846
        %vm848 = vcmp.lt.s32.totalorder %v362, 127
        %v849 = vsel %vm848, %v845, %v847
        %v850 = vsel %vm848, %v847, %v845
        %v851 = vlaneseq
        %v852 = vshrl.u32 %v851, 7
        %v853 = vsub.s32 5, %v852
        %v854 = vrot.slane %v333, %v853
        %v855 = vlaneseq
        %v856 = vshrl.u32 %v855, 7
        %v857 = vsub.s32 5, %v856
        %v858 = vrot.slane %v334, %v857
        %v859 = vmul.f32 %v854, %v849
        %v860 = vmul.f32 %v858, %v850
        %s861 = scalar_lea.vmem %s3, 20
        %v862 = vld [vmem:[%s861] sm:$0xf]
        %v864 = vsel %vm396, %v862, 0
        %v867 = vsel %vm400, %v859, 0
        %v870 = vsel %vm400, %v860, 0
        %872 = vmatprep.subr.mxu0 %v870
        %873 = vmatpush1.msra.mxu0 %v867
        %874 = vmatprep.subr.mxu0 0.0
        %875 = vmatpush1.msra.mxu0 0.0
        %876 = vmatprep.subr.mxu0 0.0
        %877 = vmatpush1.msra.mxu0 0.0
        %878 = vmatprep.subr.mxu0 0.0
        %879 = vmatpush1.msra.mxu0 0.0
        %880 = vmatprep.subr.mxu0 0.0
        %881 = vmatpush1.msra.mxu0 0.0
        %882 = vmatprep.subr.mxu0 0.0
        %883 = vmatpush1.msra.mxu0 0.0
        %884 = vmatprep.subr.mxu0 0.0
        %885 = vmatpush1.msra.mxu0 0.0
        %886 = vmatprep.subr.mxu0 0.0
        %887 = vmatpush1.msra.mxu0 0.0
        %888 = vmatprep.subr.mxu0 0.0
        %889 = vmatpush1.msra.mxu0 0.0
        %890 = vmatprep.subr.mxu0 0.0
        %891 = vmatpush1.msra.mxu0 0.0
        %892 = vmatprep.subr.mxu0 0.0
        %893 = vmatpush1.msra.mxu0 0.0
        %894 = vmatprep.subr.mxu0 0.0
        %895 = vmatpush1.msra.mxu0 0.0
        %896 = vmatprep.subr.mxu0 0.0
        %897 = vmatpush1.msra.mxu0 0.0
        %898 = vmatprep.subr.mxu0 0.0
        %899 = vmatpush1.msra.mxu0 0.0
        %900 = vmatprep.subr.mxu0 0.0
        %901 = vmatpush1.msra.mxu0 0.0
        %902 = vmatprep.subr.mxu0 0.0
        %903 = vmatpush1.msra.mxu0 0.0
        %904 = vmatprep.subr.mxu0 0.0
        %905 = vmatpush1.msra.mxu0 0.0
        %906 = vmatprep.subr.mxu0 0.0
        %907 = vmatpush1.msra.mxu0 0.0
        %908 = vmatprep.subr.mxu0 0.0
        %909 = vmatpush1.msra.mxu0 0.0
        %910 = vmatprep.subr.mxu0 0.0
        %911 = vmatpush1.msra.mxu0 0.0
        %912 = vmatprep.subr.mxu0 0.0
        %913 = vmatpush1.msra.mxu0 0.0
        %914 = vmatprep.subr.mxu0 0.0
        %915 = vmatpush1.msra.mxu0 0.0
        %916 = vmatprep.subr.mxu0 0.0
        %917 = vmatpush1.msra.mxu0 0.0
        %918 = vmatprep.subr.mxu0 0.0
        %919 = vmatpush1.msra.mxu0 0.0
        %920 = vmatprep.subr.mxu0 0.0
        %921 = vmatpush1.msra.mxu0 0.0
        %922 = vmatprep.subr.mxu0 0.0
        %923 = vmatpush1.msra.mxu0 0.0
        %924 = vmatprep.subr.mxu0 0.0
        %925 = vmatpush1.msra.mxu0 0.0
        %926 = vmatprep.subr.mxu0 0.0
        %927 = vmatpush1.msra.mxu0 0.0
        %928 = vmatprep.subr.mxu0 0.0
        %929 = vmatpush1.msra.mxu0 0.0
        %930 = vmatprep.subr.mxu0 0.0
        %931 = vmatpush1.msra.mxu0 0.0
        %932 = vmatprep.subr.mxu0 0.0
        %933 = vmatpush1.msra.mxu0 0.0
        %934 = vmatprep.subr.mxu0 0.0
        %935 = vmatpush1.msra.mxu0 0.0
        %936 = vmatprep.mubr.f32.mxu0 0.0
        %937 = vmatmul.mubr.f32.gmra.mrb[0].mxu0 %v864
        %v938 = vpop.f32.mrb[0].mxu0
        %v939 = vadd.f32 0.0, %v938
        %v940 = vpop.f32.mrb[0].mxu0
        %v941 = vadd.f32 0.0, %v940
        %942 = vdwg.mxu0
        %v943 = vadd.f32 %v842, %v939
        %v944 = vadd.f32 %v843, %v941
        %945 = vrot.lane.b32.xlu0 %v355, 113
        %v946 = vpop.permute.xlu0 %945
        %947 = vrot.lane.b32.xlu0 %v356, 113
        %v948 = vpop.permute.xlu0 %947
        %vm949 = vcmp.lt.s32.totalorder %v362, 113
        %v950 = vsel %vm949, %v946, %v948
        %v951 = vsel %vm949, %v948, %v946
        %v952 = vlaneseq
        %v953 = vshrl.u32 %v952, 7
        %v954 = vsub.s32 6, %v953
        %v955 = vrot.slane %v333, %v954
        %v956 = vlaneseq
        %v957 = vshrl.u32 %v956, 7
        %v958 = vsub.s32 6, %v957
        %v959 = vrot.slane %v334, %v958
        %v960 = vmul.f32 %v955, %v950
        %v961 = vmul.f32 %v959, %v951
        %s962 = scalar_lea.vmem %s3, 24
        %v963 = vld [vmem:[%s962] sm:$0xf]
        %v965 = vsel %vm396, %v963, 0
        %v968 = vsel %vm400, %v960, 0
        %v971 = vsel %vm400, %v961, 0
        %973 = vmatprep.subr.mxu0 %v971
        %974 = vmatpush1.msra.mxu0 %v968
        %975 = vmatprep.subr.mxu0 0.0
        %976 = vmatpush1.msra.mxu0 0.0
        %977 = vmatprep.subr.mxu0 0.0
        %978 = vmatpush1.msra.mxu0 0.0
        %979 = vmatprep.subr.mxu0 0.0
        %980 = vmatpush1.msra.mxu0 0.0
        %981 = vmatprep.subr.mxu0 0.0
        %982 = vmatpush1.msra.mxu0 0.0
        %983 = vmatprep.subr.mxu0 0.0
        %984 = vmatpush1.msra.mxu0 0.0
        %985 = vmatprep.subr.mxu0 0.0
        %986 = vmatpush1.msra.mxu0 0.0
        %987 = vmatprep.subr.mxu0 0.0
        %988 = vmatpush1.msra.mxu0 0.0
        %989 = vmatprep.subr.mxu0 0.0
        %990 = vmatpush1.msra.mxu0 0.0
        %991 = vmatprep.subr.mxu0 0.0
        %992 = vmatpush1.msra.mxu0 0.0
        %993 = vmatprep.subr.mxu0 0.0
        %994 = vmatpush1.msra.mxu0 0.0
        %995 = vmatprep.subr.mxu0 0.0
        %996 = vmatpush1.msra.mxu0 0.0
        %997 = vmatprep.subr.mxu0 0.0
        %998 = vmatpush1.msra.mxu0 0.0
        %999 = vmatprep.subr.mxu0 0.0
        %1000 = vmatpush1.msra.mxu0 0.0
        %1001 = vmatprep.subr.mxu0 0.0
        %1002 = vmatpush1.msra.mxu0 0.0
        %1003 = vmatprep.subr.mxu0 0.0
        %1004 = vmatpush1.msra.mxu0 0.0
        %1005 = vmatprep.subr.mxu0 0.0
        %1006 = vmatpush1.msra.mxu0 0.0
        %1007 = vmatprep.subr.mxu0 0.0
        %1008 = vmatpush1.msra.mxu0 0.0
        %1009 = vmatprep.subr.mxu0 0.0
        %1010 = vmatpush1.msra.mxu0 0.0
        %1011 = vmatprep.subr.mxu0 0.0
        %1012 = vmatpush1.msra.mxu0 0.0
        %1013 = vmatprep.subr.mxu0 0.0
        %1014 = vmatpush1.msra.mxu0 0.0
        %1015 = vmatprep.subr.mxu0 0.0
        %1016 = vmatpush1.msra.mxu0 0.0
        %1017 = vmatprep.subr.mxu0 0.0
        %1018 = vmatpush1.msra.mxu0 0.0
        %1019 = vmatprep.subr.mxu0 0.0
        %1020 = vmatpush1.msra.mxu0 0.0
        %1021 = vmatprep.subr.mxu0 0.0
        %1022 = vmatpush1.msra.mxu0 0.0
        %1023 = vmatprep.subr.mxu0 0.0
        %1024 = vmatpush1.msra.mxu0 0.0
        %1025 = vmatprep.subr.mxu0 0.0
        %1026 = vmatpush1.msra.mxu0 0.0
        %1027 = vmatprep.subr.mxu0 0.0
        %1028 = vmatpush1.msra.mxu0 0.0
        %1029 = vmatprep.subr.mxu0 0.0
        %1030 = vmatpush1.msra.mxu0 0.0
        %1031 = vmatprep.subr.mxu0 0.0
        %1032 = vmatpush1.msra.mxu0 0.0
        %1033 = vmatprep.subr.mxu0 0.0
        %1034 = vmatpush1.msra.mxu0 0.0
        %1035 = vmatprep.subr.mxu0 0.0
        %1036 = vmatpush1.msra.mxu0 0.0
        %1037 = vmatprep.mubr.f32.mxu0 0.0
        %1038 = vmatmul.mubr.f32.gmra.mrb[0].mxu0 %v965
        %v1039 = vpop.f32.mrb[0].mxu0
        %v1040 = vadd.f32 0.0, %v1039
        %v1041 = vpop.f32.mrb[0].mxu0
        %v1042 = vadd.f32 0.0, %v1041
        %1043 = vdwg.mxu0
        %v1044 = vadd.f32 %v943, %v1040
        %v1045 = vadd.f32 %v944, %v1042
        %1046 = vrot.lane.b32.xlu0 %v355, 112
        %v1047 = vpop.permute.xlu0 %1046
        %1048 = vrot.lane.b32.xlu0 %v356, 112
        %v1049 = vpop.permute.xlu0 %1048
        %vm1050 = vcmp.lt.s32.totalorder %v362, 112
        %v1051 = vsel %vm1050, %v1047, %v1049
        %v1052 = vsel %vm1050, %v1049, %v1047
        %v1053 = vlaneseq
        %v1054 = vshrl.u32 %v1053, 7
        %v1055 = vsub.s32 7, %v1054
        %v1056 = vrot.slane %v333, %v1055
        %v1057 = vlaneseq
        %v1058 = vshrl.u32 %v1057, 7
        %v1059 = vsub.s32 7, %v1058
        %v1060 = vrot.slane %v334, %v1059
        %v1061 = vmul.f32 %v1056, %v1051
        %v1062 = vmul.f32 %v1060, %v1052
        %s1063 = scalar_lea.vmem %s3, 28
        %v1064 = vld [vmem:[%s1063] sm:$0xf]
        %v1066 = vsel %vm396, %v1064, 0
        %v1069 = vsel %vm400, %v1061, 0
        %v1072 = vsel %vm400, %v1062, 0
        %1074 = vmatprep.subr.mxu0 %v1072
        %1075 = vmatpush1.msra.mxu0 %v1069
        %1076 = vmatprep.subr.mxu0 0.0
        %1077 = vmatpush1.msra.mxu0 0.0
        %1078 = vmatprep.subr.mxu0 0.0
        %1079 = vmatpush1.msra.mxu0 0.0
        %1080 = vmatprep.subr.mxu0 0.0
        %1081 = vmatpush1.msra.mxu0 0.0
        %1082 = vmatprep.subr.mxu0 0.0
        %1083 = vmatpush1.msra.mxu0 0.0
        %1084 = vmatprep.subr.mxu0 0.0
        %1085 = vmatpush1.msra.mxu0 0.0
        %1086 = vmatprep.subr.mxu0 0.0
        %1087 = vmatpush1.msra.mxu0 0.0
        %1088 = vmatprep.subr.mxu0 0.0
        %1089 = vmatpush1.msra.mxu0 0.0
        %1090 = vmatprep.subr.mxu0 0.0
        %1091 = vmatpush1.msra.mxu0 0.0
        %1092 = vmatprep.subr.mxu0 0.0
        %1093 = vmatpush1.msra.mxu0 0.0
        %1094 = vmatprep.subr.mxu0 0.0
        %1095 = vmatpush1.msra.mxu0 0.0
        %1096 = vmatprep.subr.mxu0 0.0
        %1097 = vmatpush1.msra.mxu0 0.0
        %1098 = vmatprep.subr.mxu0 0.0
        %1099 = vmatpush1.msra.mxu0 0.0
        %1100 = vmatprep.subr.mxu0 0.0
        %1101 = vmatpush1.msra.mxu0 0.0
        %1102 = vmatprep.subr.mxu0 0.0
        %1103 = vmatpush1.msra.mxu0 0.0
        %1104 = vmatprep.subr.mxu0 0.0
        %1105 = vmatpush1.msra.mxu0 0.0
        %1106 = vmatprep.subr.mxu0 0.0
        %1107 = vmatpush1.msra.mxu0 0.0
        %1108 = vmatprep.subr.mxu0 0.0
        %1109 = vmatpush1.msra.mxu0 0.0
        %1110 = vmatprep.subr.mxu0 0.0
        %1111 = vmatpush1.msra.mxu0 0.0
        %1112 = vmatprep.subr.mxu0 0.0
        %1113 = vmatpush1.msra.mxu0 0.0
        %1114 = vmatprep.subr.mxu0 0.0
        %1115 = vmatpush1.msra.mxu0 0.0
        %1116 = vmatprep.subr.mxu0 0.0
        %1117 = vmatpush1.msra.mxu0 0.0
        %1118 = vmatprep.subr.mxu0 0.0
        %1119 = vmatpush1.msra.mxu0 0.0
        %1120 = vmatprep.subr.mxu0 0.0
        %1121 = vmatpush1.msra.mxu0 0.0
        %1122 = vmatprep.subr.mxu0 0.0
        %1123 = vmatpush1.msra.mxu0 0.0
        %1124 = vmatprep.subr.mxu0 0.0
        %1125 = vmatpush1.msra.mxu0 0.0
        %1126 = vmatprep.subr.mxu0 0.0
        %1127 = vmatpush1.msra.mxu0 0.0
        %1128 = vmatprep.subr.mxu0 0.0
        %1129 = vmatpush1.msra.mxu0 0.0
        %1130 = vmatprep.subr.mxu0 0.0
        %1131 = vmatpush1.msra.mxu0 0.0
        %1132 = vmatprep.subr.mxu0 0.0
        %1133 = vmatpush1.msra.mxu0 0.0
        %1134 = vmatprep.subr.mxu0 0.0
        %1135 = vmatpush1.msra.mxu0 0.0
        %1136 = vmatprep.subr.mxu0 0.0
        %1137 = vmatpush1.msra.mxu0 0.0
        %1138 = vmatprep.mubr.f32.mxu0 0.0
        %1139 = vmatmul.mubr.f32.gmra.mrb[0].mxu0 %v1066
        %v1140 = vpop.f32.mrb[0].mxu0
        %v1141 = vadd.f32 0.0, %v1140
        %v1142 = vpop.f32.mrb[0].mxu0
        %v1143 = vadd.f32 0.0, %v1142
        %1144 = vdwg.mxu0
        %v1145 = vadd.f32 %v1044, %v1141
        %v1146 = vadd.f32 %v1045, %v1143
        %1147 = vrot.lane.b32.xlu0 %v355, 111
        %v1148 = vpop.permute.xlu0 %1147
        %1149 = vrot.lane.b32.xlu0 %v356, 111
        %v1150 = vpop.permute.xlu0 %1149
        %vm1151 = vcmp.lt.s32.totalorder %v362, 111
        %v1152 = vsel %vm1151, %v1148, %v1150
        %v1153 = vsel %vm1151, %v1150, %v1148
        %v1154 = vlaneseq
        %v1155 = vshrl.u32 %v1154, 7
        %v1156 = vsub.s32 0, %v1155
        %v1157 = vrot.slane %v335, %v1156
        %v1158 = vlaneseq
        %v1159 = vshrl.u32 %v1158, 7
        %v1160 = vsub.s32 0, %v1159
        %v1161 = vrot.slane %v336, %v1160
        %v1162 = vmul.f32 %v1157, %v1152
        %v1163 = vmul.f32 %v1161, %v1153
        %s1164 = scalar_lea.vmem %s3, 32
        %v1165 = vld [vmem:[%s1164] sm:$0xf]
        %v1167 = vsel %vm396, %v1165, 0
        %v1170 = vsel %vm400, %v1162, 0
        %v1173 = vsel %vm400, %v1163, 0
        %1175 = vmatprep.subr.mxu0 %v1173
        %1176 = vmatpush1.msra.mxu0 %v1170
        %1177 = vmatprep.subr.mxu0 0.0
        %1178 = vmatpush1.msra.mxu0 0.0
        %1179 = vmatprep.subr.mxu0 0.0
        %1180 = vmatpush1.msra.mxu0 0.0
        %1181 = vmatprep.subr.mxu0 0.0
        %1182 = vmatpush1.msra.mxu0 0.0
        %1183 = vmatprep.subr.mxu0 0.0
        %1184 = vmatpush1.msra.mxu0 0.0
        %1185 = vmatprep.subr.mxu0 0.0
        %1186 = vmatpush1.msra.mxu0 0.0
        %1187 = vmatprep.subr.mxu0 0.0
        %1188 = vmatpush1.msra.mxu0 0.0
        %1189 = vmatprep.subr.mxu0 0.0
        %1190 = vmatpush1.msra.mxu0 0.0
        %1191 = vmatprep.subr.mxu0 0.0
        %1192 = vmatpush1.msra.mxu0 0.0
        %1193 = vmatprep.subr.mxu0 0.0
        %1194 = vmatpush1.msra.mxu0 0.0
        %1195 = vmatprep.subr.mxu0 0.0
        %1196 = vmatpush1.msra.mxu0 0.0
        %1197 = vmatprep.subr.mxu0 0.0
        %1198 = vmatpush1.msra.mxu0 0.0
        %1199 = vmatprep.subr.mxu0 0.0
        %1200 = vmatpush1.msra.mxu0 0.0
        %1201 = vmatprep.subr.mxu0 0.0
        %1202 = vmatpush1.msra.mxu0 0.0
        %1203 = vmatprep.subr.mxu0 0.0
        %1204 = vmatpush1.msra.mxu0 0.0
        %1205 = vmatprep.subr.mxu0 0.0
        %1206 = vmatpush1.msra.mxu0 0.0
        %1207 = vmatprep.subr.mxu0 0.0
        %1208 = vmatpush1.msra.mxu0 0.0
        %1209 = vmatprep.subr.mxu0 0.0
        %1210 = vmatpush1.msra.mxu0 0.0
        %1211 = vmatprep.subr.mxu0 0.0
        %1212 = vmatpush1.msra.mxu0 0.0
        %1213 = vmatprep.subr.mxu0 0.0
        %1214 = vmatpush1.msra.mxu0 0.0
        %1215 = vmatprep.subr.mxu0 0.0
        %1216 = vmatpush1.msra.mxu0 0.0
        %1217 = vmatprep.subr.mxu0 0.0
        %1218 = vmatpush1.msra.mxu0 0.0
        %1219 = vmatprep.subr.mxu0 0.0
        %1220 = vmatpush1.msra.mxu0 0.0
        %1221 = vmatprep.subr.mxu0 0.0
        %1222 = vmatpush1.msra.mxu0 0.0
        %1223 = vmatprep.subr.mxu0 0.0
        %1224 = vmatpush1.msra.mxu0 0.0
        %1225 = vmatprep.subr.mxu0 0.0
        %1226 = vmatpush1.msra.mxu0 0.0
        %1227 = vmatprep.subr.mxu0 0.0
        %1228 = vmatpush1.msra.mxu0 0.0
        %1229 = vmatprep.subr.mxu0 0.0
        %1230 = vmatpush1.msra.mxu0 0.0
        %1231 = vmatprep.subr.mxu0 0.0
        %1232 = vmatpush1.msra.mxu0 0.0
        %1233 = vmatprep.subr.mxu0 0.0
        %1234 = vmatpush1.msra.mxu0 0.0
        %1235 = vmatprep.subr.mxu0 0.0
        %1236 = vmatpush1.msra.mxu0 0.0
        %1237 = vmatprep.subr.mxu0 0.0
        %1238 = vmatpush1.msra.mxu0 0.0
        %1239 = vmatprep.mubr.f32.mxu0 0.0
        %1240 = vmatmul.mubr.f32.gmra.mrb[0].mxu0 %v1167
        %v1241 = vpop.f32.mrb[0].mxu0
        %v1242 = vadd.f32 0.0, %v1241
        %v1243 = vpop.f32.mrb[0].mxu0
        %v1244 = vadd.f32 0.0, %v1243
        %1245 = vdwg.mxu0
        %v1246 = vadd.f32 %v1145, %v1242
        %v1247 = vadd.f32 %v1146, %v1244
        %v1248 = vld [vmem:[%s8] sm:$0xf]
        %1250 = vset.pattern.permute.xlu0 0
        %1251 = vperm.xlu0 %1250, %v1248
        %v1252 = vpop.permute.xlu0 %1251
        %v1254 = vmul.f32 %v1252, %v1246
        %v1255 = vmul.f32 %v1252, %v1247
        %s1256 = scalar_lea.vmem %s8, 4
        %v1257 = vld [vmem:[%s1256] sm:$0xf]
        %1259 = vset.pattern.permute.xlu0 0
        %1260 = vperm.xlu0 %1259, %v1257
        %v1261 = vpop.permute.xlu0 %1260
        %v1263 = vadd.f32 %v1254, %v1261
        %v1264 = vadd.f32 %v1255, %v1261
        %vm1265 = vcmp.ge.f32.partialorder %v1263, 0.0
        %vm1266 = vcmp.ge.f32.partialorder %v1264, 0.0
        %s1267 = scalar_lea.vmem %s8, 8
        %v1268 = vld [vmem:[%s1267] sm:$0xf]
        %1270 = vset.pattern.permute.xlu0 0
        %1271 = vperm.xlu0 %1270, %v1268
        %v1272 = vpop.permute.xlu0 %1271
        %v1274 = vmul.f32 %v1272, %v1263
        %v1275 = vmul.f32 %v1272, %v1264
        %v1276 = vsel %vm1265, %v1263, %v1274
        %v1277 = vsel %vm1266, %v1264, %v1275
        %1278 = vrot.lane.b32.xlu0 %v1276, 17
        %v1279 = vpop.permute.xlu0 %1278
        %1280 = vrot.lane.b32.xlu0 %v1277, 17
        %v1281 = vpop.permute.xlu0 %1280
        %v1282 = vsel %vm363, %v1279, %v1281
        %v1283 = vsel %vm363, %v1281, %v1279
        %v1284 = vmul.f32 %v369, %v1283
        %v1285 = vmul.f32 %v373, %v1282
        %v1286 = vld [vmem:[%s4] sm:$0xf]
        %1287 = vrot.lane.b32.xlu0 %v1276, 16
        %v1288 = vpop.permute.xlu0 %1287
        %1289 = vrot.lane.b32.xlu0 %v1277, 16
        %v1290 = vpop.permute.xlu0 %1289
        %v1291 = vsel %vm381, %v1288, %v1290
        %v1292 = vsel %vm381, %v1290, %v1288
        %v1293 = vmul.f32 %v387, %v1292
        %v1294 = vmul.f32 %v391, %v1291
        %s1295 = scalar_lea.vmem %s4, 4
        %v1296 = vld [vmem:[%s1295] sm:$0xf]
        %v1298 = vsel %vm396, %v1296, 0
        %v1301 = vsel %vm400, %v1293, 0
        %v1304 = vsel %vm400, %v1294, 0
        %1306 = vmatprep.subr.mxu0 %v1304
        %1307 = vmatpush1.msra.mxu0 %v1301
        %1308 = vmatprep.subr.mxu0 0.0
        %1309 = vmatpush1.msra.mxu0 0.0
        %1310 = vmatprep.subr.mxu0 0.0
        %1311 = vmatpush1.msra.mxu0 0.0
        %1312 = vmatprep.subr.mxu0 0.0
        %1313 = vmatpush1.msra.mxu0 0.0
        %1314 = vmatprep.subr.mxu0 0.0
        %1315 = vmatpush1.msra.mxu0 0.0
        %1316 = vmatprep.subr.mxu0 0.0
        %1317 = vmatpush1.msra.mxu0 0.0
        %1318 = vmatprep.subr.mxu0 0.0
        %1319 = vmatpush1.msra.mxu0 0.0
        %1320 = vmatprep.subr.mxu0 0.0
        %1321 = vmatpush1.msra.mxu0 0.0
        %1322 = vmatprep.subr.mxu0 0.0
        %1323 = vmatpush1.msra.mxu0 0.0
        %1324 = vmatprep.subr.mxu0 0.0
        %1325 = vmatpush1.msra.mxu0 0.0
        %1326 = vmatprep.subr.mxu0 0.0
        %1327 = vmatpush1.msra.mxu0 0.0
        %1328 = vmatprep.subr.mxu0 0.0
        %1329 = vmatpush1.msra.mxu0 0.0
        %1330 = vmatprep.subr.mxu0 0.0
        %1331 = vmatpush1.msra.mxu0 0.0
        %1332 = vmatprep.subr.mxu0 0.0
        %1333 = vmatpush1.msra.mxu0 0.0
        %1334 = vmatprep.subr.mxu0 0.0
        %1335 = vmatpush1.msra.mxu0 0.0
        %1336 = vmatprep.subr.mxu0 0.0
        %1337 = vmatpush1.msra.mxu0 0.0
        %1338 = vmatprep.subr.mxu0 0.0
        %1339 = vmatpush1.msra.mxu0 0.0
        %1340 = vmatprep.subr.mxu0 0.0
        %1341 = vmatpush1.msra.mxu0 0.0
        %1342 = vmatprep.subr.mxu0 0.0
        %1343 = vmatpush1.msra.mxu0 0.0
        %1344 = vmatprep.subr.mxu0 0.0
        %1345 = vmatpush1.msra.mxu0 0.0
        %1346 = vmatprep.subr.mxu0 0.0
        %1347 = vmatpush1.msra.mxu0 0.0
        %1348 = vmatprep.subr.mxu0 0.0
        %1349 = vmatpush1.msra.mxu0 0.0
        %1350 = vmatprep.subr.mxu0 0.0
        %1351 = vmatpush1.msra.mxu0 0.0
        %1352 = vmatprep.subr.mxu0 0.0
        %1353 = vmatpush1.msra.mxu0 0.0
        %1354 = vmatprep.subr.mxu0 0.0
        %1355 = vmatpush1.msra.mxu0 0.0
        %1356 = vmatprep.subr.mxu0 0.0
        %1357 = vmatpush1.msra.mxu0 0.0
        %1358 = vmatprep.subr.mxu0 0.0
        %1359 = vmatpush1.msra.mxu0 0.0
        %1360 = vmatprep.subr.mxu0 0.0
        %1361 = vmatpush1.msra.mxu0 0.0
        %1362 = vmatprep.subr.mxu0 0.0
        %1363 = vmatpush1.msra.mxu0 0.0
        %1364 = vmatprep.subr.mxu0 0.0
        %1365 = vmatpush1.msra.mxu0 0.0
        %1366 = vmatprep.subr.mxu0 0.0
        %1367 = vmatpush1.msra.mxu0 0.0
        %1368 = vmatprep.subr.mxu0 0.0
        %1369 = vmatpush1.msra.mxu0 0.0
        %1370 = vmatprep.mubr.f32.mxu0 0.0
        %1371 = vmatmul.mubr.f32.gmra.mrb[0].mxu0 %v1298
        %v1372 = vpop.f32.mrb[0].mxu0
        %v1373 = vadd.f32 0.0, %v1372
        %v1374 = vpop.f32.mrb[0].mxu0
        %v1375 = vadd.f32 0.0, %v1374
        %1376 = vdwg.mxu0
        %v1378 = vsel %vm396, %v1286, 0
        %v1381 = vsel %vm400, %v1284, 0
        %v1384 = vsel %vm400, %v1285, 0
        %1386 = vmatprep.subr.mxu0 %v1384
        %1387 = vmatpush1.msra.mxu0 %v1381
        %1388 = vmatprep.subr.mxu0 0.0
        %1389 = vmatpush1.msra.mxu0 0.0
        %1390 = vmatprep.subr.mxu0 0.0
        %1391 = vmatpush1.msra.mxu0 0.0
        %1392 = vmatprep.subr.mxu0 0.0
        %1393 = vmatpush1.msra.mxu0 0.0
        %1394 = vmatprep.subr.mxu0 0.0
        %1395 = vmatpush1.msra.mxu0 0.0
        %1396 = vmatprep.subr.mxu0 0.0
        %1397 = vmatpush1.msra.mxu0 0.0
        %1398 = vmatprep.subr.mxu0 0.0
        %1399 = vmatpush1.msra.mxu0 0.0
        %1400 = vmatprep.subr.mxu0 0.0
        %1401 = vmatpush1.msra.mxu0 0.0
        %1402 = vmatprep.subr.mxu0 0.0
        %1403 = vmatpush1.msra.mxu0 0.0
        %1404 = vmatprep.subr.mxu0 0.0
        %1405 = vmatpush1.msra.mxu0 0.0
        %1406 = vmatprep.subr.mxu0 0.0
        %1407 = vmatpush1.msra.mxu0 0.0
        %1408 = vmatprep.subr.mxu0 0.0
        %1409 = vmatpush1.msra.mxu0 0.0
        %1410 = vmatprep.subr.mxu0 0.0
        %1411 = vmatpush1.msra.mxu0 0.0
        %1412 = vmatprep.subr.mxu0 0.0
        %1413 = vmatpush1.msra.mxu0 0.0
        %1414 = vmatprep.subr.mxu0 0.0
        %1415 = vmatpush1.msra.mxu0 0.0
        %1416 = vmatprep.subr.mxu0 0.0
        %1417 = vmatpush1.msra.mxu0 0.0
        %1418 = vmatprep.subr.mxu0 0.0
        %1419 = vmatpush1.msra.mxu0 0.0
        %1420 = vmatprep.subr.mxu0 0.0
        %1421 = vmatpush1.msra.mxu0 0.0
        %1422 = vmatprep.subr.mxu0 0.0
        %1423 = vmatpush1.msra.mxu0 0.0
        %1424 = vmatprep.subr.mxu0 0.0
        %1425 = vmatpush1.msra.mxu0 0.0
        %1426 = vmatprep.subr.mxu0 0.0
        %1427 = vmatpush1.msra.mxu0 0.0
        %1428 = vmatprep.subr.mxu0 0.0
        %1429 = vmatpush1.msra.mxu0 0.0
        %1430 = vmatprep.subr.mxu0 0.0
        %1431 = vmatpush1.msra.mxu0 0.0
        %1432 = vmatprep.subr.mxu0 0.0
        %1433 = vmatpush1.msra.mxu0 0.0
        %1434 = vmatprep.subr.mxu0 0.0
        %1435 = vmatpush1.msra.mxu0 0.0
        %1436 = vmatprep.subr.mxu0 0.0
        %1437 = vmatpush1.msra.mxu0 0.0
        %1438 = vmatprep.subr.mxu0 0.0
        %1439 = vmatpush1.msra.mxu0 0.0
        %1440 = vmatprep.subr.mxu0 0.0
        %1441 = vmatpush1.msra.mxu0 0.0
        %1442 = vmatprep.subr.mxu0 0.0
        %1443 = vmatpush1.msra.mxu0 0.0
        %1444 = vmatprep.subr.mxu0 0.0
        %1445 = vmatpush1.msra.mxu0 0.0
        %1446 = vmatprep.subr.mxu0 0.0
        %1447 = vmatpush1.msra.mxu0 0.0
        %1448 = vmatprep.subr.mxu0 0.0
        %1449 = vmatpush1.msra.mxu0 0.0
        %1450 = vmatprep.mubr.f32.mxu0 0.0
        %1451 = vmatmul.mubr.f32.gmra.mrb[0].mxu0 %v1378
        %v1452 = vpop.f32.mrb[0].mxu0
        %v1453 = vadd.f32 %v1373, %v1452
        %v1454 = vpop.f32.mrb[0].mxu0
        %v1455 = vadd.f32 %v1375, %v1454
        %1456 = vdwg.mxu0
        %1457 = vrot.lane.b32.xlu0 %v1276, 15
        %v1458 = vpop.permute.xlu0 %1457
        %1459 = vrot.lane.b32.xlu0 %v1277, 15
        %v1460 = vpop.permute.xlu0 %1459
        %v1461 = vsel %vm562, %v1458, %v1460
        %v1462 = vsel %vm562, %v1460, %v1458
        %v1463 = vmul.f32 %v568, %v1462
        %v1464 = vmul.f32 %v572, %v1461
        %s1465 = scalar_lea.vmem %s4, 8
        %v1466 = vld [vmem:[%s1465] sm:$0xf]
        %v1468 = vsel %vm396, %v1466, 0
        %v1471 = vsel %vm400, %v1463, 0
        %v1474 = vsel %vm400, %v1464, 0
        %1476 = vmatprep.subr.mxu0 %v1474
        %1477 = vmatpush1.msra.mxu0 %v1471
        %1478 = vmatprep.subr.mxu0 0.0
        %1479 = vmatpush1.msra.mxu0 0.0
        %1480 = vmatprep.subr.mxu0 0.0
        %1481 = vmatpush1.msra.mxu0 0.0
        %1482 = vmatprep.subr.mxu0 0.0
        %1483 = vmatpush1.msra.mxu0 0.0
        %1484 = vmatprep.subr.mxu0 0.0
        %1485 = vmatpush1.msra.mxu0 0.0
        %1486 = vmatprep.subr.mxu0 0.0
        %1487 = vmatpush1.msra.mxu0 0.0
        %1488 = vmatprep.subr.mxu0 0.0
        %1489 = vmatpush1.msra.mxu0 0.0
        %1490 = vmatprep.subr.mxu0 0.0
        %1491 = vmatpush1.msra.mxu0 0.0
        %1492 = vmatprep.subr.mxu0 0.0
        %1493 = vmatpush1.msra.mxu0 0.0
        %1494 = vmatprep.subr.mxu0 0.0
        %1495 = vmatpush1.msra.mxu0 0.0
        %1496 = vmatprep.subr.mxu0 0.0
        %1497 = vmatpush1.msra.mxu0 0.0
        %1498 = vmatprep.subr.mxu0 0.0
        %1499 = vmatpush1.msra.mxu0 0.0
        %1500 = vmatprep.subr.mxu0 0.0
        %1501 = vmatpush1.msra.mxu0 0.0
        %1502 = vmatprep.subr.mxu0 0.0
        %1503 = vmatpush1.msra.mxu0 0.0
        %1504 = vmatprep.subr.mxu0 0.0
        %1505 = vmatpush1.msra.mxu0 0.0
        %1506 = vmatprep.subr.mxu0 0.0
        %1507 = vmatpush1.msra.mxu0 0.0
        %1508 = vmatprep.subr.mxu0 0.0
        %1509 = vmatpush1.msra.mxu0 0.0
        %1510 = vmatprep.subr.mxu0 0.0
        %1511 = vmatpush1.msra.mxu0 0.0
        %1512 = vmatprep.subr.mxu0 0.0
        %1513 = vmatpush1.msra.mxu0 0.0
        %1514 = vmatprep.subr.mxu0 0.0
        %1515 = vmatpush1.msra.mxu0 0.0
        %1516 = vmatprep.subr.mxu0 0.0
        %1517 = vmatpush1.msra.mxu0 0.0
        %1518 = vmatprep.subr.mxu0 0.0
        %1519 = vmatpush1.msra.mxu0 0.0
        %1520 = vmatprep.subr.mxu0 0.0
        %1521 = vmatpush1.msra.mxu0 0.0
        %1522 = vmatprep.subr.mxu0 0.0
        %1523 = vmatpush1.msra.mxu0 0.0
        %1524 = vmatprep.subr.mxu0 0.0
        %1525 = vmatpush1.msra.mxu0 0.0
        %1526 = vmatprep.subr.mxu0 0.0
        %1527 = vmatpush1.msra.mxu0 0.0
        %1528 = vmatprep.subr.mxu0 0.0
        %1529 = vmatpush1.msra.mxu0 0.0
        %1530 = vmatprep.subr.mxu0 0.0
        %1531 = vmatpush1.msra.mxu0 0.0
        %1532 = vmatprep.subr.mxu0 0.0
        %1533 = vmatpush1.msra.mxu0 0.0
        %1534 = vmatprep.subr.mxu0 0.0
        %1535 = vmatpush1.msra.mxu0 0.0
        %1536 = vmatprep.subr.mxu0 0.0
        %1537 = vmatpush1.msra.mxu0 0.0
        %1538 = vmatprep.subr.mxu0 0.0
        %1539 = vmatpush1.msra.mxu0 0.0
        %1540 = vmatprep.mubr.f32.mxu0 0.0
        %1541 = vmatmul.mubr.f32.gmra.mrb[0].mxu0 %v1468
        %v1542 = vpop.f32.mrb[0].mxu0
        %v1543 = vadd.f32 0.0, %v1542
        %v1544 = vpop.f32.mrb[0].mxu0
        %v1545 = vadd.f32 0.0, %v1544
        %1546 = vdwg.mxu0
        %v1547 = vadd.f32 %v1453, %v1543
        %v1548 = vadd.f32 %v1455, %v1545
        %1549 = vrot.lane.b32.xlu0 %v1276, 1
        %v1550 = vpop.permute.xlu0 %1549
        %1551 = vrot.lane.b32.xlu0 %v1277, 1
        %v1552 = vpop.permute.xlu0 %1551
        %v1553 = vsel %vm663, %v1550, %v1552
        %v1554 = vsel %vm663, %v1552, %v1550
        %v1555 = vmul.f32 %v669, %v1554
        %v1556 = vmul.f32 %v673, %v1553
        %s1557 = scalar_lea.vmem %s4, 12
        %v1558 = vld [vmem:[%s1557] sm:$0xf]
        %v1560 = vsel %vm396, %v1558, 0
        %v1563 = vsel %vm400, %v1555, 0
        %v1566 = vsel %vm400, %v1556, 0
        %1568 = vmatprep.subr.mxu0 %v1566
        %1569 = vmatpush1.msra.mxu0 %v1563
        %1570 = vmatprep.subr.mxu0 0.0
        %1571 = vmatpush1.msra.mxu0 0.0
        %1572 = vmatprep.subr.mxu0 0.0
        %1573 = vmatpush1.msra.mxu0 0.0
        %1574 = vmatprep.subr.mxu0 0.0
        %1575 = vmatpush1.msra.mxu0 0.0
        %1576 = vmatprep.subr.mxu0 0.0
        %1577 = vmatpush1.msra.mxu0 0.0
        %1578 = vmatprep.subr.mxu0 0.0
        %1579 = vmatpush1.msra.mxu0 0.0
        %1580 = vmatprep.subr.mxu0 0.0
        %1581 = vmatpush1.msra.mxu0 0.0
        %1582 = vmatprep.subr.mxu0 0.0
        %1583 = vmatpush1.msra.mxu0 0.0
        %1584 = vmatprep.subr.mxu0 0.0
        %1585 = vmatpush1.msra.mxu0 0.0
        %1586 = vmatprep.subr.mxu0 0.0
        %1587 = vmatpush1.msra.mxu0 0.0
        %1588 = vmatprep.subr.mxu0 0.0
        %1589 = vmatpush1.msra.mxu0 0.0
        %1590 = vmatprep.subr.mxu0 0.0
        %1591 = vmatpush1.msra.mxu0 0.0
        %1592 = vmatprep.subr.mxu0 0.0
        %1593 = vmatpush1.msra.mxu0 0.0
        %1594 = vmatprep.subr.mxu0 0.0
        %1595 = vmatpush1.msra.mxu0 0.0
        %1596 = vmatprep.subr.mxu0 0.0
        %1597 = vmatpush1.msra.mxu0 0.0
        %1598 = vmatprep.subr.mxu0 0.0
        %1599 = vmatpush1.msra.mxu0 0.0
        %1600 = vmatprep.subr.mxu0 0.0
        %1601 = vmatpush1.msra.mxu0 0.0
        %1602 = vmatprep.subr.mxu0 0.0
        %1603 = vmatpush1.msra.mxu0 0.0
        %1604 = vmatprep.subr.mxu0 0.0
        %1605 = vmatpush1.msra.mxu0 0.0
        %1606 = vmatprep.subr.mxu0 0.0
        %1607 = vmatpush1.msra.mxu0 0.0
        %1608 = vmatprep.subr.mxu0 0.0
        %1609 = vmatpush1.msra.mxu0 0.0
        %1610 = vmatprep.subr.mxu0 0.0
        %1611 = vmatpush1.msra.mxu0 0.0
        %1612 = vmatprep.subr.mxu0 0.0
        %1613 = vmatpush1.msra.mxu0 0.0
        %1614 = vmatprep.subr.mxu0 0.0
        %1615 = vmatpush1.msra.mxu0 0.0
        %1616 = vmatprep.subr.mxu0 0.0
        %1617 = vmatpush1.msra.mxu0 0.0
        %1618 = vmatprep.subr.mxu0 0.0
        %1619 = vmatpush1.msra.mxu0 0.0
        %1620 = vmatprep.subr.mxu0 0.0
        %1621 = vmatpush1.msra.mxu0 0.0
        %1622 = vmatprep.subr.mxu0 0.0
        %1623 = vmatpush1.msra.mxu0 0.0
        %1624 = vmatprep.subr.mxu0 0.0
        %1625 = vmatpush1.msra.mxu0 0.0
        %1626 = vmatprep.subr.mxu0 0.0
        %1627 = vmatpush1.msra.mxu0 0.0
        %1628 = vmatprep.subr.mxu0 0.0
        %1629 = vmatpush1.msra.mxu0 0.0
        %1630 = vmatprep.subr.mxu0 0.0
        %1631 = vmatpush1.msra.mxu0 0.0
        %1632 = vmatprep.mubr.f32.mxu0 0.0
        %1633 = vmatmul.mubr.f32.gmra.mrb[0].mxu0 %v1560
        %v1634 = vpop.f32.mrb[0].mxu0
        %v1635 = vadd.f32 0.0, %v1634
        %v1636 = vpop.f32.mrb[0].mxu0
        %v1637 = vadd.f32 0.0, %v1636
        %1638 = vdwg.mxu0
        %v1639 = vadd.f32 %v1547, %v1635
        %v1640 = vadd.f32 %v1548, %v1637
        %s1641 = scalar_lea.vmem %s4, 16
        %v1642 = vld [vmem:[%s1641] sm:$0xf]
        %v1644 = vsel %vm396, %v1642, 0
        %v1647 = vsel %vm400, %v1276, 0
        %v1650 = vsel %vm400, %v1277, 0
        %1652 = vmatprep.subr.mxu0 %v1650
        %1653 = vmatpush1.msra.mxu0 %v1647
        %1654 = vmatprep.subr.mxu0 0.0
        %1655 = vmatpush1.msra.mxu0 0.0
        %1656 = vmatprep.subr.mxu0 0.0
        %1657 = vmatpush1.msra.mxu0 0.0
        %1658 = vmatprep.subr.mxu0 0.0
        %1659 = vmatpush1.msra.mxu0 0.0
        %1660 = vmatprep.subr.mxu0 0.0
        %1661 = vmatpush1.msra.mxu0 0.0
        %1662 = vmatprep.subr.mxu0 0.0
        %1663 = vmatpush1.msra.mxu0 0.0
        %1664 = vmatprep.subr.mxu0 0.0
        %1665 = vmatpush1.msra.mxu0 0.0
        %1666 = vmatprep.subr.mxu0 0.0
        %1667 = vmatpush1.msra.mxu0 0.0
        %1668 = vmatprep.subr.mxu0 0.0
        %1669 = vmatpush1.msra.mxu0 0.0
        %1670 = vmatprep.subr.mxu0 0.0
        %1671 = vmatpush1.msra.mxu0 0.0
        %1672 = vmatprep.subr.mxu0 0.0
        %1673 = vmatpush1.msra.mxu0 0.0
        %1674 = vmatprep.subr.mxu0 0.0
        %1675 = vmatpush1.msra.mxu0 0.0
        %1676 = vmatprep.subr.mxu0 0.0
        %1677 = vmatpush1.msra.mxu0 0.0
        %1678 = vmatprep.subr.mxu0 0.0
        %1679 = vmatpush1.msra.mxu0 0.0
        %1680 = vmatprep.subr.mxu0 0.0
        %1681 = vmatpush1.msra.mxu0 0.0
        %1682 = vmatprep.subr.mxu0 0.0
        %1683 = vmatpush1.msra.mxu0 0.0
        %1684 = vmatprep.subr.mxu0 0.0
        %1685 = vmatpush1.msra.mxu0 0.0
        %1686 = vmatprep.subr.mxu0 0.0
        %1687 = vmatpush1.msra.mxu0 0.0
        %1688 = vmatprep.subr.mxu0 0.0
        %1689 = vmatpush1.msra.mxu0 0.0
        %1690 = vmatprep.subr.mxu0 0.0
        %1691 = vmatpush1.msra.mxu0 0.0
        %1692 = vmatprep.subr.mxu0 0.0
        %1693 = vmatpush1.msra.mxu0 0.0
        %1694 = vmatprep.subr.mxu0 0.0
        %1695 = vmatpush1.msra.mxu0 0.0
        %1696 = vmatprep.subr.mxu0 0.0
        %1697 = vmatpush1.msra.mxu0 0.0
        %1698 = vmatprep.subr.mxu0 0.0
        %1699 = vmatpush1.msra.mxu0 0.0
        %1700 = vmatprep.subr.mxu0 0.0
        %1701 = vmatpush1.msra.mxu0 0.0
        %1702 = vmatprep.subr.mxu0 0.0
        %1703 = vmatpush1.msra.mxu0 0.0
        %1704 = vmatprep.subr.mxu0 0.0
        %1705 = vmatpush1.msra.mxu0 0.0
        %1706 = vmatprep.subr.mxu0 0.0
        %1707 = vmatpush1.msra.mxu0 0.0
        %1708 = vmatprep.subr.mxu0 0.0
        %1709 = vmatpush1.msra.mxu0 0.0
        %1710 = vmatprep.subr.mxu0 0.0
        %1711 = vmatpush1.msra.mxu0 0.0
        %1712 = vmatprep.subr.mxu0 0.0
        %1713 = vmatpush1.msra.mxu0 0.0
        %1714 = vmatprep.subr.mxu0 0.0
        %1715 = vmatpush1.msra.mxu0 0.0
        %1716 = vmatprep.mubr.f32.mxu0 0.0
        %1717 = vmatmul.mubr.f32.gmra.mrb[0].mxu0 %v1644
        %v1718 = vpop.f32.mrb[0].mxu0
        %v1719 = vadd.f32 0.0, %v1718
        %v1720 = vpop.f32.mrb[0].mxu0
        %v1721 = vadd.f32 0.0, %v1720
        %1722 = vdwg.mxu0
        %v1723 = vadd.f32 %v1639, %v1719
        %v1724 = vadd.f32 %v1640, %v1721
        %1725 = vrot.lane.b32.xlu0 %v1276, 127
        %v1726 = vpop.permute.xlu0 %1725
        %1727 = vrot.lane.b32.xlu0 %v1277, 127
        %v1728 = vpop.permute.xlu0 %1727
        %v1729 = vsel %vm848, %v1726, %v1728
        %v1730 = vsel %vm848, %v1728, %v1726
        %v1731 = vmul.f32 %v854, %v1729
        %v1732 = vmul.f32 %v858, %v1730
        %s1733 = scalar_lea.vmem %s4, 20
        %v1734 = vld [vmem:[%s1733] sm:$0xf]
        %v1736 = vsel %vm396, %v1734, 0
        %v1739 = vsel %vm400, %v1731, 0
        %v1742 = vsel %vm400, %v1732, 0
        %1744 = vmatprep.subr.mxu0 %v1742
        %1745 = vmatpush1.msra.mxu0 %v1739
        %1746 = vmatprep.subr.mxu0 0.0
        %1747 = vmatpush1.msra.mxu0 0.0
        %1748 = vmatprep.subr.mxu0 0.0
        %1749 = vmatpush1.msra.mxu0 0.0
        %1750 = vmatprep.subr.mxu0 0.0
        %1751 = vmatpush1.msra.mxu0 0.0
        %1752 = vmatprep.subr.mxu0 0.0
        %1753 = vmatpush1.msra.mxu0 0.0
        %1754 = vmatprep.subr.mxu0 0.0
        %1755 = vmatpush1.msra.mxu0 0.0
        %1756 = vmatprep.subr.mxu0 0.0
        %1757 = vmatpush1.msra.mxu0 0.0
        %1758 = vmatprep.subr.mxu0 0.0
        %1759 = vmatpush1.msra.mxu0 0.0
        %1760 = vmatprep.subr.mxu0 0.0
        %1761 = vmatpush1.msra.mxu0 0.0
        %1762 = vmatprep.subr.mxu0 0.0
        %1763 = vmatpush1.msra.mxu0 0.0
        %1764 = vmatprep.subr.mxu0 0.0
        %1765 = vmatpush1.msra.mxu0 0.0
        %1766 = vmatprep.subr.mxu0 0.0
        %1767 = vmatpush1.msra.mxu0 0.0
        %1768 = vmatprep.subr.mxu0 0.0
        %1769 = vmatpush1.msra.mxu0 0.0
        %1770 = vmatprep.subr.mxu0 0.0
        %1771 = vmatpush1.msra.mxu0 0.0
        %1772 = vmatprep.subr.mxu0 0.0
        %1773 = vmatpush1.msra.mxu0 0.0
        %1774 = vmatprep.subr.mxu0 0.0
        %1775 = vmatpush1.msra.mxu0 0.0
        %1776 = vmatprep.subr.mxu0 0.0
        %1777 = vmatpush1.msra.mxu0 0.0
        %1778 = vmatprep.subr.mxu0 0.0
        %1779 = vmatpush1.msra.mxu0 0.0
        %1780 = vmatprep.subr.mxu0 0.0
        %1781 = vmatpush1.msra.mxu0 0.0
        %1782 = vmatprep.subr.mxu0 0.0
        %1783 = vmatpush1.msra.mxu0 0.0
        %1784 = vmatprep.subr.mxu0 0.0
        %1785 = vmatpush1.msra.mxu0 0.0
        %1786 = vmatprep.subr.mxu0 0.0
        %1787 = vmatpush1.msra.mxu0 0.0
        %1788 = vmatprep.subr.mxu0 0.0
        %1789 = vmatpush1.msra.mxu0 0.0
        %1790 = vmatprep.subr.mxu0 0.0
        %1791 = vmatpush1.msra.mxu0 0.0
        %1792 = vmatprep.subr.mxu0 0.0
        %1793 = vmatpush1.msra.mxu0 0.0
        %1794 = vmatprep.subr.mxu0 0.0
        %1795 = vmatpush1.msra.mxu0 0.0
        %1796 = vmatprep.subr.mxu0 0.0
        %1797 = vmatpush1.msra.mxu0 0.0
        %1798 = vmatprep.subr.mxu0 0.0
        %1799 = vmatpush1.msra.mxu0 0.0
        %1800 = vmatprep.subr.mxu0 0.0
        %1801 = vmatpush1.msra.mxu0 0.0
        %1802 = vmatprep.subr.mxu0 0.0
        %1803 = vmatpush1.msra.mxu0 0.0
        %1804 = vmatprep.subr.mxu0 0.0
        %1805 = vmatpush1.msra.mxu0 0.0
        %1806 = vmatprep.subr.mxu0 0.0
        %1807 = vmatpush1.msra.mxu0 0.0
        %1808 = vmatprep.mubr.f32.mxu0 0.0
        %1809 = vmatmul.mubr.f32.gmra.mrb[0].mxu0 %v1736
        %v1810 = vpop.f32.mrb[0].mxu0
        %v1811 = vadd.f32 0.0, %v1810
        %v1812 = vpop.f32.mrb[0].mxu0
        %v1813 = vadd.f32 0.0, %v1812
        %1814 = vdwg.mxu0
        %v1815 = vadd.f32 %v1723, %v1811
        %v1816 = vadd.f32 %v1724, %v1813
        %1817 = vrot.lane.b32.xlu0 %v1276, 113
        %v1818 = vpop.permute.xlu0 %1817
        %1819 = vrot.lane.b32.xlu0 %v1277, 113
        %v1820 = vpop.permute.xlu0 %1819
        %v1821 = vsel %vm949, %v1818, %v1820
        %v1822 = vsel %vm949, %v1820, %v1818
        %v1823 = vmul.f32 %v955, %v1821
        %v1824 = vmul.f32 %v959, %v1822
        %s1825 = scalar_lea.vmem %s4, 24
        %v1826 = vld [vmem:[%s1825] sm:$0xf]
        %v1828 = vsel %vm396, %v1826, 0
        %v1831 = vsel %vm400, %v1823, 0
        %v1834 = vsel %vm400, %v1824, 0
        %1836 = vmatprep.subr.mxu0 %v1834
        %1837 = vmatpush1.msra.mxu0 %v1831
        %1838 = vmatprep.subr.mxu0 0.0
        %1839 = vmatpush1.msra.mxu0 0.0
        %1840 = vmatprep.subr.mxu0 0.0
        %1841 = vmatpush1.msra.mxu0 0.0
        %1842 = vmatprep.subr.mxu0 0.0
        %1843 = vmatpush1.msra.mxu0 0.0
        %1844 = vmatprep.subr.mxu0 0.0
        %1845 = vmatpush1.msra.mxu0 0.0
        %1846 = vmatprep.subr.mxu0 0.0
        %1847 = vmatpush1.msra.mxu0 0.0
        %1848 = vmatprep.subr.mxu0 0.0
        %1849 = vmatpush1.msra.mxu0 0.0
        %1850 = vmatprep.subr.mxu0 0.0
        %1851 = vmatpush1.msra.mxu0 0.0
        %1852 = vmatprep.subr.mxu0 0.0
        %1853 = vmatpush1.msra.mxu0 0.0
        %1854 = vmatprep.subr.mxu0 0.0
        %1855 = vmatpush1.msra.mxu0 0.0
        %1856 = vmatprep.subr.mxu0 0.0
        %1857 = vmatpush1.msra.mxu0 0.0
        %1858 = vmatprep.subr.mxu0 0.0
        %1859 = vmatpush1.msra.mxu0 0.0
        %1860 = vmatprep.subr.mxu0 0.0
        %1861 = vmatpush1.msra.mxu0 0.0
        %1862 = vmatprep.subr.mxu0 0.0
        %1863 = vmatpush1.msra.mxu0 0.0
        %1864 = vmatprep.subr.mxu0 0.0
        %1865 = vmatpush1.msra.mxu0 0.0
        %1866 = vmatprep.subr.mxu0 0.0
        %1867 = vmatpush1.msra.mxu0 0.0
        %1868 = vmatprep.subr.mxu0 0.0
        %1869 = vmatpush1.msra.mxu0 0.0
        %1870 = vmatprep.subr.mxu0 0.0
        %1871 = vmatpush1.msra.mxu0 0.0
        %1872 = vmatprep.subr.mxu0 0.0
        %1873 = vmatpush1.msra.mxu0 0.0
        %1874 = vmatprep.subr.mxu0 0.0
        %1875 = vmatpush1.msra.mxu0 0.0
        %1876 = vmatprep.subr.mxu0 0.0
        %1877 = vmatpush1.msra.mxu0 0.0
        %1878 = vmatprep.subr.mxu0 0.0
        %1879 = vmatpush1.msra.mxu0 0.0
        %1880 = vmatprep.subr.mxu0 0.0
        %1881 = vmatpush1.msra.mxu0 0.0
        %1882 = vmatprep.subr.mxu0 0.0
        %1883 = vmatpush1.msra.mxu0 0.0
        %1884 = vmatprep.subr.mxu0 0.0
        %1885 = vmatpush1.msra.mxu0 0.0
        %1886 = vmatprep.subr.mxu0 0.0
        %1887 = vmatpush1.msra.mxu0 0.0
        %1888 = vmatprep.subr.mxu0 0.0
        %1889 = vmatpush1.msra.mxu0 0.0
        %1890 = vmatprep.subr.mxu0 0.0
        %1891 = vmatpush1.msra.mxu0 0.0
        %1892 = vmatprep.subr.mxu0 0.0
        %1893 = vmatpush1.msra.mxu0 0.0
        %1894 = vmatprep.subr.mxu0 0.0
        %1895 = vmatpush1.msra.mxu0 0.0
        %1896 = vmatprep.subr.mxu0 0.0
        %1897 = vmatpush1.msra.mxu0 0.0
        %1898 = vmatprep.subr.mxu0 0.0
        %1899 = vmatpush1.msra.mxu0 0.0
        %1900 = vmatprep.mubr.f32.mxu0 0.0
        %1901 = vmatmul.mubr.f32.gmra.mrb[0].mxu0 %v1828
        %v1902 = vpop.f32.mrb[0].mxu0
        %v1903 = vadd.f32 0.0, %v1902
        %v1904 = vpop.f32.mrb[0].mxu0
        %v1905 = vadd.f32 0.0, %v1904
        %1906 = vdwg.mxu0
        %v1907 = vadd.f32 %v1815, %v1903
        %v1908 = vadd.f32 %v1816, %v1905
        %1909 = vrot.lane.b32.xlu0 %v1276, 112
        %v1910 = vpop.permute.xlu0 %1909
        %1911 = vrot.lane.b32.xlu0 %v1277, 112
        %v1912 = vpop.permute.xlu0 %1911
        %v1913 = vsel %vm1050, %v1910, %v1912
        %v1914 = vsel %vm1050, %v1912, %v1910
        %v1915 = vmul.f32 %v1056, %v1913
        %v1916 = vmul.f32 %v1060, %v1914
        %s1917 = scalar_lea.vmem %s4, 28
        %v1918 = vld [vmem:[%s1917] sm:$0xf]
        %v1920 = vsel %vm396, %v1918, 0
        %v1923 = vsel %vm400, %v1915, 0
        %v1926 = vsel %vm400, %v1916, 0
        %1928 = vmatprep.subr.mxu0 %v1926
        %1929 = vmatpush1.msra.mxu0 %v1923
        %1930 = vmatprep.subr.mxu0 0.0
        %1931 = vmatpush1.msra.mxu0 0.0
        %1932 = vmatprep.subr.mxu0 0.0
        %1933 = vmatpush1.msra.mxu0 0.0
        %1934 = vmatprep.subr.mxu0 0.0
        %1935 = vmatpush1.msra.mxu0 0.0
        %1936 = vmatprep.subr.mxu0 0.0
        %1937 = vmatpush1.msra.mxu0 0.0
        %1938 = vmatprep.subr.mxu0 0.0
        %1939 = vmatpush1.msra.mxu0 0.0
        %1940 = vmatprep.subr.mxu0 0.0
        %1941 = vmatpush1.msra.mxu0 0.0
        %1942 = vmatprep.subr.mxu0 0.0
        %1943 = vmatpush1.msra.mxu0 0.0
        %1944 = vmatprep.subr.mxu0 0.0
        %1945 = vmatpush1.msra.mxu0 0.0
        %1946 = vmatprep.subr.mxu0 0.0
        %1947 = vmatpush1.msra.mxu0 0.0
        %1948 = vmatprep.subr.mxu0 0.0
        %1949 = vmatpush1.msra.mxu0 0.0
        %1950 = vmatprep.subr.mxu0 0.0
        %1951 = vmatpush1.msra.mxu0 0.0
        %1952 = vmatprep.subr.mxu0 0.0
        %1953 = vmatpush1.msra.mxu0 0.0
        %1954 = vmatprep.subr.mxu0 0.0
        %1955 = vmatpush1.msra.mxu0 0.0
        %1956 = vmatprep.subr.mxu0 0.0
        %1957 = vmatpush1.msra.mxu0 0.0
        %1958 = vmatprep.subr.mxu0 0.0
        %1959 = vmatpush1.msra.mxu0 0.0
        %1960 = vmatprep.subr.mxu0 0.0
        %1961 = vmatpush1.msra.mxu0 0.0
        %1962 = vmatprep.subr.mxu0 0.0
        %1963 = vmatpush1.msra.mxu0 0.0
        %1964 = vmatprep.subr.mxu0 0.0
        %1965 = vmatpush1.msra.mxu0 0.0
        %1966 = vmatprep.subr.mxu0 0.0
        %1967 = vmatpush1.msra.mxu0 0.0
        %1968 = vmatprep.subr.mxu0 0.0
        %1969 = vmatpush1.msra.mxu0 0.0
        %1970 = vmatprep.subr.mxu0 0.0
        %1971 = vmatpush1.msra.mxu0 0.0
        %1972 = vmatprep.subr.mxu0 0.0
        %1973 = vmatpush1.msra.mxu0 0.0
        %1974 = vmatprep.subr.mxu0 0.0
        %1975 = vmatpush1.msra.mxu0 0.0
        %1976 = vmatprep.subr.mxu0 0.0
        %1977 = vmatpush1.msra.mxu0 0.0
        %1978 = vmatprep.subr.mxu0 0.0
        %1979 = vmatpush1.msra.mxu0 0.0
        %1980 = vmatprep.subr.mxu0 0.0
        %1981 = vmatpush1.msra.mxu0 0.0
        %1982 = vmatprep.subr.mxu0 0.0
        %1983 = vmatpush1.msra.mxu0 0.0
        %1984 = vmatprep.subr.mxu0 0.0
        %1985 = vmatpush1.msra.mxu0 0.0
        %1986 = vmatprep.subr.mxu0 0.0
        %1987 = vmatpush1.msra.mxu0 0.0
        %1988 = vmatprep.subr.mxu0 0.0
        %1989 = vmatpush1.msra.mxu0 0.0
        %1990 = vmatprep.subr.mxu0 0.0
        %1991 = vmatpush1.msra.mxu0 0.0
        %1992 = vmatprep.mubr.f32.mxu0 0.0
        %1993 = vmatmul.mubr.f32.gmra.mrb[0].mxu0 %v1920
        %v1994 = vpop.f32.mrb[0].mxu0
        %v1995 = vadd.f32 0.0, %v1994
        %v1996 = vpop.f32.mrb[0].mxu0
        %v1997 = vadd.f32 0.0, %v1996
        %1998 = vdwg.mxu0
        %v1999 = vadd.f32 %v1907, %v1995
        %v2000 = vadd.f32 %v1908, %v1997
        %2001 = vrot.lane.b32.xlu0 %v1276, 111
        %v2002 = vpop.permute.xlu0 %2001
        %2003 = vrot.lane.b32.xlu0 %v1277, 111
        %v2004 = vpop.permute.xlu0 %2003
        %v2005 = vsel %vm1151, %v2002, %v2004
        %v2006 = vsel %vm1151, %v2004, %v2002
        %v2007 = vmul.f32 %v1157, %v2005
        %v2008 = vmul.f32 %v1161, %v2006
        %s2009 = scalar_lea.vmem %s4, 32
        %v2010 = vld [vmem:[%s2009] sm:$0xf]
        %v2012 = vsel %vm396, %v2010, 0
        %v2015 = vsel %vm400, %v2007, 0
        %v2018 = vsel %vm400, %v2008, 0
        %2020 = vmatprep.subr.mxu0 %v2018
        %2021 = vmatpush1.msra.mxu0 %v2015
        %2022 = vmatprep.subr.mxu0 0.0
        %2023 = vmatpush1.msra.mxu0 0.0
        %2024 = vmatprep.subr.mxu0 0.0
        %2025 = vmatpush1.msra.mxu0 0.0
        %2026 = vmatprep.subr.mxu0 0.0
        %2027 = vmatpush1.msra.mxu0 0.0
        %2028 = vmatprep.subr.mxu0 0.0
        %2029 = vmatpush1.msra.mxu0 0.0
        %2030 = vmatprep.subr.mxu0 0.0
        %2031 = vmatpush1.msra.mxu0 0.0
        %2032 = vmatprep.subr.mxu0 0.0
        %2033 = vmatpush1.msra.mxu0 0.0
        %2034 = vmatprep.subr.mxu0 0.0
        %2035 = vmatpush1.msra.mxu0 0.0
        %2036 = vmatprep.subr.mxu0 0.0
        %2037 = vmatpush1.msra.mxu0 0.0
        %2038 = vmatprep.subr.mxu0 0.0
        %2039 = vmatpush1.msra.mxu0 0.0
        %2040 = vmatprep.subr.mxu0 0.0
        %2041 = vmatpush1.msra.mxu0 0.0
        %2042 = vmatprep.subr.mxu0 0.0
        %2043 = vmatpush1.msra.mxu0 0.0
        %2044 = vmatprep.subr.mxu0 0.0
        %2045 = vmatpush1.msra.mxu0 0.0
        %2046 = vmatprep.subr.mxu0 0.0
        %2047 = vmatpush1.msra.mxu0 0.0
        %2048 = vmatprep.subr.mxu0 0.0
        %2049 = vmatpush1.msra.mxu0 0.0
        %2050 = vmatprep.subr.mxu0 0.0
        %2051 = vmatpush1.msra.mxu0 0.0
        %2052 = vmatprep.subr.mxu0 0.0
        %2053 = vmatpush1.msra.mxu0 0.0
        %2054 = vmatprep.subr.mxu0 0.0
        %2055 = vmatpush1.msra.mxu0 0.0
        %2056 = vmatprep.subr.mxu0 0.0
        %2057 = vmatpush1.msra.mxu0 0.0
        %2058 = vmatprep.subr.mxu0 0.0
        %2059 = vmatpush1.msra.mxu0 0.0
        %2060 = vmatprep.subr.mxu0 0.0
        %2061 = vmatpush1.msra.mxu0 0.0
        %2062 = vmatprep.subr.mxu0 0.0
        %2063 = vmatpush1.msra.mxu0 0.0
        %2064 = vmatprep.subr.mxu0 0.0
        %2065 = vmatpush1.msra.mxu0 0.0
        %2066 = vmatprep.subr.mxu0 0.0
        %2067 = vmatpush1.msra.mxu0 0.0
        %2068 = vmatprep.subr.mxu0 0.0
        %2069 = vmatpush1.msra.mxu0 0.0
        %2070 = vmatprep.subr.mxu0 0.0
        %2071 = vmatpush1.msra.mxu0 0.0
        %2072 = vmatprep.subr.mxu0 0.0
        %2073 = vmatpush1.msra.mxu0 0.0
        %2074 = vmatprep.subr.mxu0 0.0
        %2075 = vmatpush1.msra.mxu0 0.0
        %2076 = vmatprep.subr.mxu0 0.0
        %2077 = vmatpush1.msra.mxu0 0.0
        %2078 = vmatprep.subr.mxu0 0.0
        %2079 = vmatpush1.msra.mxu0 0.0
        %2080 = vmatprep.subr.mxu0 0.0
        %2081 = vmatpush1.msra.mxu0 0.0
        %2082 = vmatprep.subr.mxu0 0.0
        %2083 = vmatpush1.msra.mxu0 0.0
        %2084 = vmatprep.mubr.f32.mxu0 0.0
        %2085 = vmatmul.mubr.f32.gmra.mrb[0].mxu0 %v2012
        %v2086 = vpop.f32.mrb[0].mxu0
        %v2087 = vadd.f32 0.0, %v2086
        %v2088 = vpop.f32.mrb[0].mxu0
        %v2089 = vadd.f32 0.0, %v2088
        %2090 = vdwg.mxu0
        %v2091 = vadd.f32 %v1999, %v2087
        %v2092 = vadd.f32 %v2000, %v2089
        %s2093 = scalar_lea.vmem %s8, 12
        %v2094 = vld [vmem:[%s2093] sm:$0xf]
        %2096 = vset.pattern.permute.xlu0 0
        %2097 = vperm.xlu0 %2096, %v2094
        %v2098 = vpop.permute.xlu0 %2097
        %v2100 = vmul.f32 %v2098, %v2091
        %v2101 = vmul.f32 %v2098, %v2092
        %s2102 = scalar_lea.vmem %s8, 16
        %v2103 = vld [vmem:[%s2102] sm:$0xf]
        %2105 = vset.pattern.permute.xlu0 0
        %2106 = vperm.xlu0 %2105, %v2103
        %v2107 = vpop.permute.xlu0 %2106
        %v2109 = vadd.f32 %v2100, %v2107
        %v2110 = vadd.f32 %v2101, %v2107
        %v2111 = vld [vmem:[%s5] sm:$0x3f]
        %v2113 = vsel %vm396, %v2111, 0
        %v2116 = vsel %vm400, %v2109, 0
        %v2119 = vsel %vm400, %v2110, 0
        %2121 = vmatprep.subr.mxu0 %v2119
        %2122 = vmatpush1.msra.mxu0 %v2116
        %2123 = vmatprep.subr.mxu0 0.0
        %2124 = vmatpush1.msra.mxu0 0.0
        %2125 = vmatprep.subr.mxu0 0.0
        %2126 = vmatpush1.msra.mxu0 0.0
        %2127 = vmatprep.subr.mxu0 0.0
        %2128 = vmatpush1.msra.mxu0 0.0
        %2129 = vmatprep.subr.mxu0 0.0
        %2130 = vmatpush1.msra.mxu0 0.0
        %2131 = vmatprep.subr.mxu0 0.0
        %2132 = vmatpush1.msra.mxu0 0.0
        %2133 = vmatprep.subr.mxu0 0.0
        %2134 = vmatpush1.msra.mxu0 0.0
        %2135 = vmatprep.subr.mxu0 0.0
        %2136 = vmatpush1.msra.mxu0 0.0
        %2137 = vmatprep.subr.mxu0 0.0
        %2138 = vmatpush1.msra.mxu0 0.0
        %2139 = vmatprep.subr.mxu0 0.0
        %2140 = vmatpush1.msra.mxu0 0.0
        %2141 = vmatprep.subr.mxu0 0.0
        %2142 = vmatpush1.msra.mxu0 0.0
        %2143 = vmatprep.subr.mxu0 0.0
        %2144 = vmatpush1.msra.mxu0 0.0
        %2145 = vmatprep.subr.mxu0 0.0
        %2146 = vmatpush1.msra.mxu0 0.0
        %2147 = vmatprep.subr.mxu0 0.0
        %2148 = vmatpush1.msra.mxu0 0.0
        %2149 = vmatprep.subr.mxu0 0.0
        %2150 = vmatpush1.msra.mxu0 0.0
        %2151 = vmatprep.subr.mxu0 0.0
        %2152 = vmatpush1.msra.mxu0 0.0
        %2153 = vmatprep.subr.mxu0 0.0
        %2154 = vmatpush1.msra.mxu0 0.0
        %2155 = vmatprep.subr.mxu0 0.0
        %2156 = vmatpush1.msra.mxu0 0.0
        %2157 = vmatprep.subr.mxu0 0.0
        %2158 = vmatpush1.msra.mxu0 0.0
        %2159 = vmatprep.subr.mxu0 0.0
        %2160 = vmatpush1.msra.mxu0 0.0
        %2161 = vmatprep.subr.mxu0 0.0
        %2162 = vmatpush1.msra.mxu0 0.0
        %2163 = vmatprep.subr.mxu0 0.0
        %2164 = vmatpush1.msra.mxu0 0.0
        %2165 = vmatprep.subr.mxu0 0.0
        %2166 = vmatpush1.msra.mxu0 0.0
        %2167 = vmatprep.subr.mxu0 0.0
        %2168 = vmatpush1.msra.mxu0 0.0
        %2169 = vmatprep.subr.mxu0 0.0
        %2170 = vmatpush1.msra.mxu0 0.0
        %2171 = vmatprep.subr.mxu0 0.0
        %2172 = vmatpush1.msra.mxu0 0.0
        %2173 = vmatprep.subr.mxu0 0.0
        %2174 = vmatpush1.msra.mxu0 0.0
        %2175 = vmatprep.subr.mxu0 0.0
        %2176 = vmatpush1.msra.mxu0 0.0
        %2177 = vmatprep.subr.mxu0 0.0
        %2178 = vmatpush1.msra.mxu0 0.0
        %2179 = vmatprep.subr.mxu0 0.0
        %2180 = vmatpush1.msra.mxu0 0.0
        %2181 = vmatprep.subr.mxu0 0.0
        %2182 = vmatpush1.msra.mxu0 0.0
        %2183 = vmatprep.subr.mxu0 0.0
        %2184 = vmatpush1.msra.mxu0 0.0
        %2185 = vmatprep.mubr.f32.mxu0 0.0
        %2186 = vmatmul.mubr.f32.gmra.mrb[0].mxu0 %v2113
        %v2187 = vpop.f32.mrb[0].mxu0
        %v2188 = vadd.f32 0.0, %v2187
        %v2189 = vpop.f32.mrb[0].mxu0
        %v2190 = vadd.f32 0.0, %v2189
        %2191 = vdwg.mxu0
        %2192 = vrot.lane.b32.xlu0 %v2188, 127
        %v2193 = vpop.permute.xlu0 %2192
        %2194 = vrot.lane.b32.xlu0 %v2190, 127
        %v2195 = vpop.permute.xlu0 %2194
        %v2196 = vsel %vm848, %v2193, %v2195
        %v2197 = vsel %vm848, %v2195, %v2193
        %2198 = vrot.lane.b32.xlu0 %v2188, 112
        %v2199 = vpop.permute.xlu0 %2198
        %2200 = vrot.lane.b32.xlu0 %v2190, 112
        %v2201 = vpop.permute.xlu0 %2200
        %v2202 = vsel %vm1050, %v2199, %v2201
        %v2203 = vsel %vm1050, %v2201, %v2199
        %2204 = vrot.lane.b32.xlu0 %v2188, 111
        %v2205 = vpop.permute.xlu0 %2204
        %2206 = vrot.lane.b32.xlu0 %v2190, 111
        %v2207 = vpop.permute.xlu0 %2206
        %v2208 = vsel %vm1151, %v2205, %v2207
        %v2209 = vsel %vm1151, %v2207, %v2205
        %v2210 = vmax.f32 %v2188, %v2196
        %v2211 = vmax.f32 %v2190, %v2197
        %v2212 = vmax.f32 %v2202, %v2208
        %v2213 = vmax.f32 %v2203, %v2209
        %v2214 = vmax.f32 %v2210, %v2212
        %v2215 = vmax.f32 %v2211, %v2213
        %v2216 = vadd.f32 %v2188, %v2196
        %v2217 = vadd.f32 %v2190, %v2197
        %v2218 = vadd.f32 %v2216, %v2202
        %v2219 = vadd.f32 %v2217, %v2203
        %v2220 = vadd.f32 %v2218, %v2208
        %v2221 = vadd.f32 %v2219, %v2209
        %v2222 = vmul.f32 %v2220, 0.25
        %v2223 = vmul.f32 %v2221, 0.25
        %v2224 = vadd.f32 %v2214, %v2222
        %v2225 = vadd.f32 %v2215, %v2223
        %v2226 = vld [vmem:[%s2] sm:$0xff]
        %v2227 = vld [vmem:[%s2 + $0x8] sm:$0xff]
        %v2228 = vld [vmem:[%s2 + $0x10] sm:$0xff]
        %v2229 = vld [vmem:[%s2 + $0x18] sm:$0xff]
        %v2230 = vld [vmem:[%s2 + $0x20] sm:$0xff]
        %v2231 = vld [vmem:[%s2 + $0x28] sm:$0xff]
        %v2232 = vld [vmem:[%s2 + $0x30] sm:$0xff]
        %v2233 = vld [vmem:[%s2 + $0x38] sm:$0xff]
        %v2234 = vld [vmem:[%s2 + $0x40] sm:$0xff]
        %v2235 = vld [vmem:[%s2 + $0x48] sm:$0xff]
        %v2236 = vld [vmem:[%s2 + $0x50] sm:$0xff]
        %v2237 = vld [vmem:[%s2 + $0x58] sm:$0xff]
        %v2238 = vld [vmem:[%s2 + $0x60] sm:$0xff]
        %v2239 = vld [vmem:[%s2 + $0x68] sm:$0xff]
        %v2240 = vld [vmem:[%s2 + $0x70] sm:$0xff]
        %v2241 = vld [vmem:[%s2 + $0x78] sm:$0xff]
        %v2242 = vld [vmem:[%s2 + $0x80] sm:$0xff]
        %v2243 = vld [vmem:[%s2 + $0x88] sm:$0xff]
        %v2244 = vld [vmem:[%s2 + $0x90] sm:$0xff]
        %v2245 = vld [vmem:[%s2 + $0x98] sm:$0xff]
        %v2246 = vld [vmem:[%s2 + $0xa0] sm:$0xff]
        %v2247 = vld [vmem:[%s2 + $0xa8] sm:$0xff]
        %v2248 = vld [vmem:[%s2 + $0xb0] sm:$0xff]
        %v2249 = vld [vmem:[%s2 + $0xb8] sm:$0xff]
        %v2250 = vld [vmem:[%s2 + $0xc0] sm:$0xff]
        %v2251 = vld [vmem:[%s2 + $0xc8] sm:$0xff]
        %v2252 = vld [vmem:[%s2 + $0xd0] sm:$0xff]
        %v2253 = vld [vmem:[%s2 + $0xd8] sm:$0xff]
        %v2254 = vld [vmem:[%s2 + $0xe0] sm:$0xff]
        %v2255 = vld [vmem:[%s2 + $0xe8] sm:$0xff]
        %v2256 = vld [vmem:[%s2 + $0xf0] sm:$0xff]
        %v2257 = vld [vmem:[%s2 + $0xf8] sm:$0xff]
        %2258 = vmatprep.subr.mxu0 0.0
        %2259 = vmatpush1.msra.mxu0 %v2226
        %2260 = vmatprep.subr.mxu0 0.0
        %2261 = vmatpush1.msra.mxu0 %v2227
        %2262 = vmatprep.subr.mxu0 0.0
        %2263 = vmatpush1.msra.mxu0 %v2228
        %2264 = vmatprep.subr.mxu0 0.0
        %2265 = vmatpush1.msra.mxu0 %v2229
        %2266 = vmatprep.subr.mxu0 0.0
        %2267 = vmatpush1.msra.mxu0 %v2230
        %2268 = vmatprep.subr.mxu0 0.0
        %2269 = vmatpush1.msra.mxu0 %v2231
        %2270 = vmatprep.subr.mxu0 0.0
        %2271 = vmatpush1.msra.mxu0 %v2232
        %2272 = vmatprep.subr.mxu0 0.0
        %2273 = vmatpush1.msra.mxu0 %v2233
        %2274 = vmatprep.subr.mxu0 0.0
        %2275 = vmatpush1.msra.mxu0 %v2234
        %2276 = vmatprep.subr.mxu0 0.0
        %2277 = vmatpush1.msra.mxu0 %v2235
        %2278 = vmatprep.subr.mxu0 0.0
        %2279 = vmatpush1.msra.mxu0 %v2236
        %2280 = vmatprep.subr.mxu0 0.0
        %2281 = vmatpush1.msra.mxu0 %v2237
        %2282 = vmatprep.subr.mxu0 0.0
        %2283 = vmatpush1.msra.mxu0 %v2238
        %2284 = vmatprep.subr.mxu0 0.0
        %2285 = vmatpush1.msra.mxu0 %v2239
        %2286 = vmatprep.subr.mxu0 0.0
        %2287 = vmatpush1.msra.mxu0 %v2240
        %2288 = vmatprep.subr.mxu0 0.0
        %2289 = vmatpush1.msra.mxu0 %v2241
        %2290 = vmatprep.subr.mxu0 0.0
        %2291 = vmatpush1.msra.mxu0 %v2242
        %2292 = vmatprep.subr.mxu0 0.0
        %2293 = vmatpush1.msra.mxu0 %v2243
        %2294 = vmatprep.subr.mxu0 0.0
        %2295 = vmatpush1.msra.mxu0 %v2244
        %2296 = vmatprep.subr.mxu0 0.0
        %2297 = vmatpush1.msra.mxu0 %v2245
        %2298 = vmatprep.subr.mxu0 0.0
        %2299 = vmatpush1.msra.mxu0 %v2246
        %2300 = vmatprep.subr.mxu0 0.0
        %2301 = vmatpush1.msra.mxu0 %v2247
        %2302 = vmatprep.subr.mxu0 0.0
        %2303 = vmatpush1.msra.mxu0 %v2248
        %2304 = vmatprep.subr.mxu0 0.0
        %2305 = vmatpush1.msra.mxu0 %v2249
        %2306 = vmatprep.subr.mxu0 0.0
        %2307 = vmatpush1.msra.mxu0 %v2250
        %2308 = vmatprep.subr.mxu0 0.0
        %2309 = vmatpush1.msra.mxu0 %v2251
        %2310 = vmatprep.subr.mxu0 0.0
        %2311 = vmatpush1.msra.mxu0 %v2252
        %2312 = vmatprep.subr.mxu0 0.0
        %2313 = vmatpush1.msra.mxu0 %v2253
        %2314 = vmatprep.subr.mxu0 0.0
        %2315 = vmatpush1.msra.mxu0 %v2254
        %2316 = vmatprep.subr.mxu0 0.0
        %2317 = vmatpush1.msra.mxu0 %v2255
        %2318 = vmatprep.subr.mxu0 0.0
        %2319 = vmatpush1.msra.mxu0 %v2256
        %2320 = vmatprep.subr.mxu0 0.0
        %2321 = vmatpush1.msra.mxu0 %v2257
        %2322 = vmatprep.mubr.f32.mxu0 %v2225
        %2323 = vmatmul.mubr.f32.gmra.mrb[0].mxu0 %v2224
        %v2324 = vpop.f32.mrb[0].mxu0
        %v2325 = vadd.f32 0.0, %v2324
        %v2326 = vpop.f32.mrb[0].mxu0
        %2327 = vdwg.mxu0
        %2328 = vxpose.xlu0.b32.start [1/16] %v2325, 128
        %2329 = vxpose.xlu0.b32.cont [2/16] 0.0, 128
        %2330 = vxpose.xlu0.b32.cont [3/16] 0.0, 128
        %2331 = vxpose.xlu0.b32.cont [4/16] 0.0, 128
        %2332 = vxpose.xlu0.b32.cont [5/16] 0.0, 128
        %2333 = vxpose.xlu0.b32.cont [6/16] 0.0, 128
        %2334 = vxpose.xlu0.b32.cont [7/16] 0.0, 128
        %2335 = vxpose.xlu0.b32.cont [8/16] 0.0, 128
        %2336 = vxpose.xlu0.b32.cont [9/16] 0.0, 128
        %2337 = vxpose.xlu0.b32.cont [10/16] 0.0, 128
        %2338 = vxpose.xlu0.b32.cont [11/16] 0.0, 128
        %2339 = vxpose.xlu0.b32.cont [12/16] 0.0, 128
        %2340 = vxpose.xlu0.b32.cont [13/16] 0.0, 128
        %2341 = vxpose.xlu0.b32.cont [14/16] 0.0, 128
        %2342 = vxpose.xlu0.b32.cont [15/16] 0.0, 128
        %2343 = vxpose.xlu0.b32.end [16/16] 0.0, 128
        %v2344 = vpop.trf.xlu0
        %v2345 = vpop.trf.xlu0
        %v2346 = vpop.trf.xlu0
        %v2347 = vpop.trf.xlu0
        %v2348 = vpop.trf.xlu0
        %v2349 = vpop.trf.xlu0
        %v2350 = vpop.trf.xlu0
        %v2351 = vpop.trf.xlu0
        %v2352 = vpop.trf.xlu0
        %v2353 = vpop.trf.xlu0
        %v2354 = vpop.trf.xlu0
        %v2355 = vpop.trf.xlu0
        %v2356 = vpop.trf.xlu0
        %v2357 = vpop.trf.xlu0
        %v2358 = vpop.trf.xlu0
        %v2359 = vpop.trf.xlu0
        %v2362 = vrot.slane %v2188, 4
        %v2363 = vrot.slane %v2190, 4
        %vm2364 = vcmask 15360
        %v2366 = vsel %vm2364, %v2344, 0
        %v2369 = vsel %vm2364, %v2345, 0
        %v2372 = vsel %vm2364, %v2346, 0
        %v2375 = vsel %vm2364, %v2347, 0
        %v2378 = vsel %vm2364, %v2348, 0
        %v2381 = vsel %vm2364, %v2349, 0
        %v2384 = vsel %vm2364, %v2350, 0
        %v2387 = vsel %vm2364, %v2351, 0
        %vm2389 = vcmask 1041408
        %v2390 = vsel %vm2389, %v2362, 0
        %v2392 = vsel %vm2389, %v2363, 0
        %2394 = vmatprep.subr.mxu0 %v2392
        %2395 = vmatpush1.msra.mxu0 %v2390
        %2396 = vmatprep.subr.mxu0 0.0
        %2397 = vmatpush1.msra.mxu0 0.0
        %2398 = vmatprep.subr.mxu0 0.0
        %2399 = vmatpush1.msra.mxu0 0.0
        %2400 = vmatprep.subr.mxu0 0.0
        %2401 = vmatpush1.msra.mxu0 0.0
        %2402 = vmatprep.subr.mxu0 0.0
        %2403 = vmatpush1.msra.mxu0 0.0
        %2404 = vmatprep.subr.mxu0 0.0
        %2405 = vmatpush1.msra.mxu0 0.0
        %2406 = vmatprep.subr.mxu0 0.0
        %2407 = vmatpush1.msra.mxu0 0.0
        %2408 = vmatprep.subr.mxu0 0.0
        %2409 = vmatpush1.msra.mxu0 0.0
        %2410 = vmatprep.subr.mxu0 0.0
        %2411 = vmatpush1.msra.mxu0 0.0
        %2412 = vmatprep.subr.mxu0 0.0
        %2413 = vmatpush1.msra.mxu0 0.0
        %2414 = vmatprep.subr.mxu0 0.0
        %2415 = vmatpush1.msra.mxu0 0.0
        %2416 = vmatprep.subr.mxu0 0.0
        %2417 = vmatpush1.msra.mxu0 0.0
        %2418 = vmatprep.subr.mxu0 0.0
        %2419 = vmatpush1.msra.mxu0 0.0
        %2420 = vmatprep.subr.mxu0 0.0
        %2421 = vmatpush1.msra.mxu0 0.0
        %2422 = vmatprep.subr.mxu0 0.0
        %2423 = vmatpush1.msra.mxu0 0.0
        %2424 = vmatprep.subr.mxu0 0.0
        %2425 = vmatpush1.msra.mxu0 0.0
        %2426 = vmatprep.subr.mxu0 0.0
        %2427 = vmatpush1.msra.mxu0 0.0
        %2428 = vmatprep.subr.mxu0 0.0
        %2429 = vmatpush1.msra.mxu0 0.0
        %2430 = vmatprep.subr.mxu0 0.0
        %2431 = vmatpush1.msra.mxu0 0.0
        %2432 = vmatprep.subr.mxu0 0.0
        %2433 = vmatpush1.msra.mxu0 0.0
        %2434 = vmatprep.subr.mxu0 0.0
        %2435 = vmatpush1.msra.mxu0 0.0
        %2436 = vmatprep.subr.mxu0 0.0
        %2437 = vmatpush1.msra.mxu0 0.0
        %2438 = vmatprep.subr.mxu0 0.0
        %2439 = vmatpush1.msra.mxu0 0.0
        %2440 = vmatprep.subr.mxu0 0.0
        %2441 = vmatpush1.msra.mxu0 0.0
        %2442 = vmatprep.subr.mxu0 0.0
        %2443 = vmatpush1.msra.mxu0 0.0
        %2444 = vmatprep.subr.mxu0 0.0
        %2445 = vmatpush1.msra.mxu0 0.0
        %2446 = vmatprep.subr.mxu0 0.0
        %2447 = vmatpush1.msra.mxu0 0.0
        %2448 = vmatprep.subr.mxu0 0.0
        %2449 = vmatpush1.msra.mxu0 0.0
        %2450 = vmatprep.subr.mxu0 0.0
        %2451 = vmatpush1.msra.mxu0 0.0
        %2452 = vmatprep.subr.mxu0 0.0
        %2453 = vmatpush1.msra.mxu0 0.0
        %2454 = vmatprep.subr.mxu0 0.0
        %2455 = vmatpush1.msra.mxu0 0.0
        %2456 = vmatprep.subr.mxu0 0.0
        %2457 = vmatpush1.msra.mxu0 0.0
        %2458 = vmatprep.mubr.f32.mxu0 0.0
        %2459 = vmatmul.mubr.f32.gmra.mrb[0].mxu0 %v2366
        %v2460 = vpop.f32.mrb[0].mxu0
        %v2461 = vadd.f32 0.0, %v2460
        %v2462 = vpop.f32.mrb[0].mxu0
        %v2463 = vadd.f32 0.0, %v2462
        %2464 = vmatprep.mubr.f32.mxu0 0.0
        %2465 = vmatmul.mubr.f32.gmra.mrb[0].mxu0 %v2369
        %v2466 = vpop.f32.mrb[0].mxu0
        %v2467 = vadd.f32 0.0, %v2466
        %v2468 = vpop.f32.mrb[0].mxu0
        %v2469 = vadd.f32 0.0, %v2468
        %2470 = vmatprep.mubr.f32.mxu0 0.0
        %2471 = vmatmul.mubr.f32.gmra.mrb[0].mxu0 %v2372
        %v2472 = vpop.f32.mrb[0].mxu0
        %v2473 = vadd.f32 0.0, %v2472
        %v2474 = vpop.f32.mrb[0].mxu0
        %v2475 = vadd.f32 0.0, %v2474
        %2476 = vmatprep.mubr.f32.mxu0 0.0
        %2477 = vmatmul.mubr.f32.gmra.mrb[0].mxu0 %v2375
        %v2478 = vpop.f32.mrb[0].mxu0
        %v2479 = vadd.f32 0.0, %v2478
        %v2480 = vpop.f32.mrb[0].mxu0
        %v2481 = vadd.f32 0.0, %v2480
        %2482 = vmatprep.mubr.f32.mxu0 0.0
        %2483 = vmatmul.mubr.f32.gmra.mrb[0].mxu0 %v2378
        %v2484 = vpop.f32.mrb[0].mxu0
        %v2485 = vadd.f32 0.0, %v2484
        %v2486 = vpop.f32.mrb[0].mxu0
        %v2487 = vadd.f32 0.0, %v2486
        %2488 = vmatprep.mubr.f32.mxu0 0.0
        %2489 = vmatmul.mubr.f32.gmra.mrb[0].mxu0 %v2381
        %v2490 = vpop.f32.mrb[0].mxu0
        %v2491 = vadd.f32 0.0, %v2490
        %v2492 = vpop.f32.mrb[0].mxu0
        %v2493 = vadd.f32 0.0, %v2492
        %2494 = vmatprep.mubr.f32.mxu0 0.0
        %2495 = vmatmul.mubr.f32.gmra.mrb[0].mxu0 %v2384
        %v2496 = vpop.f32.mrb[0].mxu0
        %v2497 = vadd.f32 0.0, %v2496
        %v2498 = vpop.f32.mrb[0].mxu0
        %v2499 = vadd.f32 0.0, %v2498
        %2500 = vmatprep.mubr.f32.mxu0 0.0
        %2501 = vmatmul.mubr.f32.gmra.mrb[0].mxu0 %v2387
        %v2502 = vpop.f32.mrb[0].mxu0
        %v2503 = vadd.f32 0.0, %v2502
        %v2504 = vpop.f32.mrb[0].mxu0
        %v2505 = vadd.f32 0.0, %v2504
        %2506 = vdwg.mxu0
        %v2507 = vmax.f32 %v2461, %v2473
        %v2508 = vmax.f32 %v2467, %v2479
        %v2509 = vmax.f32 %v2507, %v2485
        %v2510 = vmax.f32 %v2508, %v2491
        %v2511 = vmax.f32 %v2509, %v2497
        %v2512 = vmax.f32 %v2510, %v2503
        %v2513 = vmax.f32 %v2511, %v2512
        %v2514 = vrot.slane %v2513, 4
        %v2515 = vmax.f32 %v2513, %v2514
        %v2516 = vrot.slane %v2515, 2
        %v2517 = vmax.f32 %v2515, %v2516
        %v2518 = vrot.slane %v2517, 1
        %v2519 = vmax.f32 %v2517, %v2518
        %v2520 = vmax.f32 %v2463, %v2475
        %v2521 = vmax.f32 %v2469, %v2481
        %v2522 = vmax.f32 %v2520, %v2487
        %v2523 = vmax.f32 %v2521, %v2493
        %v2524 = vmax.f32 %v2522, %v2499
        %v2525 = vmax.f32 %v2523, %v2505
        %v2526 = vmax.f32 %v2524, %v2525
        %v2527 = vrot.slane %v2526, 4
        %v2528 = vmax.f32 %v2526, %v2527
        %v2529 = vrot.slane %v2528, 2
        %v2530 = vmax.f32 %v2528, %v2529
        %v2531 = vrot.slane %v2530, 1
        %v2532 = vmax.f32 %v2530, %v2531
        %v2533 = vsub.f32 %v2461, %v2519
        %v2534 = vsub.f32 %v2463, %v2532
        %v2535 = vsub.f32 %v2467, %v2519
        %v2536 = vsub.f32 %v2469, %v2532
        %v2537 = vsub.f32 %v2473, %v2519
        %v2538 = vsub.f32 %v2475, %v2532
        %v2539 = vsub.f32 %v2479, %v2519
        %v2540 = vsub.f32 %v2481, %v2532
        %v2541 = vsub.f32 %v2485, %v2519
        %v2542 = vsub.f32 %v2487, %v2532
        %v2543 = vsub.f32 %v2491, %v2519
        %v2544 = vsub.f32 %v2493, %v2532
        %v2545 = vsub.f32 %v2497, %v2519
        %v2546 = vsub.f32 %v2499, %v2532
        %v2547 = vsub.f32 %v2503, %v2519
        %v2548 = vsub.f32 %v2505, %v2532
        %v2549 = vmul.f32 %v2533, 1.442695
        %v2550 = vpow.pop %v2549
        %v2551 = vmul.f32 %v2534, 1.442695
        %v2552 = vpow.pop %v2551
        %v2553 = vmul.f32 %v2535, 1.442695
        %v2554 = vpow.pop %v2553
        %v2555 = vmul.f32 %v2536, 1.442695
        %v2556 = vpow.pop %v2555
        %v2557 = vmul.f32 %v2537, 1.442695
        %v2558 = vpow.pop %v2557
        %v2559 = vmul.f32 %v2538, 1.442695
        %v2560 = vpow.pop %v2559
        %v2561 = vmul.f32 %v2539, 1.442695
        %v2562 = vpow.pop %v2561
        %v2563 = vmul.f32 %v2540, 1.442695
        %v2564 = vpow.pop %v2563
        %v2565 = vmul.f32 %v2541, 1.442695
        %v2566 = vpow.pop %v2565
        %v2567 = vmul.f32 %v2542, 1.442695
        %v2568 = vpow.pop %v2567
        %v2569 = vmul.f32 %v2543, 1.442695
        %v2570 = vpow.pop %v2569
        %v2571 = vmul.f32 %v2544, 1.442695
        %v2572 = vpow.pop %v2571
        %v2573 = vmul.f32 %v2545, 1.442695
        %v2574 = vpow.pop %v2573
        %v2575 = vmul.f32 %v2546, 1.442695
        %v2576 = vpow.pop %v2575
        %v2577 = vmul.f32 %v2547, 1.442695
        %v2578 = vpow.pop %v2577
        %v2579 = vmul.f32 %v2548, 1.442695
        %v2580 = vpow.pop %v2579
        %v2581 = vadd.f32 %v2550, %v2554
        %v2582 = vadd.f32 %v2581, %v2558
        %v2583 = vadd.f32 %v2582, %v2562
        %v2584 = vadd.f32 %v2583, %v2566
        %v2585 = vadd.f32 %v2584, %v2570
        %v2586 = vadd.f32 %v2585, %v2574
        %v2587 = vadd.f32 %v2586, %v2578
        %v2588 = vrot.slane %v2587, 4
        %v2589 = vadd.f32 %v2587, %v2588
        %v2590 = vrot.slane %v2589, 2
        %v2591 = vadd.f32 %v2589, %v2590
        %v2592 = vrot.slane %v2591, 1
        %v2593 = vadd.f32 %v2591, %v2592
        %v2594 = vadd.f32 %v2552, %v2556
        %v2595 = vadd.f32 %v2594, %v2560
        %v2596 = vadd.f32 %v2595, %v2564
        %v2597 = vadd.f32 %v2596, %v2568
        %v2598 = vadd.f32 %v2597, %v2572
        %v2599 = vadd.f32 %v2598, %v2576
        %v2600 = vadd.f32 %v2599, %v2580
        %v2601 = vrot.slane %v2600, 4
        %v2602 = vadd.f32 %v2600, %v2601
        %v2603 = vrot.slane %v2602, 2
        %v2604 = vadd.f32 %v2602, %v2603
        %v2605 = vrot.slane %v2604, 1
        %v2606 = vadd.f32 %v2604, %v2605
        %v2607 = vrcp.pop %v2593
        %v2608 = vrcp.pop %v2606
        %v2609 = vmul.f32 %v2550, %v2607
        %v2610 = vmul.f32 %v2552, %v2608
        %v2611 = vmul.f32 %v2554, %v2607
        %v2612 = vmul.f32 %v2556, %v2608
        %v2613 = vmul.f32 %v2558, %v2607
        %v2614 = vmul.f32 %v2560, %v2608
        %v2615 = vmul.f32 %v2562, %v2607
        %v2616 = vmul.f32 %v2564, %v2608
        %v2617 = vmul.f32 %v2566, %v2607
        %v2618 = vmul.f32 %v2568, %v2608
        %v2619 = vmul.f32 %v2570, %v2607
        %v2620 = vmul.f32 %v2572, %v2608
        %v2621 = vmul.f32 %v2574, %v2607
        %v2622 = vmul.f32 %v2576, %v2608
        %v2623 = vmul.f32 %v2578, %v2607
        %v2624 = vmul.f32 %v2580, %v2608
        %v2625 = vpack.c.bf16 %v2325, %v2325
        %v2626 = vpack.c.bf16 %v2611, %v2609
        %v2627 = vpack.c.bf16 %v2612, %v2610
        %v2628 = vpack.c.bf16 %v2615, %v2613
        %v2629 = vpack.c.bf16 %v2616, %v2614
        %v2630 = vpack.c.bf16 %v2619, %v2617
        %v2631 = vpack.c.bf16 %v2620, %v2618
        %v2632 = vpack.c.bf16 %v2623, %v2621
        %v2633 = vpack.c.bf16 %v2624, %v2622
        %v2635 = vrot.slane %v2625, 1
        %vm2636 = vcmask 523264
        %v2638 = vsel %vm2636, %v2635, 0
        %2640 = vmatprep.subr.bf16.mxu0 %v2627
        %2641 = vmatpush1.bf16.msra.mxu0 %v2626
        %2642 = vmatprep.subr.bf16.mxu0 %v2629
        %2643 = vmatpush1.bf16.msra.mxu0 %v2628
        %2644 = vmatprep.subr.bf16.mxu0 %v2631
        %2645 = vmatpush1.bf16.msra.mxu0 %v2630
        %2646 = vmatprep.subr.bf16.mxu0 %v2633
        %2647 = vmatpush1.bf16.msra.mxu0 %v2632
        %2648 = vmatprep.subr.bf16.mxu0 0
        %2649 = vmatpush1.bf16.msra.mxu0 0
        %2650 = vmatprep.subr.bf16.mxu0 0
        %2651 = vmatpush1.bf16.msra.mxu0 0
        %2652 = vmatprep.subr.bf16.mxu0 0
        %2653 = vmatpush1.bf16.msra.mxu0 0
        %2654 = vmatprep.subr.bf16.mxu0 0
        %2655 = vmatpush1.bf16.msra.mxu0 0
        %2656 = vmatprep.subr.bf16.mxu0 0
        %2657 = vmatpush1.bf16.msra.mxu0 0
        %2658 = vmatprep.subr.bf16.mxu0 0
        %2659 = vmatpush1.bf16.msra.mxu0 0
        %2660 = vmatprep.subr.bf16.mxu0 0
        %2661 = vmatpush1.bf16.msra.mxu0 0
        %2662 = vmatprep.subr.bf16.mxu0 0
        %2663 = vmatpush1.bf16.msra.mxu0 0
        %2664 = vmatprep.subr.bf16.mxu0 0
        %2665 = vmatpush1.bf16.msra.mxu0 0
        %2666 = vmatprep.subr.bf16.mxu0 0
        %2667 = vmatpush1.bf16.msra.mxu0 0
        %2668 = vmatprep.subr.bf16.mxu0 0
        %2669 = vmatpush1.bf16.msra.mxu0 0
        %2670 = vmatprep.subr.bf16.mxu0 0
        %2671 = vmatpush1.bf16.msra.mxu0 0
        %2672 = vmatprep.mubr.bf16.mxu0 0
        %2673 = vmatmul.mubr.bf16.gmra.mrb[0].mxu0 %v2638
        %v2674 = vpop.f32.mrb[0].mxu0
        %v2675 = vadd.f32 0.0, %v2674
        %v2676 = vpop.f32.mrb[0].mxu0
        %v2677 = vadd.f32 0.0, %v2676
        %v2678 = vpop.f32.mrb[0].mxu0
        %v2679 = vpop.f32.mrb[0].mxu0
        %2680 = vdwg.mxu0
        %v2681 = vld [vmem:[%s6] sm:$0xf]
        %v2683 = vsel %vm2364, %v2681, 0
        %v2686 = vsel %vm2389, %v2675, 0
        %v2689 = vsel %vm2389, %v2677, 0
        %2691 = vmatprep.subr.mxu0 %v2689
        %2692 = vmatpush1.msra.mxu0 %v2686
        %2693 = vmatprep.subr.mxu0 0.0
        %2694 = vmatpush1.msra.mxu0 0.0
        %2695 = vmatprep.subr.mxu0 0.0
        %2696 = vmatpush1.msra.mxu0 0.0
        %2697 = vmatprep.subr.mxu0 0.0
        %2698 = vmatpush1.msra.mxu0 0.0
        %2699 = vmatprep.subr.mxu0 0.0
        %2700 = vmatpush1.msra.mxu0 0.0
        %2701 = vmatprep.subr.mxu0 0.0
        %2702 = vmatpush1.msra.mxu0 0.0
        %2703 = vmatprep.subr.mxu0 0.0
        %2704 = vmatpush1.msra.mxu0 0.0
        %2705 = vmatprep.subr.mxu0 0.0
        %2706 = vmatpush1.msra.mxu0 0.0
        %2707 = vmatprep.subr.mxu0 0.0
        %2708 = vmatpush1.msra.mxu0 0.0
        %2709 = vmatprep.subr.mxu0 0.0
        %2710 = vmatpush1.msra.mxu0 0.0
        %2711 = vmatprep.subr.mxu0 0.0
        %2712 = vmatpush1.msra.mxu0 0.0
        %2713 = vmatprep.subr.mxu0 0.0
        %2714 = vmatpush1.msra.mxu0 0.0
        %2715 = vmatprep.subr.mxu0 0.0
        %2716 = vmatpush1.msra.mxu0 0.0
        %2717 = vmatprep.subr.mxu0 0.0
        %2718 = vmatpush1.msra.mxu0 0.0
        %2719 = vmatprep.subr.mxu0 0.0
        %2720 = vmatpush1.msra.mxu0 0.0
        %2721 = vmatprep.subr.mxu0 0.0
        %2722 = vmatpush1.msra.mxu0 0.0
        %2723 = vmatprep.subr.mxu0 0.0
        %2724 = vmatpush1.msra.mxu0 0.0
        %2725 = vmatprep.subr.mxu0 0.0
        %2726 = vmatpush1.msra.mxu0 0.0
        %2727 = vmatprep.subr.mxu0 0.0
        %2728 = vmatpush1.msra.mxu0 0.0
        %2729 = vmatprep.subr.mxu0 0.0
        %2730 = vmatpush1.msra.mxu0 0.0
        %2731 = vmatprep.subr.mxu0 0.0
        %2732 = vmatpush1.msra.mxu0 0.0
        %2733 = vmatprep.subr.mxu0 0.0
        %2734 = vmatpush1.msra.mxu0 0.0
        %2735 = vmatprep.subr.mxu0 0.0
        %2736 = vmatpush1.msra.mxu0 0.0
        %2737 = vmatprep.subr.mxu0 0.0
        %2738 = vmatpush1.msra.mxu0 0.0
        %2739 = vmatprep.subr.mxu0 0.0
        %2740 = vmatpush1.msra.mxu0 0.0
        %2741 = vmatprep.subr.mxu0 0.0
        %2742 = vmatpush1.msra.mxu0 0.0
        %2743 = vmatprep.subr.mxu0 0.0
        %2744 = vmatpush1.msra.mxu0 0.0
        %2745 = vmatprep.subr.mxu0 0.0
        %2746 = vmatpush1.msra.mxu0 0.0
        %2747 = vmatprep.subr.mxu0 0.0
        %2748 = vmatpush1.msra.mxu0 0.0
        %2749 = vmatprep.subr.mxu0 0.0
        %2750 = vmatpush1.msra.mxu0 0.0
        %2751 = vmatprep.subr.mxu0 0.0
        %2752 = vmatpush1.msra.mxu0 0.0
        %2753 = vmatprep.subr.mxu0 0.0
        %2754 = vmatpush1.msra.mxu0 0.0
        %2755 = vmatprep.mubr.f32.mxu0 0.0
        %2756 = vmatmul.mubr.f32.gmra.mrb[0].mxu0 %v2683
        %v2757 = vpop.f32.mrb[0].mxu0
        %v2758 = vadd.f32 %v2109, %v2757
        %v2759 = vpop.f32.mrb[0].mxu0
        %v2760 = vadd.f32 %v2110, %v2759
        %2761 = vdwg.mxu0
        %v2762 = vadd.f32 %v2758, %v332
        %v2763 = vadd.f32 %v2760, %v344
        %v2766 = vcombine.low %v2762, %v2763
        %2768 = vst [vmem:[%s325] sm:$0xff] %v2766
        %s2769 = sand.u32 %s225, 1
        %s2770 = scalar_lea.sflag [#allocation3], %s2769
        %s2771 = sand.u32 %s225, 1
        %s2772 = smul.addr %s2771, 8
        %s2773 = scalar_lea.vmem [#allocation2], %s2772
        // Predicated region
        $region57: #{tpu_custom_call.1} parent=55 // pred_check
          %p2774 = pneg %p235
        $region58: #{tpu_custom_call.1} parent=55 // pred_check_branch
          %2776 = sbr.rel (%p2774) target = $region60
        $region59: #{tpu_custom_call.1} parent=55 // pred_region
          %s2778 = ssub.s32 128, 128
          %2779 = vsyncadd %s2770, %s2778
          %s2780 = smul.addr %s23, 2
          %s2781 = smul.addr %s2780, 64
          %s2782 = scalar_lea.hbm %s9, %s2781
          %s2784 = sshll.u32 %s2773, 4
          %s2785 = int_to_ptr.vmem [resolvable:$true] %s2784
          %2787 = dma.vmem_to_hbm [thread:$0]  %s2785, 128, %s2782, %s2770
        $region60: #{tpu_custom_call.1} parent=55 // pred_fallthru
          _
      $region56: #{tpu_custom_call.1} parent=5 // pred_fallthru
        _
      %p2788 = scmp.le.s32.totalorder 2, %s18
      // Predicated region
      $region61: #{tpu_custom_call.1} parent=5 // pred_check
        %p2789 = pneg %p2788
      $region62: #{tpu_custom_call.1} parent=5 // pred_check_branch
        %2791 = sbr.rel (%p2789) target = $region64
      $region63: #{tpu_custom_call.1} parent=5 // pred_region
        %s2792 = ssub.s32 %s18, 2
        // Predicated region
        $region65: #{tpu_custom_call.1} parent=63 // pred_check
          %p2793 = pneg %p241
        $region66: #{tpu_custom_call.1} parent=63 // pred_check_branch
          %2795 = sbr.rel (%p2793) target = $region68
        $region67: #{tpu_custom_call.1} parent=63 // pred_region
          %s2796 = sand.u32 %s226, 1
          %s2797 = scalar_lea.sflag [#allocation3], %s2796
          %s2798 = sand.u32 %s226, 1
          %s2799 = smul.addr %s2798, 8
          %s2800 = scalar_lea.vmem [#allocation2], %s2799
          %2801 = dma.done %s2797, 128
        $region68: #{tpu_custom_call.1} parent=63 // pred_fallthru
          _
      $region64: #{tpu_custom_call.1} parent=5 // pred_fallthru
        _
    $region6: #{tpu_custom_call.1} parent=1 // loop_footer
      %s22 = sadd.s32 1, %s18
    $region7: #{tpu_custom_call.1} parent=1 // loop_footer_branch
      %17 = sbr.rel target = $region3
    $region8: #{tpu_custom_call.1} parent=1 // loop_exit
      _
    %2802 = vsyncpa [#allocation3], 1
    %s2803 = scalar_lea.sflag [#allocation3], 1
    %2804 = vsyncpa %s2803, 1

</llo_original>
